<compile_context>
chip_gen: v6e
topology: v6e:2x2x1
jax: 0.10.0
libtpu: 0.0.40
codegen_flags: <defaults>
</compile_context>

<pallas_src>
import functools

import jax
import jax.numpy as jnp
from jax import lax
from jax.experimental import pallas as pl
from jax.experimental.pallas import tpu as pltpu

_VMEM_LIMIT = 32 * 1024 * 1024  # <= 48 MiB keeps v7x (64 MiB VMEM) safe too.


# ----------------------------------------------------------------------------
# Kernel 1: fused ConvBlock (per batch image), lane-dense (C, N) layout.
#   conv1 1x1 -> bn -> relu -> conv2 3x3 -> bn -> relu -> conv3 1x1
#   + residual 1x1 -> bn  -> add -> relu.
#   conv2 = one (c, 9c) @ (9c, N) matmul over nine lane-shifted views of the
#   conv1 activation; left/right image-edge wrap is killed by iota masks and
#   top/bottom rows by the zero lane-extension (exact zero-padding semantics).
# ----------------------------------------------------------------------------
def _convblock_kernel(x_ref, w1_ref, t1_ref, w2_ref, t2_ref, w3_ref, t3r_ref,
                      wr_ref, o_ref, *, H, W, c):
    N = H * W
    P = W + 1  # zero lane-extension on each side covers all 9 tap offsets

    x = x_ref[0].astype(jnp.bfloat16)                         # (C, N)

    # conv1 (1x1, BN scale folded into rows) + relu.
    a = jnp.dot(w1_ref[...], x, preferred_element_type=jnp.float32)
    a = jnp.maximum(a + t1_ref[...], 0.0).astype(jnp.bfloat16)   # (c, N)

    # conv2 (3x3, padding=1): nine lane-shifted views, one fused matmul.
    zpad = jnp.zeros((c, P), jnp.bfloat16)
    a_ext = jnp.concatenate([zpad, a, zpad], axis=1)          # (c, N + 2P)
    col = lax.broadcasted_iota(jnp.int32, (1, N), 1) % W      # in-kernel mask
    not_left = col > 0           # tap reads column w-1 -> invalid at w == 0
    not_right = col < (W - 1)    # tap reads column w+1 -> invalid at w == W-1
    taps = []
    for dy in range(3):
        for dx in range(3):
            s = P + (dy - 1) * W + (dx - 1)                   # static shift
            v = a_ext[:, s:s + N]
            if dx == 0:
                v = jnp.where(not_left, v, 0)
            elif dx == 2:
                v = jnp.where(not_right, v, 0)
            taps.append(v)
    a9 = jnp.concatenate(taps, axis=0)                        # (9c, N) bf16
    b2 = jnp.dot(w2_ref[...], a9, preferred_element_type=jnp.float32)
    b2 = jnp.maximum(b2 + t2_ref[...], 0.0).astype(jnp.bfloat16)  # (c, N)

    # conv3 + bn3 and residual 1x1 conv + bn (scales folded), add + relu.
    y3 = jnp.dot(w3_ref[...], b2, preferred_element_type=jnp.float32)
    yr = jnp.dot(wr_ref[...], x, preferred_element_type=jnp.float32)
    x1 = jnp.maximum(y3 + yr + t3r_ref[...], 0.0)             # (C, N) f32
    o_ref[0] = x1.astype(o_ref.dtype)                         # one dense store


def convblock(x, w1, t1, w2, t2, w3, t3r, wr, H, W):
    B, C, N = x.shape
    c = w1.shape[0]
    kern = functools.partial(_convblock_kernel, H=H, W=W, c=c)
    # NOTE: for B == 1 on v7x (2 TensorCores), split the image into >=2
    # parallel row bands (with a 1-row halo) so both cores get work.
    return pl.pallas_call(
        kern,
        out_shape=jax.ShapeDtypeStruct((B, C, N), jnp.bfloat16),
        grid=(B,),
        in_specs=[
            pl.BlockSpec((1, C, N), lambda b: (b, 0, 0)),
            pl.BlockSpec((c, C), lambda b: (0, 0)),
            pl.BlockSpec((c, 1), lambda b: (0, 0)),
            pl.BlockSpec((c, 9 * c), lambda b: (0, 0)),
            pl.BlockSpec((c, 1), lambda b: (0, 0)),
            pl.BlockSpec((C, c), lambda b: (0, 0)),
            pl.BlockSpec((C, 1), lambda b: (0, 0)),
            pl.BlockSpec((C, C), lambda b: (0, 0)),
        ],
        out_specs=pl.BlockSpec((1, C, N), lambda b: (b, 0, 0)),
        compiler_params=pltpu.CompilerParams(
            dimension_semantics=("parallel",),
            vmem_limit_bytes=_VMEM_LIMIT),
    )(x, w1, t1, w2, t2, w3, t3r, wr)


# ----------------------------------------------------------------------------
# Kernel 2: LVC 1x1 conv + BN + ReLU fused with Encoding (scaled L2 + softmax
# over codes + aggregate) + BN1d + ReLU + mean + Linear + sigmoid.
# grid=(B, N_tiles); the N axis is 'arbitrary' with f32 VMEM accumulators held
# in (C, K) orientation so gamma comes out as a (C, 1) column.
# ----------------------------------------------------------------------------
def _lvc_encoding_kernel(x1_ref, wl_ref, tl_ref, cw_ref, cwT_ref, c2_ref,
                         sc_ref, bns_ref, bnt_ref, wfc_ref, bfc_ref, gam_ref,
                         e_acc, a_acc, *, num_codes):
    nt = pl.program_id(1)

    @pl.when(nt == 0)
    def _():
        e_acc[...] = jnp.zeros_like(e_acc)
        a_acc[...] = jnp.zeros_like(a_acc)

    # LVC 1x1 conv (BN scale folded) + ReLU -- x1 never round-trips HBM as `t`.
    x1 = x1_ref[0]                                            # (C, TN) bf16
    t = jnp.dot(wl_ref[...], x1, preferred_element_type=jnp.float32)
    t = jnp.maximum(t + tl_ref[...], 0.0)                     # (C, TN) f32

    # scaled L2: scale_k * (||t_n||^2 - 2 c_k.t_n + ||c_k||^2); ||c||^2 hoisted.
    xc = jnp.dot(cw_ref[...], t, preferred_element_type=jnp.float32)  # (K, TN)
    tt = jnp.sum(t * t, axis=0, keepdims=True)                # (1, TN)
    sl2 = sc_ref[...] * (tt - 2.0 * xc + c2_ref[...])         # (K, TN)

    # softmax over codes (sublane axis).
    m = jnp.max(sl2, axis=0, keepdims=True)
    p = jnp.exp(sl2 - m)
    a = p * pl.reciprocal(jnp.sum(p, axis=0, keepdims=True), approx=True)

    # Aggregate across N tiles (f32, trans-B dims -> no materialized transpose):
    #   E^T (C, K) += t a^T ;   per-code weight sums via a tiny ones-row dot.
    e_acc[...] += lax.dot_general(t, a, (((1,), (1,)), ((), ())),
                                  preferred_element_type=jnp.float32)
    ones = jnp.ones((1, t.shape[1]), jnp.float32)
    a_acc[...] += lax.dot_general(ones, a, (((1,), (1,)), ((), ())),
                                  preferred_element_type=jnp.float32)

    @pl.when(nt == pl.num_programs(1) - 1)
    def _():
        e = e_acc[...] - cwT_ref[...] * a_acc[...]            # (C, K)
        e = jnp.maximum(e * bns_ref[...] + bnt_ref[...], 0.0)  # BN1d + ReLU
        en = jnp.sum(e, axis=1, keepdims=True) * (1.0 / num_codes)   # (C, 1)
        g = jnp.dot(wfc_ref[...], en, preferred_element_type=jnp.float32)
        gam_ref[0] = jax.nn.sigmoid(g + bfc_ref[...])         # (C, 1)


def lvc_encoding(x1, wl, tl, cw, cwT, c2, sc, bns, bnt, wfc, bfc, tile_n):
    B, C, N = x1.shape
    K = cw.shape[0]
    kern = functools.partial(_lvc_encoding_kernel, num_codes=K)
    return pl.pallas_call(
        kern,
        out_shape=jax.ShapeDtypeStruct((B, C, 1), jnp.float32),
        grid=(B, N // tile_n),
        in_specs=[
            pl.BlockSpec((1, C, tile_n), lambda b, n: (b, 0, n)),
            pl.BlockSpec((C, C), lambda b, n: (0, 0)),
            pl.BlockSpec((C, 1), lambda b, n: (0, 0)),
            pl.BlockSpec((K, C), lambda b, n: (0, 0)),
            pl.BlockSpec((C, K), lambda b, n: (0, 0)),
            pl.BlockSpec((K, 1), lambda b, n: (0, 0)),
            pl.BlockSpec((K, 1), lambda b, n: (0, 0)),
            pl.BlockSpec((1, K), lambda b, n: (0, 0)),
            pl.BlockSpec((1, K), lambda b, n: (0, 0)),
            pl.BlockSpec((C, C), lambda b, n: (0, 0)),
            pl.BlockSpec((C, 1), lambda b, n: (0, 0)),
        ],
        out_specs=pl.BlockSpec((1, C, 1), lambda b, n: (b, 0, 0)),
        scratch_shapes=[pltpu.VMEM((C, K), jnp.float32),
                        pltpu.VMEM((1, K), jnp.float32)],
        compiler_params=pltpu.CompilerParams(
            dimension_semantics=("parallel", "arbitrary"),
            vmem_limit_bytes=_VMEM_LIMIT),
    )(x1, wl, tl, cw, cwT, c2, sc, bns, bnt, wfc, bfc)


# ----------------------------------------------------------------------------
# Kernel 3: x = relu(x + x*gamma); out = 1x1 conv (with bias) -- per (b, tile).
# Elementwise gating stays f32 (v5e has no bf16 VPU); MXU operands and the
# (largest) HBM output are bf16.
# ----------------------------------------------------------------------------
def _gate_cnv_kernel(x_ref, g_ref, w_ref, b_ref, o_ref):
    x = x_ref[0].astype(jnp.float32)                          # (C, TN)
    scale = 1.0 + g_ref[0]                                    # (C, 1)
    z = jnp.maximum(x * scale, 0.0)                           # relu(x + x*gamma)
    y = jnp.dot(w_ref[...], z.astype(jnp.bfloat16),
                preferred_element_type=jnp.float32) + b_ref[...]
    o_ref[0] = y.astype(o_ref.dtype)


def gate_cnv(x1, gam, wc, bc, tile_n):
    B, C, N = x1.shape
    Cout = wc.shape[0]
    return pl.pallas_call(
        _gate_cnv_kernel,
        out_shape=jax.ShapeDtypeStruct((B, Cout, N), jnp.bfloat16),
        grid=(B, N // tile_n),
        in_specs=[
            pl.BlockSpec((1, C, tile_n), lambda b, n: (b, 0, n)),
            pl.BlockSpec((1, C, 1), lambda b, n: (b, 0, 0)),
            pl.BlockSpec((Cout, C), lambda b, n: (0, 0)),
            pl.BlockSpec((Cout, 1), lambda b, n: (0, 0)),
        ],
        out_specs=pl.BlockSpec((1, Cout, tile_n), lambda b, n: (b, 0, n)),
        compiler_params=pltpu.CompilerParams(
            dimension_semantics=("parallel", "parallel"),
            vmem_limit_bytes=_VMEM_LIMIT),
    )(x1, gam, wc, bc)


# ----------------------------------------------------------------------------
# Parameters (deterministic, synthetic) -- eval-mode BatchNorm folded to a
# per-channel scale/shift.
# ----------------------------------------------------------------------------
def _fold_bn(key, C, eps):
    k1, k2, k3, k4 = jax.random.split(key, 4)
    gamma = jax.random.uniform(k1, (C,), minval=0.5, maxval=1.5)
    beta = 0.1 * jax.random.normal(k2, (C,))
    rmean = 0.1 * jax.random.normal(k3, (C,))
    rvar = jax.random.uniform(k4, (C,), minval=0.5, maxval=1.5)
    s = gamma / jnp.sqrt(rvar + eps)
    t = beta - rmean * s
    return s.astype(jnp.float32), t.astype(jnp.float32)


def init_params(key, in_channels, out_channels):
    C = 2 * in_channels          # LVCBlock.forward expects 2*in_channels input
    c = C // 4                   # ConvBlock expansion = 4
    K = 64                       # Encoding hard-codes num_codes = 64
    keys = jax.random.split(key, 20)
    P = {}
    P["cb_w1"] = 0.2 * jax.random.normal(keys[0], (C, c))
    P["cb_s1"], P["cb_t1"] = _fold_bn(keys[1], c, 1e-6)
    P["cb_w2"] = 0.2 * jax.random.normal(keys[2], (9 * c, c))  # (dy,dx,cin)-major rows
    P["cb_s2"], P["cb_t2"] = _fold_bn(keys[3], c, 1e-6)
    P["cb_w3"] = 0.2 * jax.random.normal(keys[4], (c, C))
    P["cb_s3"], P["cb_t3"] = _fold_bn(keys[5], C, 1e-6)
    P["cb_wr"] = 0.2 * jax.random.normal(keys[6], (C, C))
    P["cb_sr"], P["cb_tr"] = _fold_bn(keys[7], C, 1e-6)
    P["lvc_w"] = 0.2 * jax.random.normal(keys[8], (C, C))
    P["lvc_s"], P["lvc_t"] = _fold_bn(keys[9], C, 1e-5)
    std = 1.0 / (K * C) ** 0.5
    P["codewords"] = jax.random.uniform(keys[10], (K, C), minval=-std, maxval=std)
    P["enc_scale"] = jax.random.uniform(keys[11], (K,), minval=-1.0, maxval=0.0)
    P["bn1d_s"], P["bn1d_t"] = _fold_bn(keys[12], K, 1e-5)
    P["fc_w"] = 0.2 * jax.random.normal(keys[13], (C, C))
    P["fc_b"] = 0.1 * jax.random.normal(keys[14], (C,))
    P["cnv1_w"] = 0.2 * jax.random.normal(keys[15], (C, out_channels))
    P["cnv1_b"] = 0.1 * jax.random.normal(keys[16], (out_channels,))
    return {k: jnp.asarray(v, jnp.float32) for k, v in P.items()}


def _pick_tile(n, target):
    # Largest divisor of n that is <= target and a multiple of 128 (the N axis
    # is the lane axis); fall back to the full extent.
    for t in range(min(n, target), 0, -1):
        if n % t == 0 and t % 128 == 0:
            return t
    return n


# ----------------------------------------------------------------------------
# LVCBlock forward (wrapper: one-time BN/weight folding + 3 kernels; no
# activation-side transposes or pads -- only free reshapes).
# ----------------------------------------------------------------------------
def lvc_block_forward(x_nchw, P):
    B, C, H, W = x_nchw.shape
    N = H * W
    bf = jnp.bfloat16
    col = lambda v: v.reshape(-1, 1).astype(jnp.float32)
    row = lambda v: v.reshape(1, -1).astype(jnp.float32)

    # lane-dense layout: channels in sublanes, flattened HW in lanes.
    x = x_nchw.reshape(B, C, N)

    # one-time host-side folding of BN scales into output-channel-major weights.
    w1 = (P["cb_w1"] * P["cb_s1"][None, :]).T.astype(bf)       # (c, C)
    w2 = (P["cb_w2"] * P["cb_s2"][None, :]).T.astype(bf)       # (c, 9c)
    w3 = (P["cb_w3"] * P["cb_s3"][None, :]).T.astype(bf)       # (C, c)
    wr = (P["cb_wr"] * P["cb_sr"][None, :]).T.astype(bf)       # (C, C)
    t3r = col(P["cb_t3"] + P["cb_tr"])

    # ---- fused ConvBlock -> x1 (B, C, N) bf16 ----
    x1 = convblock(x, w1, col(P["cb_t1"]), w2, col(P["cb_t2"]), w3, t3r, wr,
                   H, W)

    # ---- fused LVC conv + Encoding + BN1d + ReLU + mean + fc + sigmoid ----
    wl = (P["lvc_w"] * P["lvc_s"][None, :]).T.astype(bf)       # (C, C)
    cw = P["codewords"]
    c2 = col(jnp.sum(cw * cw, axis=1))                         # hoisted ||c||^2
    tile_n = _pick_tile(N, 1024)
    gam = lvc_encoding(x1, wl, col(P["lvc_t"]), cw, cw.T, c2,
                       col(P["enc_scale"]), row(P["bn1d_s"]), row(P["bn1d_t"]),
                       P["fc_w"].T, col(P["fc_b"]), tile_n)    # (B, C, 1)

    # ---- x = relu(x + x*gamma); x = cnv1(x) ----
    wc = P["cnv1_w"].T.astype(bf)                              # (Cout, C)
    out = gate_cnv(x1, gam, wc, col(P["cnv1_b"]), tile_n)      # (B, Cout, N)
    Cout = wc.shape[0]
    return out.reshape(B, Cout, H, W)


# ----------------------------------------------------------------------------
# Pure-JAX NCHW reference (mirrors the PyTorch forward) for a correctness check.
# ----------------------------------------------------------------------------
def ref_forward(x, P):
    B, C, H, W = x.shape
    c = P["cb_w1"].shape[1]
    relu = lambda v: jnp.maximum(v, 0.0)

    def conv1x1(inp, w):
        return jax.lax.conv_general_dilated(
            inp, jnp.transpose(w)[:, :, None, None], (1, 1), "VALID",
            dimension_numbers=("NCHW", "OIHW", "NCHW"))

    def bn(inp, s, t):
        return inp * s[None, :, None, None] + t[None, :, None, None]

    h = relu(bn(conv1x1(x, P["cb_w1"]), P["cb_s1"], P["cb_t1"]))
    w2 = jnp.transpose(P["cb_w2"].reshape(3, 3, c, c), (3, 2, 0, 1))  # OIHW
    h = jax.lax.conv_general_dilated(h, w2, (1, 1), ((1, 1), (1, 1)),
                                     dimension_numbers=("NCHW", "OIHW", "NCHW"))
    h = relu(bn(h, P["cb_s2"], P["cb_t2"]))
    h3 = bn(conv1x1(h, P["cb_w3"]), P["cb_s3"], P["cb_t3"])
    res = bn(conv1x1(x, P["cb_wr"]), P["cb_sr"], P["cb_tr"])
    x1 = relu(h3 + res)

    t = relu(bn(conv1x1(x1, P["lvc_w"]), P["lvc_s"], P["lvc_t"]))
    xr = jnp.transpose(t.reshape(B, C, -1), (0, 2, 1))                 # (B, N, C)
    cw, scale = P["codewords"], P["enc_scale"]
    diff = xr[:, :, None, :] - cw[None, None, :, :]                    # (B,N,K,C)
    sl2 = scale[None, None, :] * jnp.sum(diff * diff, axis=3)          # (B,N,K)
    aw = jax.nn.softmax(sl2, axis=2)
    ef = jnp.sum(aw[:, :, :, None] * diff, axis=1)                     # (B,K,C)
    ef = relu(ef * P["bn1d_s"][None, :, None] + P["bn1d_t"][None, :, None])
    en = jnp.mean(ef, axis=1)                                          # (B,C)
    gam = jax.nn.sigmoid(en @ P["fc_w"] + P["fc_b"][None, :])
    xg = relu(x1 + x1 * gam[:, :, None, None])
    return conv1x1(xg, P["cnv1_w"]) + P["cnv1_b"][None, :, None, None]


if __name__ == "__main__":
    key = jax.random.PRNGKey(0)
    kx, kp = jax.random.split(key)
    in_channels, out_channels = 8, 16
    B, H, W = 2, 16, 16
    C = 2 * in_channels                    # LVCBlock forward expects 2*in_channels
    x = jax.random.normal(kx, (B, C, H, W), jnp.float32)
    P = init_params(kp, in_channels, out_channels)

    fwd = jax.jit(lvc_block_forward)
    out = jax.block_until_ready(fwd(x, P))
    ref = jax.block_until_ready(ref_forward(x, P))

    assert out.shape == (B, out_channels, H, W), out.shape
    err = float(jnp.max(jnp.abs(out.astype(jnp.float32) - ref)))
    scale = max(float(jnp.max(jnp.abs(ref))), 1.0)
    # bf16 matmul operands / bf16 output vs f32 reference: expect ~1% relative.
    assert err <= 5e-2 * scale, f"relative error too large: {err / scale}"
    print("KERNEL_OK")
</pallas_src>

<mosaic_0001>
module attributes {stable_mosaic.version = 11 : i64} {
  func.func @_convblock_kernel(%arg0: i32, %arg1: memref<1x16x256xf32, #tpu.memory_space<vmem>>, %arg2: memref<4x16xbf16, #tpu.memory_space<vmem>>, %arg3: memref<4x1xf32, #tpu.memory_space<vmem>>, %arg4: memref<4x36xbf16, #tpu.memory_space<vmem>>, %arg5: memref<4x1xf32, #tpu.memory_space<vmem>>, %arg6: memref<16x4xbf16, #tpu.memory_space<vmem>>, %arg7: memref<16x1xf32, #tpu.memory_space<vmem>>, %arg8: memref<16x16xbf16, #tpu.memory_space<vmem>>, %arg9: memref<1x16x256xbf16, #tpu.memory_space<vmem>>) attributes {dimension_semantics = [#tpu.dimension_semantics<parallel>], iteration_bounds = array<i64: 2>, scalar_prefetch = 0 : i64, scratch_operands = 0 : i64, tpu.core_type = #tpu.core_type<tc>, window_params = [{transform_indices = @transform_0, window_bounds = array<i64: 1, 16, 256>}, {pipeline_mode = #tpu.pipeline_mode<synchronous>, transform_indices = @transform_1, window_bounds = array<i64: 4, 16>}, {pipeline_mode = #tpu.pipeline_mode<synchronous>, transform_indices = @transform_2, window_bounds = array<i64: 4, 1>}, {pipeline_mode = #tpu.pipeline_mode<synchronous>, transform_indices = @transform_3, window_bounds = array<i64: 4, 36>}, {pipeline_mode = #tpu.pipeline_mode<synchronous>, transform_indices = @transform_4, window_bounds = array<i64: 4, 1>}, {pipeline_mode = #tpu.pipeline_mode<synchronous>, transform_indices = @transform_5, window_bounds = array<i64: 16, 4>}, {pipeline_mode = #tpu.pipeline_mode<synchronous>, transform_indices = @transform_6, window_bounds = array<i64: 16, 1>}, {pipeline_mode = #tpu.pipeline_mode<synchronous>, transform_indices = @transform_7, window_bounds = array<i64: 16, 16>}, {transform_indices = @transform_8, window_bounds = array<i64: 1, 16, 256>}]} {
    %c0 = arith.constant 0 : index
    %c0_0 = arith.constant 0 : index
    %c0_1 = arith.constant 0 : index
    %0 = vector.load %arg1[%c0, %c0_0, %c0_1] : memref<1x16x256xf32, #tpu.memory_space<vmem>>, vector<1x16x256xf32>
    %1 = vector.shape_cast %0 : vector<1x16x256xf32> to vector<16x256xf32>
    %2 = arith.truncf %1 : vector<16x256xf32> to vector<16x256xbf16>
    %c0_2 = arith.constant 0 : index
    %c0_3 = arith.constant 0 : index
    %3 = vector.load %arg2[%c0_2, %c0_3] : memref<4x16xbf16, #tpu.memory_space<vmem>>, vector<4x16xbf16>
    %cst = arith.constant dense<0.000000e+00> : vector<4x256xf32>
    %4 = tpu.matmul %3, %2, %cst {dimension_numbers = #tpu.dot_dimension_numbers<[1], [0], [0], [1], [0, 0, 1, 1], [], []>} : vector<4x16xbf16>, vector<16x256xbf16>, vector<4x256xf32> -> vector<4x256xf32>
    %c0_4 = arith.constant 0 : index
    %c0_5 = arith.constant 0 : index
    %5 = vector.load %arg3[%c0_4, %c0_5] : memref<4x1xf32, #tpu.memory_space<vmem>>, vector<4x1xf32>
    %6 = vector.broadcast %5 : vector<4x1xf32> to vector<4x256xf32>
    %7 = arith.addf %4, %6 : vector<4x256xf32>
    %cst_6 = arith.constant 0.000000e+00 : f32
    %8 = vector.broadcast %cst_6 : f32 to vector<4x256xf32>
    %9 = arith.maximumf %7, %8 : vector<4x256xf32>
    %10 = arith.truncf %9 : vector<4x256xf32> to vector<4x256xbf16>
    %cst_7 = arith.constant 0.000000e+00 : bf16
    %11 = vector.broadcast %cst_7 : bf16 to vector<4x17xbf16>
    %12 = tpu.concatenate %11, %10, %11 in 1 : vector<4x17xbf16>, vector<4x256xbf16>, vector<4x17xbf16> -> vector<4x290xbf16>
    %13 = tpu.iota {dimensions = array<i32: 1>} : vector<1x256xi32>
    %c16_i32 = arith.constant 16 : i32
    %c0_i32 = arith.constant 0 : i32
    %14 = arith.cmpi eq, %c16_i32, %c0_i32 : i32
    %c1_i32 = arith.constant 1 : i32
    %15 = arith.select %14, %c1_i32, %c16_i32 : i32
    %16 = vector.broadcast %15 : i32 to vector<1x256xi32>
    %17 = arith.remsi %13, %16 : vector<1x256xi32>
    %c0_i32_8 = arith.constant 0 : i32
    %18 = vector.broadcast %c0_i32_8 : i32 to vector<1x256xi32>
    %19 = arith.cmpi ne, %17, %18 : vector<1x256xi32>
    %c0_i32_9 = arith.constant 0 : i32
    %20 = vector.broadcast %c0_i32_9 : i32 to vector<1x256xi32>
    %21 = arith.cmpi slt, %17, %20 : vector<1x256xi32>
    %c0_i32_10 = arith.constant 0 : i32
    %22 = arith.cmpi slt, %15, %c0_i32_10 : i32
    %23 = vector.broadcast %22 : i1 to vector<1x256xi1>
    %24 = vector.broadcast %23 : vector<1x256xi1> to vector<1x256xi1>
    %25 = arith.xori %21, %24 : vector<1x256xi1>
    %26 = arith.andi %25, %19 : vector<1x256xi1>
    %27 = vector.broadcast %15 : i32 to vector<1x256xi32>
    %28 = arith.addi %17, %27 : vector<1x256xi32>
    %29 = arith.select %26, %28, %17 : vector<1x256xi1>, vector<1x256xi32>
    %c0_i32_11 = arith.constant 0 : i32
    %30 = vector.broadcast %c0_i32_11 : i32 to vector<1x256xi32>
    %31 = arith.cmpi sgt, %29, %30 : vector<1x256xi32>
    %c15_i32 = arith.constant 15 : i32
    %32 = vector.broadcast %c15_i32 : i32 to vector<1x256xi32>
    %33 = arith.cmpi slt, %29, %32 : vector<1x256xi32>
    %34 = vector.extract_strided_slice %12 {offsets = [0, 0], sizes = [4, 256], strides = [1, 1]} : vector<4x290xbf16> to vector<4x256xbf16>
    %c0_i32_12 = arith.constant 0 : i32
    %35 = arith.sitofp %c0_i32_12 : i32 to bf16
    %36 = vector.shape_cast %31 : vector<1x256xi1> to vector<1x256xi1>
    %37 = vector.broadcast %36 : vector<1x256xi1> to vector<4x256xi1>
    %38 = vector.broadcast %35 : bf16 to vector<4x256xbf16>
    %39 = arith.select %37, %34, %38 : vector<4x256xi1>, vector<4x256xbf16>
    %40 = vector.extract_strided_slice %12 {offsets = [0, 1], sizes = [4, 256], strides = [1, 1]} : vector<4x290xbf16> to vector<4x256xbf16>
    %41 = vector.extract_strided_slice %12 {offsets = [0, 2], sizes = [4, 256], strides = [1, 1]} : vector<4x290xbf16> to vector<4x256xbf16>
    %c0_i32_13 = arith.constant 0 : i32
    %42 = arith.sitofp %c0_i32_13 : i32 to bf16
    %43 = vector.shape_cast %33 : vector<1x256xi1> to vector<1x256xi1>
    %44 = vector.broadcast %43 : vector<1x256xi1> to vector<4x256xi1>
    %45 = vector.broadcast %42 : bf16 to vector<4x256xbf16>
    %46 = arith.select %44, %41, %45 : vector<4x256xi1>, vector<4x256xbf16>
    %47 = vector.extract_strided_slice %12 {offsets = [0, 16], sizes = [4, 256], strides = [1, 1]} : vector<4x290xbf16> to vector<4x256xbf16>
    %c0_i32_14 = arith.constant 0 : i32
    %48 = arith.sitofp %c0_i32_14 : i32 to bf16
    %49 = vector.shape_cast %31 : vector<1x256xi1> to vector<1x256xi1>
    %50 = vector.broadcast %49 : vector<1x256xi1> to vector<4x256xi1>
    %51 = vector.broadcast %48 : bf16 to vector<4x256xbf16>
    %52 = arith.select %50, %47, %51 : vector<4x256xi1>, vector<4x256xbf16>
    %53 = vector.extract_strided_slice %12 {offsets = [0, 17], sizes = [4, 256], strides = [1, 1]} : vector<4x290xbf16> to vector<4x256xbf16>
    %54 = vector.extract_strided_slice %12 {offsets = [0, 18], sizes = [4, 256], strides = [1, 1]} : vector<4x290xbf16> to vector<4x256xbf16>
    %c0_i32_15 = arith.constant 0 : i32
    %55 = arith.sitofp %c0_i32_15 : i32 to bf16
    %56 = vector.shape_cast %33 : vector<1x256xi1> to vector<1x256xi1>
    %57 = vector.broadcast %56 : vector<1x256xi1> to vector<4x256xi1>
    %58 = vector.broadcast %55 : bf16 to vector<4x256xbf16>
    %59 = arith.select %57, %54, %58 : vector<4x256xi1>, vector<4x256xbf16>
    %60 = vector.extract_strided_slice %12 {offsets = [0, 32], sizes = [4, 256], strides = [1, 1]} : vector<4x290xbf16> to vector<4x256xbf16>
    %c0_i32_16 = arith.constant 0 : i32
    %61 = arith.sitofp %c0_i32_16 : i32 to bf16
    %62 = vector.shape_cast %31 : vector<1x256xi1> to vector<1x256xi1>
    %63 = vector.broadcast %62 : vector<1x256xi1> to vector<4x256xi1>
    %64 = vector.broadcast %61 : bf16 to vector<4x256xbf16>
    %65 = arith.select %63, %60, %64 : vector<4x256xi1>, vector<4x256xbf16>
    %66 = vector.extract_strided_slice %12 {offsets = [0, 33], sizes = [4, 256], strides = [1, 1]} : vector<4x290xbf16> to vector<4x256xbf16>
    %67 = vector.extract_strided_slice %12 {offsets = [0, 34], sizes = [4, 256], strides = [1, 1]} : vector<4x290xbf16> to vector<4x256xbf16>
    %c0_i32_17 = arith.constant 0 : i32
    %68 = arith.sitofp %c0_i32_17 : i32 to bf16
    %69 = vector.shape_cast %33 : vector<1x256xi1> to vector<1x256xi1>
    %70 = vector.broadcast %69 : vector<1x256xi1> to vector<4x256xi1>
    %71 = vector.broadcast %68 : bf16 to vector<4x256xbf16>
    %72 = arith.select %70, %67, %71 : vector<4x256xi1>, vector<4x256xbf16>
    %73 = tpu.concatenate %39, %40, %46, %52, %53, %59, %65, %66, %72 in 0 : vector<4x256xbf16>, vector<4x256xbf16>, vector<4x256xbf16>, vector<4x256xbf16>, vector<4x256xbf16>, vector<4x256xbf16>, vector<4x256xbf16>, vector<4x256xbf16>, vector<4x256xbf16> -> vector<36x256xbf16>
    %c0_18 = arith.constant 0 : index
    %c0_19 = arith.constant 0 : index
    %74 = vector.load %arg4[%c0_18, %c0_19] : memref<4x36xbf16, #tpu.memory_space<vmem>>, vector<4x36xbf16>
    %cst_20 = arith.constant dense<0.000000e+00> : vector<4x256xf32>
    %75 = tpu.matmul %74, %73, %cst_20 {dimension_numbers = #tpu.dot_dimension_numbers<[1], [0], [0], [1], [0, 0, 1, 1], [], []>} : vector<4x36xbf16>, vector<36x256xbf16>, vector<4x256xf32> -> vector<4x256xf32>
    %c0_21 = arith.constant 0 : index
    %c0_22 = arith.constant 0 : index
    %76 = vector.load %arg5[%c0_21, %c0_22] : memref<4x1xf32, #tpu.memory_space<vmem>>, vector<4x1xf32>
    %77 = vector.broadcast %76 : vector<4x1xf32> to vector<4x256xf32>
    %78 = arith.addf %75, %77 : vector<4x256xf32>
    %cst_23 = arith.constant 0.000000e+00 : f32
    %79 = vector.broadcast %cst_23 : f32 to vector<4x256xf32>
    %80 = arith.maximumf %78, %79 : vector<4x256xf32>
    %81 = arith.truncf %80 : vector<4x256xf32> to vector<4x256xbf16>
    %c0_24 = arith.constant 0 : index
    %c0_25 = arith.constant 0 : index
    %82 = vector.load %arg6[%c0_24, %c0_25] : memref<16x4xbf16, #tpu.memory_space<vmem>>, vector<16x4xbf16>
    %cst_26 = arith.constant dense<0.000000e+00> : vector<16x256xf32>
    %83 = tpu.matmul %82, %81, %cst_26 {dimension_numbers = #tpu.dot_dimension_numbers<[1], [0], [0], [1], [0, 0, 1, 1], [], []>} : vector<16x4xbf16>, vector<4x256xbf16>, vector<16x256xf32> -> vector<16x256xf32>
    %c0_27 = arith.constant 0 : index
    %c0_28 = arith.constant 0 : index
    %84 = vector.load %arg8[%c0_27, %c0_28] : memref<16x16xbf16, #tpu.memory_space<vmem>>, vector<16x16xbf16>
    %cst_29 = arith.constant dense<0.000000e+00> : vector<16x256xf32>
    %85 = tpu.matmul %84, %2, %cst_29 {dimension_numbers = #tpu.dot_dimension_numbers<[1], [0], [0], [1], [0, 0, 1, 1], [], []>} : vector<16x16xbf16>, vector<16x256xbf16>, vector<16x256xf32> -> vector<16x256xf32>
    %86 = arith.addf %83, %85 : vector<16x256xf32>
    %c0_30 = arith.constant 0 : index
    %c0_31 = arith.constant 0 : index
    %87 = vector.load %arg7[%c0_30, %c0_31] : memref<16x1xf32, #tpu.memory_space<vmem>>, vector<16x1xf32>
    %88 = vector.broadcast %87 : vector<16x1xf32> to vector<16x256xf32>
    %89 = arith.addf %86, %88 : vector<16x256xf32>
    %cst_32 = arith.constant 0.000000e+00 : f32
    %90 = vector.broadcast %cst_32 : f32 to vector<16x256xf32>
    %91 = arith.maximumf %89, %90 : vector<16x256xf32>
    %92 = arith.truncf %91 : vector<16x256xf32> to vector<16x256xbf16>
    %c0_33 = arith.constant 0 : index
    %c0_34 = arith.constant 0 : index
    %c0_35 = arith.constant 0 : index
    %93 = vector.load %arg9[%c0_33, %c0_34, %c0_35] : memref<1x16x256xbf16, #tpu.memory_space<vmem>>, vector<1x16x256xbf16>
    %94 = vector.shape_cast %93 : vector<1x16x256xbf16> to vector<16x256xbf16>
    %95 = vector.shape_cast %92 : vector<16x256xbf16> to vector<1x16x256xbf16>
    tpu.vector_store %arg9[%c0_33, %c0_34, %c0_35], %95 {strides = array<i32>} : memref<1x16x256xbf16, #tpu.memory_space<vmem>>, vector<1x16x256xbf16>,
    return
  }
  func.func @transform_0(%arg0: i32) -> (i32, i32, i32) {
    %c0_i32 = arith.constant 0 : i32
    %c0_i32_0 = arith.constant 0 : i32
    %c0_i32_1 = arith.constant 0 : i32
    return %arg0, %c0_i32, %c0_i32_0 : i32, i32, i32
  }
  func.func @transform_1(%arg0: i32) -> (i32, i32) {
    %c0_i32 = arith.constant 0 : i32
    %c0_i32_0 = arith.constant 0 : i32
    %c0_i32_1 = arith.constant 0 : i32
    return %c0_i32, %c0_i32_0 : i32, i32
  }
  func.func @transform_2(%arg0: i32) -> (i32, i32) {
    %c0_i32 = arith.constant 0 : i32
    %c0_i32_0 = arith.constant 0 : i32
    %c0_i32_1 = arith.constant 0 : i32
    return %c0_i32, %c0_i32_0 : i32, i32
  }
  func.func @transform_3(%arg0: i32) -> (i32, i32) {
    %c0_i32 = arith.constant 0 : i32
    %c0_i32_0 = arith.constant 0 : i32
    %c0_i32_1 = arith.constant 0 : i32
    return %c0_i32, %c0_i32_0 : i32, i32
  }
  func.func @transform_4(%arg0: i32) -> (i32, i32) {
    %c0_i32 = arith.constant 0 : i32
    %c0_i32_0 = arith.constant 0 : i32
    %c0_i32_1 = arith.constant 0 : i32
    return %c0_i32, %c0_i32_0 : i32, i32
  }
  func.func @transform_5(%arg0: i32) -> (i32, i32) {
    %c0_i32 = arith.constant 0 : i32
    %c0_i32_0 = arith.constant 0 : i32
    %c0_i32_1 = arith.constant 0 : i32
    return %c0_i32, %c0_i32_0 : i32, i32
  }
  func.func @transform_6(%arg0: i32) -> (i32, i32) {
    %c0_i32 = arith.constant 0 : i32
    %c0_i32_0 = arith.constant 0 : i32
    %c0_i32_1 = arith.constant 0 : i32
    return %c0_i32, %c0_i32_0 : i32, i32
  }
  func.func @transform_7(%arg0: i32) -> (i32, i32) {
    %c0_i32 = arith.constant 0 : i32
    %c0_i32_0 = arith.constant 0 : i32
    %c0_i32_1 = arith.constant 0 : i32
    return %c0_i32, %c0_i32_0 : i32, i32
  }
  func.func @transform_8(%arg0: i32) -> (i32, i32, i32) {
    %c0_i32 = arith.constant 0 : i32
    %c0_i32_0 = arith.constant 0 : i32
    %c0_i32_1 = arith.constant 0 : i32
    return %arg0, %c0_i32, %c0_i32_0 : i32, i32, i32
  }
}

module attributes {stable_mosaic.version = 11 : i64} {
  func.func @_lvc_encoding_kernel(%arg0: i32, %arg1: i32, %arg2: memref<1x16x256xbf16, #tpu.memory_space<vmem>>, %arg3: memref<16x16xbf16, #tpu.memory_space<vmem>>, %arg4: memref<16x1xf32, #tpu.memory_space<vmem>>, %arg5: memref<64x16xf32, #tpu.memory_space<vmem>>, %arg6: memref<16x64xf32, #tpu.memory_space<vmem>>, %arg7: memref<64x1xf32, #tpu.memory_space<vmem>>, %arg8: memref<64x1xf32, #tpu.memory_space<vmem>>, %arg9: memref<1x64xf32, #tpu.memory_space<vmem>>, %arg10: memref<1x64xf32, #tpu.memory_space<vmem>>, %arg11: memref<16x16xf32, #tpu.memory_space<vmem>>, %arg12: memref<16x1xf32, #tpu.memory_space<vmem>>, %arg13: memref<1x16x1xf32, #tpu.memory_space<vmem>>, %arg14: memref<16x64xf32, #tpu.memory_space<vmem>>, %arg15: memref<1x64xf32, #tpu.memory_space<vmem>>) attributes {dimension_semantics = [#tpu.dimension_semantics<parallel>, #tpu.dimension_semantics<arbitrary>], iteration_bounds = array<i64: 2, 1>, scalar_prefetch = 0 : i64, scratch_operands = 2 : i64, tpu.core_type = #tpu.core_type<tc>, window_params = [{transform_indices = @transform_0, window_bounds = array<i64: 1, 16, 256>}, {pipeline_mode = #tpu.pipeline_mode<synchronous>, transform_indices = @transform_1, window_bounds = array<i64: 16, 16>}, {pipeline_mode = #tpu.pipeline_mode<synchronous>, transform_indices = @transform_2, window_bounds = array<i64: 16, 1>}, {pipeline_mode = #tpu.pipeline_mode<synchronous>, transform_indices = @transform_3, window_bounds = array<i64: 64, 16>}, {pipeline_mode = #tpu.pipeline_mode<synchronous>, transform_indices = @transform_4, window_bounds = array<i64: 16, 64>}, {pipeline_mode = #tpu.pipeline_mode<synchronous>, transform_indices = @transform_5, window_bounds = array<i64: 64, 1>}, {pipeline_mode = #tpu.pipeline_mode<synchronous>, transform_indices = @transform_6, window_bounds = array<i64: 64, 1>}, {pipeline_mode = #tpu.pipeline_mode<synchronous>, transform_indices = @transform_7, window_bounds = array<i64: 1, 64>}, {pipeline_mode = #tpu.pipeline_mode<synchronous>, transform_indices = @transform_8, window_bounds = array<i64: 1, 64>}, {pipeline_mode = #tpu.pipeline_mode<synchronous>, transform_indices = @transform_9, window_bounds = array<i64: 16, 16>}, {pipeline_mode = #tpu.pipeline_mode<synchronous>, transform_indices = @transform_10, window_bounds = array<i64: 16, 1>}, {transform_indices = @transform_11, window_bounds = array<i64: 1, 16, 1>}]} {
    %c0_i32 = arith.constant 0 : i32
    %0 = arith.cmpi eq, %arg1, %c0_i32 : i32
    %1 = arith.extui %0 : i1 to i32
    %c0_i32_0 = arith.constant 0 : i32
    %2 = arith.cmpi ne, %1, %c0_i32_0 : i32
    scf.if %2 {
      %cst_32 = arith.constant 0.000000e+00 : f32
      %49 = vector.broadcast %cst_32 : f32 to vector<16x64xf32>
      %c0_33 = arith.constant 0 : index
      %c0_34 = arith.constant 0 : index
      %50 = vector.load %arg14[%c0_33, %c0_34] : memref<16x64xf32, #tpu.memory_space<vmem>>, vector<16x64xf32>
      tpu.vector_store %arg14[%c0_33, %c0_34], %49 {strides = array<i32>} : memref<16x64xf32, #tpu.memory_space<vmem>>, vector<16x64xf32>,
      %cst_35 = arith.constant 0.000000e+00 : f32
      %51 = vector.broadcast %cst_35 : f32 to vector<1x64xf32>
      %c0_36 = arith.constant 0 : index
      %c0_37 = arith.constant 0 : index
      %52 = vector.load %arg15[%c0_36, %c0_37] : memref<1x64xf32, #tpu.memory_space<vmem>>, vector<1x64xf32>
      tpu.vector_store %arg15[%c0_36, %c0_37], %51 {strides = array<i32>} : memref<1x64xf32, #tpu.memory_space<vmem>>, vector<1x64xf32>,
    } else {
    }
    %c0 = arith.constant 0 : index
    %c0_1 = arith.constant 0 : index
    %c0_2 = arith.constant 0 : index
    %3 = vector.load %arg2[%c0, %c0_1, %c0_2] : memref<1x16x256xbf16, #tpu.memory_space<vmem>>, vector<1x16x256xbf16>
    %4 = vector.shape_cast %3 : vector<1x16x256xbf16> to vector<16x256xbf16>
    %c0_3 = arith.constant 0 : index
    %c0_4 = arith.constant 0 : index
    %5 = vector.load %arg3[%c0_3, %c0_4] : memref<16x16xbf16, #tpu.memory_space<vmem>>, vector<16x16xbf16>
    %cst = arith.constant dense<0.000000e+00> : vector<16x256xf32>
    %6 = tpu.matmul %5, %4, %cst {dimension_numbers = #tpu.dot_dimension_numbers<[1], [0], [0], [1], [0, 0, 1, 1], [], []>} : vector<16x16xbf16>, vector<16x256xbf16>, vector<16x256xf32> -> vector<16x256xf32>
    %c0_5 = arith.constant 0 : index
    %c0_6 = arith.constant 0 : index
    %7 = vector.load %arg4[%c0_5, %c0_6] : memref<16x1xf32, #tpu.memory_space<vmem>>, vector<16x1xf32>
    %8 = vector.broadcast %7 : vector<16x1xf32> to vector<16x256xf32>
    %9 = arith.addf %6, %8 : vector<16x256xf32>
    %cst_7 = arith.constant 0.000000e+00 : f32
    %10 = vector.broadcast %cst_7 : f32 to vector<16x256xf32>
    %11 = arith.maximumf %9, %10 : vector<16x256xf32>
    %c0_8 = arith.constant 0 : index
    %c0_9 = arith.constant 0 : index
    %12 = vector.load %arg5[%c0_8, %c0_9] : memref<64x16xf32, #tpu.memory_space<vmem>>, vector<64x16xf32>
    %cst_10 = arith.constant dense<0.000000e+00> : vector<64x256xf32>
    %13 = tpu.matmul %12, %11, %cst_10 {dimension_numbers = #tpu.dot_dimension_numbers<[1], [0], [0], [1], [0, 0, 1, 1], [], []>} : vector<64x16xf32>, vector<16x256xf32>, vector<64x256xf32> -> vector<64x256xf32>
    %14 = arith.mulf %11, %11 : vector<16x256xf32>
    %cst_11 = arith.constant dense<0.000000e+00> : vector<256xf32>
    %15 = vector.multi_reduction <add>, %14, %cst_11 [0] : vector<16x256xf32> to vector<256xf32>
    %16 = vector.shape_cast %15 : vector<256xf32> to vector<1x256xf32>
    %c0_12 = arith.constant 0 : index
    %c0_13 = arith.constant 0 : index
    %17 = vector.load %arg8[%c0_12, %c0_13] : memref<64x1xf32, #tpu.memory_space<vmem>>, vector<64x1xf32>
    %cst_14 = arith.constant 2.000000e+00 : f32
    %18 = vector.broadcast %cst_14 : f32 to vector<64x256xf32>
    %19 = arith.mulf %18, %13 : vector<64x256xf32>
    %20 = vector.broadcast %16 : vector<1x256xf32> to vector<64x256xf32>
    %21 = arith.subf %20, %19 : vector<64x256xf32>
    %c0_15 = arith.constant 0 : index
    %c0_16 = arith.constant 0 : index
    %22 = vector.load %arg7[%c0_15, %c0_16] : memref<64x1xf32, #tpu.memory_space<vmem>>, vector<64x1xf32>
    %23 = vector.broadcast %22 : vector<64x1xf32> to vector<64x256xf32>
    %24 = arith.addf %21, %23 : vector<64x256xf32>
    %25 = vector.broadcast %17 : vector<64x1xf32> to vector<64x256xf32>
    %26 = arith.mulf %25, %24 : vector<64x256xf32>
    %cst_17 = arith.constant dense<0xFF800000> : vector<256xf32>
    %27 = vector.multi_reduction <maximumf>, %26, %cst_17 [0] : vector<64x256xf32> to vector<256xf32>
    %28 = vector.shape_cast %27 : vector<256xf32> to vector<1x256xf32>
    %29 = vector.broadcast %28 : vector<1x256xf32> to vector<64x256xf32>
    %30 = arith.subf %26, %29 : vector<64x256xf32>
    %31 = math.exp %30 : vector<64x256xf32>
    %cst_18 = arith.constant dense<0.000000e+00> : vector<256xf32>
    %32 = vector.multi_reduction <add>, %31, %cst_18 [0] : vector<64x256xf32> to vector<256xf32>
    %33 = vector.shape_cast %32 : vector<256xf32> to vector<1x256xf32>
    %34 = tpu.reciprocal %33 {approx = true} : vector<1x256xf32> -> vector<1x256xf32>
    %35 = vector.broadcast %34 : vector<1x256xf32> to vector<64x256xf32>
    %36 = arith.mulf %31, %35 : vector<64x256xf32>
    %c0_19 = arith.constant 0 : index
    %c0_20 = arith.constant 0 : index
    %37 = vector.load %arg14[%c0_19, %c0_20] : memref<16x64xf32, #tpu.memory_space<vmem>>, vector<16x64xf32>
    %cst_21 = arith.constant dense<0.000000e+00> : vector<16x64xf32>
    %38 = tpu.matmul %11, %36, %cst_21 {dimension_numbers = #tpu.dot_dimension_numbers<[1], [1], [0], [0], [0, 0, 1, 0], [], []>} : vector<16x256xf32>, vector<64x256xf32>, vector<16x64xf32> -> vector<16x64xf32>
    %39 = arith.addf %37, %38 : vector<16x64xf32>
    %c0_22 = arith.constant 0 : index
    %c0_23 = arith.constant 0 : index
    %40 = vector.load %arg14[%c0_22, %c0_23] : memref<16x64xf32, #tpu.memory_space<vmem>>, vector<16x64xf32>
    tpu.vector_store %arg14[%c0_22, %c0_23], %39 {strides = array<i32>} : memref<16x64xf32, #tpu.memory_space<vmem>>, vector<16x64xf32>,
    %cst_24 = arith.constant 1.000000e+00 : f32
    %41 = vector.broadcast %cst_24 : f32 to vector<1x256xf32>
    %c0_25 = arith.constant 0 : index
    %c0_26 = arith.constant 0 : index
    %42 = vector.load %arg15[%c0_25, %c0_26] : memref<1x64xf32, #tpu.memory_space<vmem>>, vector<1x64xf32>
    %cst_27 = arith.constant dense<0.000000e+00> : vector<1x64xf32>
    %43 = tpu.matmul %41, %36, %cst_27 {dimension_numbers = #tpu.dot_dimension_numbers<[1], [1], [0], [0], [0, 0, 1, 0], [], []>} : vector<1x256xf32>, vector<64x256xf32>, vector<1x64xf32> -> vector<1x64xf32>
    %44 = arith.addf %42, %43 : vector<1x64xf32>
    %c0_28 = arith.constant 0 : index
    %c0_29 = arith.constant 0 : index
    %45 = vector.load %arg15[%c0_28, %c0_29] : memref<1x64xf32, #tpu.memory_space<vmem>>, vector<1x64xf32>
    tpu.vector_store %arg15[%c0_28, %c0_29], %44 {strides = array<i32>} : memref<1x64xf32, #tpu.memory_space<vmem>>, vector<1x64xf32>,
    %c0_i32_30 = arith.constant 0 : i32
    %46 = arith.cmpi eq, %arg1, %c0_i32_30 : i32
    %47 = arith.extui %46 : i1 to i32
    %c0_i32_31 = arith.constant 0 : i32
    %48 = arith.cmpi ne, %47, %c0_i32_31 : i32
    scf.if %48 {
      %c0_32 = arith.constant 0 : index
      %c0_33 = arith.constant 0 : index
      %49 = vector.load %arg14[%c0_32, %c0_33] : memref<16x64xf32, #tpu.memory_space<vmem>>, vector<16x64xf32>
      %c0_34 = arith.constant 0 : index
      %c0_35 = arith.constant 0 : index
      %50 = vector.load %arg6[%c0_34, %c0_35] : memref<16x64xf32, #tpu.memory_space<vmem>>, vector<16x64xf32>
      %c0_36 = arith.constant 0 : index
      %c0_37 = arith.constant 0 : index
      %51 = vector.load %arg15[%c0_36, %c0_37] : memref<1x64xf32, #tpu.memory_space<vmem>>, vector<1x64xf32>
      %52 = vector.broadcast %51 : vector<1x64xf32> to vector<16x64xf32>
      %53 = arith.mulf %50, %52 : vector<16x64xf32>
      %54 = arith.subf %49, %53 : vector<16x64xf32>
      %c0_38 = arith.constant 0 : index
      %c0_39 = arith.constant 0 : index
      %55 = vector.load %arg9[%c0_38, %c0_39] : memref<1x64xf32, #tpu.memory_space<vmem>>, vector<1x64xf32>
      %56 = vector.broadcast %55 : vector<1x64xf32> to vector<16x64xf32>
      %57 = arith.mulf %54, %56 : vector<16x64xf32>
      %c0_40 = arith.constant 0 : index
      %c0_41 = arith.constant 0 : index
      %58 = vector.load %arg10[%c0_40, %c0_41] : memref<1x64xf32, #tpu.memory_space<vmem>>, vector<1x64xf32>
      %59 = vector.broadcast %58 : vector<1x64xf32> to vector<16x64xf32>
      %60 = arith.addf %57, %59 : vector<16x64xf32>
      %cst_42 = arith.constant 0.000000e+00 : f32
      %61 = vector.broadcast %cst_42 : f32 to vector<16x64xf32>
      %62 = arith.maximumf %60, %61 : vector<16x64xf32>
      %cst_43 = arith.constant dense<0.000000e+00> : vector<16xf32>
      %63 = vector.multi_reduction <add>, %62, %cst_43 [1] : vector<16x64xf32> to vector<16xf32>
      %64 = vector.shape_cast %63 : vector<16xf32> to vector<16x1xf32>
      %cst_44 = arith.constant 1.562500e-02 : f32
      %65 = vector.broadcast %cst_44 : f32 to vector<16x1xf32>
      %66 = arith.mulf %64, %65 : vector<16x1xf32>
      %c0_45 = arith.constant 0 : index
      %c0_46 = arith.constant 0 : index
      %67 = vector.load %arg11[%c0_45, %c0_46] : memref<16x16xf32, #tpu.memory_space<vmem>>, vector<16x16xf32>
      %cst_47 = arith.constant dense<0.000000e+00> : vector<16x1xf32>
      %68 = tpu.matmul %67, %66, %cst_47 {dimension_numbers = #tpu.dot_dimension_numbers<[1], [0], [0], [1], [0, 0, 1, 1], [], []>} : vector<16x16xf32>, vector<16x1xf32>, vector<16x1xf32> -> vector<16x1xf32>
      %c0_48 = arith.constant 0 : index
      %c0_49 = arith.constant 0 : index
      %69 = vector.load %arg12[%c0_48, %c0_49] : memref<16x1xf32, #tpu.memory_space<vmem>>, vector<16x1xf32>
      %70 = arith.addf %68, %69 : vector<16x1xf32>
      %71 = arith.negf %70 : vector<16x1xf32>
      %72 = math.exp %71 : vector<16x1xf32>
      %cst_50 = arith.constant 1.000000e+00 : f32
      %73 = vector.broadcast %cst_50 : f32 to vector<16x1xf32>
      %74 = arith.addf %73, %72 : vector<16x1xf32>
      %75 = arith.divf %73, %74 : vector<16x1xf32>
      %c0_51 = arith.constant 0 : index
      %c0_52 = arith.constant 0 : index
      %c0_53 = arith.constant 0 : index
      %76 = vector.load %arg13[%c0_51, %c0_52, %c0_53] : memref<1x16x1xf32, #tpu.memory_space<vmem>>, vector<1x16x1xf32>
      %77 = vector.shape_cast %76 : vector<1x16x1xf32> to vector<16x1xf32>
      %78 = vector.shape_cast %75 : vector<16x1xf32> to vector<1x16x1xf32>
      tpu.vector_store %arg13[%c0_51, %c0_52, %c0_53], %78 {strides = array<i32>} : memref<1x16x1xf32, #tpu.memory_space<vmem>>, vector<1x16x1xf32>,
    } else {
    }
    return
  }
  func.func @transform_0(%arg0: i32, %arg1: i32) -> (i32, i32, i32) {
    %c0_i32 = arith.constant 0 : i32
    %c0_i32_0 = arith.constant 0 : i32
    return %arg0, %c0_i32, %arg1 : i32, i32, i32
  }
  func.func @transform_1(%arg0: i32, %arg1: i32) -> (i32, i32) {
    %c0_i32 = arith.constant 0 : i32
    %c0_i32_0 = arith.constant 0 : i32
    %c0_i32_1 = arith.constant 0 : i32
    return %c0_i32, %c0_i32_0 : i32, i32
  }
  func.func @transform_2(%arg0: i32, %arg1: i32) -> (i32, i32) {
    %c0_i32 = arith.constant 0 : i32
    %c0_i32_0 = arith.constant 0 : i32
    %c0_i32_1 = arith.constant 0 : i32
    return %c0_i32, %c0_i32_0 : i32, i32
  }
  func.func @transform_3(%arg0: i32, %arg1: i32) -> (i32, i32) {
    %c0_i32 = arith.constant 0 : i32
    %c0_i32_0 = arith.constant 0 : i32
    %c0_i32_1 = arith.constant 0 : i32
    return %c0_i32, %c0_i32_0 : i32, i32
  }
  func.func @transform_4(%arg0: i32, %arg1: i32) -> (i32, i32) {
    %c0_i32 = arith.constant 0 : i32
    %c0_i32_0 = arith.constant 0 : i32
    %c0_i32_1 = arith.constant 0 : i32
    return %c0_i32, %c0_i32_0 : i32, i32
  }
  func.func @transform_5(%arg0: i32, %arg1: i32) -> (i32, i32) {
    %c0_i32 = arith.constant 0 : i32
    %c0_i32_0 = arith.constant 0 : i32
    %c0_i32_1 = arith.constant 0 : i32
    return %c0_i32, %c0_i32_0 : i32, i32
  }
  func.func @transform_6(%arg0: i32, %arg1: i32) -> (i32, i32) {
    %c0_i32 = arith.constant 0 : i32
    %c0_i32_0 = arith.constant 0 : i32
    %c0_i32_1 = arith.constant 0 : i32
    return %c0_i32, %c0_i32_0 : i32, i32
  }
  func.func @transform_7(%arg0: i32, %arg1: i32) -> (i32, i32) {
    %c0_i32 = arith.constant 0 : i32
    %c0_i32_0 = arith.constant 0 : i32
    %c0_i32_1 = arith.constant 0 : i32
    return %c0_i32, %c0_i32_0 : i32, i32
  }
  func.func @transform_8(%arg0: i32, %arg1: i32) -> (i32, i32) {
    %c0_i32 = arith.constant 0 : i32
    %c0_i32_0 = arith.constant 0 : i32
    %c0_i32_1 = arith.constant 0 : i32
    return %c0_i32, %c0_i32_0 : i32, i32
  }
  func.func @transform_9(%arg0: i32, %arg1: i32) -> (i32, i32) {
    %c0_i32 = arith.constant 0 : i32
    %c0_i32_0 = arith.constant 0 : i32
    %c0_i32_1 = arith.constant 0 : i32
    return %c0_i32, %c0_i32_0 : i32, i32
  }
  func.func @transform_10(%arg0: i32, %arg1: i32) -> (i32, i32) {
    %c0_i32 = arith.constant 0 : i32
    %c0_i32_0 = arith.constant 0 : i32
    %c0_i32_1 = arith.constant 0 : i32
    return %c0_i32, %c0_i32_0 : i32, i32
  }
  func.func @transform_11(%arg0: i32, %arg1: i32) -> (i32, i32, i32) {
    %c0_i32 = arith.constant 0 : i32
    %c0_i32_0 = arith.constant 0 : i32
    %c0_i32_1 = arith.constant 0 : i32
    return %arg0, %c0_i32, %c0_i32_0 : i32, i32, i32
  }
}

module attributes {stable_mosaic.version = 11 : i64} {
  func.func @_gate_cnv_kernel(%arg0: i32, %arg1: i32, %arg2: memref<1x16x256xbf16, #tpu.memory_space<vmem>>, %arg3: memref<1x16x1xf32, #tpu.memory_space<vmem>>, %arg4: memref<16x16xbf16, #tpu.memory_space<vmem>>, %arg5: memref<16x1xf32, #tpu.memory_space<vmem>>, %arg6: memref<1x16x256xbf16, #tpu.memory_space<vmem>>) attributes {dimension_semantics = [#tpu.dimension_semantics<parallel>, #tpu.dimension_semantics<parallel>], iteration_bounds = array<i64: 2, 1>, scalar_prefetch = 0 : i64, scratch_operands = 0 : i64, tpu.core_type = #tpu.core_type<tc>, window_params = [{transform_indices = @transform_0, window_bounds = array<i64: 1, 16, 256>}, {transform_indices = @transform_1, window_bounds = array<i64: 1, 16, 1>}, {pipeline_mode = #tpu.pipeline_mode<synchronous>, transform_indices = @transform_2, window_bounds = array<i64: 16, 16>}, {pipeline_mode = #tpu.pipeline_mode<synchronous>, transform_indices = @transform_3, window_bounds = array<i64: 16, 1>}, {transform_indices = @transform_4, window_bounds = array<i64: 1, 16, 256>}]} {
    %c0 = arith.constant 0 : index
    %c0_0 = arith.constant 0 : index
    %c0_1 = arith.constant 0 : index
    %0 = vector.load %arg2[%c0, %c0_0, %c0_1] : memref<1x16x256xbf16, #tpu.memory_space<vmem>>, vector<1x16x256xbf16>
    %1 = vector.shape_cast %0 : vector<1x16x256xbf16> to vector<16x256xbf16>
    %2 = arith.extf %1 : vector<16x256xbf16> to vector<16x256xf32>
    %c0_2 = arith.constant 0 : index
    %c0_3 = arith.constant 0 : index
    %c0_4 = arith.constant 0 : index
    %3 = vector.load %arg3[%c0_2, %c0_3, %c0_4] : memref<1x16x1xf32, #tpu.memory_space<vmem>>, vector<1x16x1xf32>
    %4 = vector.shape_cast %3 : vector<1x16x1xf32> to vector<16x1xf32>
    %cst = arith.constant 1.000000e+00 : f32
    %5 = vector.broadcast %cst : f32 to vector<16x1xf32>
    %6 = arith.addf %5, %4 : vector<16x1xf32>
    %7 = vector.broadcast %6 : vector<16x1xf32> to vector<16x256xf32>
    %8 = arith.mulf %2, %7 : vector<16x256xf32>
    %cst_5 = arith.constant 0.000000e+00 : f32
    %9 = vector.broadcast %cst_5 : f32 to vector<16x256xf32>
    %10 = arith.maximumf %8, %9 : vector<16x256xf32>
    %c0_6 = arith.constant 0 : index
    %c0_7 = arith.constant 0 : index
    %11 = vector.load %arg4[%c0_6, %c0_7] : memref<16x16xbf16, #tpu.memory_space<vmem>>, vector<16x16xbf16>
    %12 = arith.truncf %10 : vector<16x256xf32> to vector<16x256xbf16>
    %cst_8 = arith.constant dense<0.000000e+00> : vector<16x256xf32>
    %13 = tpu.matmul %11, %12, %cst_8 {dimension_numbers = #tpu.dot_dimension_numbers<[1], [0], [0], [1], [0, 0, 1, 1], [], []>} : vector<16x16xbf16>, vector<16x256xbf16>, vector<16x256xf32> -> vector<16x256xf32>
    %c0_9 = arith.constant 0 : index
    %c0_10 = arith.constant 0 : index
    %14 = vector.load %arg5[%c0_9, %c0_10] : memref<16x1xf32, #tpu.memory_space<vmem>>, vector<16x1xf32>
    %15 = vector.broadcast %14 : vector<16x1xf32> to vector<16x256xf32>
    %16 = arith.addf %13, %15 : vector<16x256xf32>
    %17 = arith.truncf %16 : vector<16x256xf32> to vector<16x256xbf16>
    %c0_11 = arith.constant 0 : index
    %c0_12 = arith.constant 0 : index
    %c0_13 = arith.constant 0 : index
    %18 = vector.load %arg6[%c0_11, %c0_12, %c0_13] : memref<1x16x256xbf16, #tpu.memory_space<vmem>>, vector<1x16x256xbf16>
    %19 = vector.shape_cast %18 : vector<1x16x256xbf16> to vector<16x256xbf16>
    %20 = vector.shape_cast %17 : vector<16x256xbf16> to vector<1x16x256xbf16>
    tpu.vector_store %arg6[%c0_11, %c0_12, %c0_13], %20 {strides = array<i32>} : memref<1x16x256xbf16, #tpu.memory_space<vmem>>, vector<1x16x256xbf16>,
    return
  }
  func.func @transform_0(%arg0: i32, %arg1: i32) -> (i32, i32, i32) {
    %c0_i32 = arith.constant 0 : i32
    %c0_i32_0 = arith.constant 0 : i32
    return %arg0, %c0_i32, %arg1 : i32, i32, i32
  }
  func.func @transform_1(%arg0: i32, %arg1: i32) -> (i32, i32, i32) {
    %c0_i32 = arith.constant 0 : i32
    %c0_i32_0 = arith.constant 0 : i32
    %c0_i32_1 = arith.constant 0 : i32
    return %arg0, %c0_i32, %c0_i32_0 : i32, i32, i32
  }
  func.func @transform_2(%arg0: i32, %arg1: i32) -> (i32, i32) {
    %c0_i32 = arith.constant 0 : i32
    %c0_i32_0 = arith.constant 0 : i32
    %c0_i32_1 = arith.constant 0 : i32
    return %c0_i32, %c0_i32_0 : i32, i32
  }
  func.func @transform_3(%arg0: i32, %arg1: i32) -> (i32, i32) {
    %c0_i32 = arith.constant 0 : i32
    %c0_i32_0 = arith.constant 0 : i32
    %c0_i32_1 = arith.constant 0 : i32
    return %c0_i32, %c0_i32_0 : i32, i32
  }
  func.func @transform_4(%arg0: i32, %arg1: i32) -> (i32, i32, i32) {
    %c0_i32 = arith.constant 0 : i32
    %c0_i32_0 = arith.constant 0 : i32
    return %arg0, %c0_i32, %arg1 : i32, i32, i32
  }
}

</mosaic_0001>

<llo_original>
// kernel: lvc_block_forward.5
$region0: #{lvc_block_forward.5}
  #allocation0 [shape = 'u32[]', space=smem, size = 0x4, offset = 0x4, fixed_abs, tag = 'smem constant byte address 0x4 - core index']
  #allocation1 [shape = 'u32[144,128]{1,0:T(1,128)}', space=vmem, size = 0x12000, scoped, tag = 'internal scratch']
  %s0 = inlined_call_operand.vmem [shape: bf16[2,16,256], index: 0, kind: input, shape index: {}]
  %s1 = inlined_call_operand.vmem [shape: f32[2,16,1], index: 1, kind: input, shape index: {}]
  %s2 = inlined_call_operand.vmem [shape: bf16[16,16], index: 2, kind: input, shape index: {}]
  %s3 = inlined_call_operand.vmem [shape: f32[16,1], index: 3, kind: input, shape index: {}]
  %s4 = inlined_call_operand.vmem [shape: bf16[2,16,256], index: 4, kind: output, shape index: {}]
  %s5 = sld [smem:[#allocation0]]
  $region49: #{lvc_block_forward.5} parent=0
    _
  %s7 = ssub.s32 1, %s5
  %s8 = scalar_select 0, %s7, %s5
  loop: start=0, step=1, limit=4
  $region2: #{lvc_block_forward.5} parent=0 // loop_pre_header
    _
  $region3: #{lvc_block_forward.5} parent=0 // loop_header
    %s10 = sphi 0, %s14
    %p11 = scmp.ge.s32.totalorder %s10, 4
    %s17 = sphi 0, %s29
    %s18 = sphi 0, %s25
    %s19 = sphi 0, %s17
    %s20 = sphi 0, %s18
    %s21 = sphi 0, %s19
    %s22 = sphi 0, %s20
    %s34 = sphi 0, %s36
    %s37 = sphi 0, %s34
    %s38 = sphi 0, %s37
    %s54 = sphi 0, %s38
    %s60 = sphi 0, %s62
    %s63 = sphi 0, %s60
    %s64 = sphi 0, %s63
    %s80 = sphi 0, %s64
    %s84 = sphi 0, %s84
    %s86 = sphi 0, %s84
    %s87 = sphi 0, %s86
    %s101 = sphi 0, %s87
    %s105 = sphi 0, %s105
    %s107 = sphi 0, %s105
    %s108 = sphi 0, %s107
    %s122 = sphi 0, %s108
    %s130 = sphi 0, %s132
    %s133 = sphi 0, %s130
    %s134 = sphi 0, %s133
    %s150 = sphi 0, %s134
  $region4: #{lvc_block_forward.5} parent=0 // loop_header_branch
    %13 = sbr.rel (%p11) target = $region8
  $region5: #{lvc_block_forward.5} parent=0 // loop_body
    %s15 = ssub.s32 %s10, 1
    %s16 = ssub.s32 %s10, 2
    %s23 = sadd.s32 1, %s18
    %p24 = scmp.ge.s32.totalorder %s23, 1
    %s25 = scalar_select %p24, 0, %s23
    %s26 = sadd.s32 1, %s17
    %s27 = scalar_select %p24, %s26, %s17
    %p28 = scmp.ge.s32.totalorder %s27, 2
    %s29 = scalar_select %p28, 0, %s27
    %s30 = ssub.s32 %s17, %s29
    %s31 = ssub.s32 %s18, %s25
    %s32 = sor.u32 %s30, %s31
    %p33 = scmp.eq.s32.totalorder %s32, 0
    %s35 = sadd.s32 %s34, 1
    %s36 = scalar_select %p33, %s34, %s35
    %p39 = pneg %p33
    %p40 = scmp.eq.s32.totalorder %s10, 1
    %p41 = por %p39, %p40
    %p42 = scmp.ne.s32.totalorder %s34, %s37
    %p43 = scmp.eq.s32.totalorder %s10, 0
    %p44 = por %p42, %p43
    %p45 = scmp.ne.s32.totalorder %s34, %s37
    %p46 = scmp.eq.s32.totalorder %s15, 1
    %p47 = por %p45, %p46
    %p48 = scmp.ne.s32.totalorder %s37, %s38
    %p49 = scmp.eq.s32.totalorder %s15, 0
    %p50 = por %p48, %p49
    %p51 = scmp.ne.s32.totalorder %s37, %s38
    %p52 = scmp.eq.s32.totalorder %s16, 1
    %p53 = por %p51, %p52
    %p55 = scmp.ne.s32.totalorder %s38, %s54
    %p56 = scmp.eq.s32.totalorder %s16, 0
    %p57 = por %p55, %p56
    %s58 = ssub.s32 %s17, %s29
    %p59 = scmp.eq.s32.totalorder %s58, 0
    %s61 = sadd.s32 %s60, 1
    %s62 = scalar_select %p59, %s60, %s61
    %p65 = pneg %p59
    %p66 = scmp.eq.s32.totalorder %s10, 1
    %p67 = por %p65, %p66
    %p68 = scmp.ne.s32.totalorder %s60, %s63
    %p69 = scmp.eq.s32.totalorder %s10, 0
    %p70 = por %p68, %p69
    %p71 = scmp.ne.s32.totalorder %s60, %s63
    %p72 = scmp.eq.s32.totalorder %s15, 1
    %p73 = por %p71, %p72
    %p74 = scmp.ne.s32.totalorder %s63, %s64
    %p75 = scmp.eq.s32.totalorder %s15, 0
    %p76 = por %p74, %p75
    %p77 = scmp.ne.s32.totalorder %s63, %s64
    %p78 = scmp.eq.s32.totalorder %s16, 1
    %p79 = por %p77, %p78
    %p81 = scmp.ne.s32.totalorder %s64, %s80
    %p82 = scmp.eq.s32.totalorder %s16, 0
    %p83 = por %p81, %p82
    %s85 = sadd.s32 %s84, 1
    %p88 = scmp.eq.s32.totalorder %s10, 1
    %p89 = scmp.ne.s32.totalorder %s84, %s86
    %p90 = scmp.eq.s32.totalorder %s10, 0
    %p91 = por %p89, %p90
    %p92 = scmp.ne.s32.totalorder %s84, %s86
    %p93 = scmp.eq.s32.totalorder %s15, 1
    %p94 = por %p92, %p93
    %p95 = scmp.ne.s32.totalorder %s86, %s87
    %p96 = scmp.eq.s32.totalorder %s15, 0
    %p97 = por %p95, %p96
    %p98 = scmp.ne.s32.totalorder %s86, %s87
    %p99 = scmp.eq.s32.totalorder %s16, 1
    %p100 = por %p98, %p99
    %p102 = scmp.ne.s32.totalorder %s87, %s101
    %p103 = scmp.eq.s32.totalorder %s16, 0
    %p104 = por %p102, %p103
    %s106 = sadd.s32 %s105, 1
    %p109 = scmp.eq.s32.totalorder %s10, 1
    %p110 = scmp.ne.s32.totalorder %s105, %s107
    %p111 = scmp.eq.s32.totalorder %s10, 0
    %p112 = por %p110, %p111
    %p113 = scmp.ne.s32.totalorder %s105, %s107
    %p114 = scmp.eq.s32.totalorder %s15, 1
    %p115 = por %p113, %p114
    %p116 = scmp.ne.s32.totalorder %s107, %s108
    %p117 = scmp.eq.s32.totalorder %s15, 0
    %p118 = por %p116, %p117
    %p119 = scmp.ne.s32.totalorder %s107, %s108
    %p120 = scmp.eq.s32.totalorder %s16, 1
    %p121 = por %p119, %p120
    %p123 = scmp.ne.s32.totalorder %s108, %s122
    %p124 = scmp.eq.s32.totalorder %s16, 0
    %p125 = por %p123, %p124
    %s126 = ssub.s32 %s17, %s29
    %s127 = ssub.s32 %s18, %s25
    %s128 = sor.u32 %s126, %s127
    %p129 = scmp.eq.s32.totalorder %s128, 0
    %s131 = sadd.s32 %s130, 1
    %s132 = scalar_select %p129, %s130, %s131
    %p135 = pneg %p129
    %p136 = scmp.eq.s32.totalorder %s10, 1
    %p137 = por %p135, %p136
    %p138 = scmp.ne.s32.totalorder %s130, %s133
    %p139 = scmp.eq.s32.totalorder %s10, 0
    %p140 = por %p138, %p139
    %p141 = scmp.ne.s32.totalorder %s130, %s133
    %p142 = scmp.eq.s32.totalorder %s15, 1
    %p143 = por %p141, %p142
    %p144 = scmp.ne.s32.totalorder %s133, %s134
    %p145 = scmp.eq.s32.totalorder %s15, 0
    %p146 = por %p144, %p145
    %p147 = scmp.ne.s32.totalorder %s133, %s134
    %p148 = scmp.eq.s32.totalorder %s16, 1
    %p149 = por %p147, %p148
    %p151 = scmp.ne.s32.totalorder %s134, %s150
    %p152 = scmp.eq.s32.totalorder %s16, 0
    %p153 = por %p151, %p152
    %p154 = scmp.le.s32.totalorder 1, %s10
    %p155 = scmp.lt.s32.totalorder %s10, 3
    %p156 = pnand %p154, %p155
    %p157 = pneg %p156
    // Predicated region
    $region9: #{lvc_block_forward.5} parent=5 // pred_check
      _
    $region10: #{lvc_block_forward.5} parent=5 // pred_check_branch
      %159 = sbr.rel (%p156) target = $region12
    $region11: #{lvc_block_forward.5} parent=5 // pred_region
      %s160 = ssub.s32 %s10, 1
      // Predicated region
      $region13: #{lvc_block_forward.5} parent=11 // pred_check
        %p161 = pneg %p97
      $region14: #{lvc_block_forward.5} parent=11 // pred_check_branch
        %163 = sbr.rel (%p161) target = $region16
      $region15: #{lvc_block_forward.5} parent=11 // pred_region
        _
      $region16: #{lvc_block_forward.5} parent=11 // pred_fallthru
        _
      // Predicated region
      $region17: #{lvc_block_forward.5} parent=11 // pred_check
        %p164 = pneg %p118
      $region18: #{lvc_block_forward.5} parent=11 // pred_check_branch
        %166 = sbr.rel (%p164) target = $region20
      $region19: #{lvc_block_forward.5} parent=11 // pred_region
        _
      $region20: #{lvc_block_forward.5} parent=11 // pred_fallthru
        _
    $region12: #{lvc_block_forward.5} parent=5 // pred_fallthru
      _
    %p167 = scmp.lt.s32.totalorder %s10, 2
    // Predicated region
    $region21: #{lvc_block_forward.5} parent=5 // pred_check
      %p168 = pneg %p167
    $region22: #{lvc_block_forward.5} parent=5 // pred_check_branch
      %170 = sbr.rel (%p168) target = $region24
    $region23: #{lvc_block_forward.5} parent=5 // pred_region
      // Predicated region
      $region25: #{lvc_block_forward.5} parent=23 // pred_check
        %p171 = pneg %p44
      $region26: #{lvc_block_forward.5} parent=23 // pred_check_branch
        %173 = sbr.rel (%p171) target = $region28
      $region27: #{lvc_block_forward.5} parent=23 // pred_region
        %s174 = smul.u32 2, %s18
        %p175 = scmp.lt.s32.totalorder %s17, 1
        %s176 = scalar_select %p175, %s17, 1
        %p177 = scmp.lt.s32.totalorder %s174, 1
        %s178 = scalar_select %p177, %s174, 1
        %s179 = smul.addr %s176, 4
        %s180 = sadd.s32 %s178, %s179
        %s181 = smul.addr %s180, 4
        %s182 = scalar_lea.vmem %s0, %s181
        %s183 = smul.u32 2, %s18
      $region28: #{lvc_block_forward.5} parent=23 // pred_fallthru
        _
      // Predicated region
      $region29: #{lvc_block_forward.5} parent=23 // pred_check
        %p184 = pneg %p70
      $region30: #{lvc_block_forward.5} parent=23 // pred_check_branch
        %186 = sbr.rel (%p184) target = $region32
      $region31: #{lvc_block_forward.5} parent=23 // pred_region
        %p187 = scmp.lt.s32.totalorder %s17, 1
        %s188 = scalar_select %p187, %s17, 1
        %s189 = smul.addr %s188, 2
        %s190 = smul.addr %s189, 8
        %s191 = scalar_lea.vmem %s1, %s190
      $region32: #{lvc_block_forward.5} parent=23 // pred_fallthru
        _
    $region24: #{lvc_block_forward.5} parent=5 // pred_fallthru
      _
    %p192 = scmp.le.s32.totalorder 1, %s10
    %p193 = scmp.lt.s32.totalorder %s10, 3
    %p194 = pnand %p192, %p193
    %p195 = pneg %p194
    // Predicated region
    $region33: #{lvc_block_forward.5} parent=5 // pred_check
      _
    $region34: #{lvc_block_forward.5} parent=5 // pred_check_branch
      %197 = sbr.rel (%p194) target = $region36
    $region35: #{lvc_block_forward.5} parent=5 // pred_region
      %s198 = ssub.s32 %s10, 1
      %s199 = smul.u32 2, %s20
      %p200 = scmp.lt.s32.totalorder %s19, 1
      %s201 = scalar_select %p200, %s19, 1
      %p202 = scmp.lt.s32.totalorder %s199, 1
      %s203 = scalar_select %p202, %s199, 1
      %s204 = smul.addr %s201, 4
      %s205 = sadd.s32 %s203, %s204
      %s206 = smul.addr %s205, 4
      %s207 = scalar_lea.vmem %s0, %s206
      %p208 = pneg %p50
      %p209 = pneg %p47
      %p210 = scmp.lt.s32.totalorder %s19, 1
      %s211 = scalar_select %p210, %s19, 1
      %s212 = smul.addr %s211, 2
      %s213 = smul.addr %s212, 8
      %s214 = scalar_lea.vmem %s1, %s213
      %p215 = pneg %p76
      %p216 = pneg %p73
      %p217 = pneg %p97
      %p218 = pneg %p94
      %p219 = pneg %p118
      %p220 = pneg %p115
      %p221 = pneg %p146
      %p222 = pneg %p143
      %s223 = smul.u32 2, %s20
      %p224 = scmp.lt.s32.totalorder %s19, 1
      %s225 = scalar_select %p224, %s19, 1
      %p226 = scmp.lt.s32.totalorder %s223, 1
      %s227 = scalar_select %p226, %s223, 1
      %s228 = smul.addr %s225, 4
      %s229 = sadd.s32 %s227, %s228
      %s230 = smul.addr %s229, 4
      %s231 = scalar_lea.vmem %s4, %s230
      %s232 = smul.u32 2, %s20
      %p233 = scmp.lt.s32.totalorder %s19, 1
      %s234 = scalar_select %p233, %s19, 1
      %p235 = scmp.lt.s32.totalorder %s232, 1
      %s236 = scalar_select %p235, %s232, 1
      %s237 = smul.addr %s234, 4
      %s238 = sadd.s32 %s236, %s237
      %s239 = smul.addr %s238, 4
      %s240 = scalar_lea.vmem %s0, %s239
      %s241 = smul.u32 2, %s20
      %p242 = scmp.lt.s32.totalorder %s19, 1
      %s243 = scalar_select %p242, %s19, 1
      %s244 = smul.addr %s243, 2
      %s245 = smul.addr %s244, 8
      %s246 = scalar_lea.vmem %s1, %s245
      %s247 = smul.u32 2, %s20
      %p248 = scmp.lt.s32.totalorder %s19, 1
      %s249 = scalar_select %p248, %s19, 1
      %p250 = scmp.lt.s32.totalorder %s247, 1
      %s251 = scalar_select %p250, %s247, 1
      %s252 = smul.addr %s249, 4
      %s253 = sadd.s32 %s251, %s252
      %s254 = smul.addr %s253, 4
      %s255 = scalar_lea.vmem %s4, %s254
      %s256 = smul.u32 2, %s20
      %v258 = vld [vmem:[%s240] sm:$0xff]
      %v259 = vld [vmem:[%s240 + $0x8] sm:$0xff]
      %v260 = vunpack.c.l.bf16 %v258
      %v261 = vunpack.c.h.bf16 %v258
      %v262 = vunpack.c.l.bf16 %v259
      %v263 = vunpack.c.h.bf16 %v259
      %v264 = vld [vmem:[%s246] sm:$0xff]
      %v265 = vld [vmem:[%s246 + $0x8] sm:$0xff]
      %v266 = vadd.f32 %v264, 1.0
      %v267 = vadd.f32 %v265, 1.0
      %269 = vset.pattern.permute.xlu0 0
      %270 = vperm.xlu0 %269, %v266
      %v271 = vpop.permute.xlu0 %270
      %274 = vset.pattern.permute.xlu0 0
      %275 = vperm.xlu0 %274, %v267
      %v276 = vpop.permute.xlu0 %275
      %v278 = vmul.f32 %v260, %v271
      %v279 = vmul.f32 %v261, %v271
      %v280 = vmul.f32 %v262, %v276
      %v281 = vmul.f32 %v263, %v276
      %v282 = vmax.f32 %v278, 0.0
      %v283 = vmax.f32 %v279, 0.0
      %v284 = vmax.f32 %v280, 0.0
      %v285 = vmax.f32 %v281, 0.0
      %v286 = vld [vmem:[%s2] sm:$0xf]
      %v287 = vld [vmem:[%s2 + $0x4] sm:$0xf]
      %v288 = vpack.c.bf16 %v284, %v282
      %v289 = vpack.c.bf16 %v285, %v283
      %v290 = vld [vmem:[%s3] sm:$0xff]
      %v291 = vld [vmem:[%s3 + $0x8] sm:$0xff]
      %293 = vset.pattern.permute.xlu0 0
      %294 = vperm.xlu0 %293, %v290
      %v295 = vpop.permute.xlu0 %294
      %298 = vset.pattern.permute.xlu0 0
      %299 = vperm.xlu0 %298, %v291
      %v300 = vpop.permute.xlu0 %299
      %v304 = vunpack.c.l.b16 %v286
      %v305 = vunpack.c.l.b16 %v287
      %v306 = vpack.c.b16 %v305, %v304
      %vm307 = vcmask 130048
      %v309 = vsel %vm307, %v306, 0
      %311 = vmatprep.subr.bf16.mxu0 0
      %312 = vmatpush1.bf16.msra.mxu0 0
      %313 = vmatprep.subr.bf16.mxu0 0
      %314 = vmatpush1.bf16.msra.mxu0 0
      %315 = vmatprep.subr.bf16.mxu0 0
      %316 = vmatpush1.bf16.msra.mxu0 0
      %317 = vmatprep.subr.bf16.mxu0 0
      %318 = vmatpush1.bf16.msra.mxu0 0
      %319 = vmatprep.subr.bf16.mxu0 0
      %320 = vmatpush1.bf16.msra.mxu0 0
      %321 = vmatprep.subr.bf16.mxu0 0
      %322 = vmatpush1.bf16.msra.mxu0 0
      %323 = vmatprep.subr.bf16.mxu0 0
      %324 = vmatpush1.bf16.msra.mxu0 0
      %325 = vmatprep.subr.bf16.mxu0 %v289
      %326 = vmatpush1.bf16.msra.mxu0 %v288
      %327 = vmatprep.subr.bf16.mxu0 0
      %328 = vmatpush2.bf16.msra.mxu0 0
      %329 = vmatprep.subr.bf16.mxu0 0
      %330 = vmatpush2.bf16.msra.mxu0 0
      %331 = vmatprep.subr.bf16.mxu0 0
      %332 = vmatpush2.bf16.msra.mxu0 0
      %333 = vmatprep.subr.bf16.mxu0 0
      %334 = vmatpush2.bf16.msra.mxu0 0
      %335 = vmatprep.subr.bf16.mxu0 0
      %336 = vmatpush2.bf16.msra.mxu0 0
      %337 = vmatprep.subr.bf16.mxu0 0
      %338 = vmatpush2.bf16.msra.mxu0 0
      %339 = vmatprep.subr.bf16.mxu0 0
      %340 = vmatpush2.bf16.msra.mxu0 0
      %341 = vmatprep.subr.bf16.mxu0 0
      %342 = vmatpush2.bf16.msra.mxu0 0
      %343 = vmatprep.mubr.bf16.mxu0 0
      %344 = vmatmul.mubr.bf16.gmra.mxu0 %v309
      %v345 = vpop.f32.mrf.mxu0
      %v346 = vadd.f32 %v295, %v345
      %v347 = vpop.f32.mrf.mxu0
      %v348 = vadd.f32 %v295, %v347
      %v349 = vpop.f32.mrf.mxu0
      %v350 = vadd.f32 %v300, %v349
      %v351 = vpop.f32.mrf.mxu0
      %v352 = vadd.f32 %v300, %v351
      %353 = vdwg.mxu0
      %v354 = vpack.c.bf16 %v350, %v346
      %v355 = vpack.c.bf16 %v352, %v348
      %v358 = vunpack.c.l.b16 %v354
      %v359 = vunpack.c.l.b16 %v355
      %v360 = vunpack.c.h.b16 %v354
      %v361 = vunpack.c.h.b16 %v355
      %v362 = vpack.c.b16 %v359, %v358
      %v363 = vpack.c.b16 %v361, %v360
      %366 = vst [vmem:[%s255] sm:$0xff] %v362
      %367 = vst [vmem:[%s255 + $0x8] sm:$0xff] %v363
      %s368 = smul.u32 2, %s20
      %p369 = scmp.lt.s32.totalorder %s19, 1
      %s370 = scalar_select %p369, %s19, 1
      %p371 = scmp.lt.s32.totalorder %s368, 1
      %s372 = scalar_select %p371, %s368, 1
      %s373 = smul.addr %s370, 4
      %s374 = sadd.s32 %s372, %s373
      %s375 = smul.addr %s374, 4
      %s376 = scalar_lea.vmem %s4, %s375
      // Predicated region
      $region37: #{lvc_block_forward.5} parent=35 // pred_check
        %p377 = pneg %p143
      $region38: #{lvc_block_forward.5} parent=35 // pred_check_branch
        %379 = sbr.rel (%p377) target = $region40
      $region39: #{lvc_block_forward.5} parent=35 // pred_region
        %s380 = smul.u32 2, %s20
      $region40: #{lvc_block_forward.5} parent=35 // pred_fallthru
        _
    $region36: #{lvc_block_forward.5} parent=5 // pred_fallthru
      _
    %p381 = scmp.le.s32.totalorder 2, %s10
    // Predicated region
    $region41: #{lvc_block_forward.5} parent=5 // pred_check
      %p382 = pneg %p381
    $region42: #{lvc_block_forward.5} parent=5 // pred_check_branch
      %384 = sbr.rel (%p382) target = $region44
    $region43: #{lvc_block_forward.5} parent=5 // pred_region
      %s385 = ssub.s32 %s10, 2
      // Predicated region
      $region45: #{lvc_block_forward.5} parent=43 // pred_check
        %p386 = pneg %p149
      $region46: #{lvc_block_forward.5} parent=43 // pred_check_branch
        %388 = sbr.rel (%p386) target = $region48
      $region47: #{lvc_block_forward.5} parent=43 // pred_region
        %s389 = smul.u32 2, %s22
        %p390 = scmp.lt.s32.totalorder %s21, 1
        %s391 = scalar_select %p390, %s21, 1
        %p392 = scmp.lt.s32.totalorder %s389, 1
        %s393 = scalar_select %p392, %s389, 1
        %s394 = smul.addr %s391, 4
        %s395 = sadd.s32 %s393, %s394
        %s396 = smul.addr %s395, 4
        %s397 = scalar_lea.vmem %s4, %s396
      $region48: #{lvc_block_forward.5} parent=43 // pred_fallthru
        _
    $region44: #{lvc_block_forward.5} parent=5 // pred_fallthru
      _
  $region6: #{lvc_block_forward.5} parent=0 // loop_footer
    %s14 = sadd.s32 1, %s10
  $region7: #{lvc_block_forward.5} parent=0 // loop_footer_branch
    %9 = sbr.rel target = $region3
  $region8: #{lvc_block_forward.5} parent=0 // loop_exit
    _

// kernel: lvc_block_forward.3
$region0: #{lvc_block_forward.3}
  #allocation0 [shape = 'u32[]', space=smem, size = 0x4, offset = 0x4, fixed_abs, tag = 'smem constant byte address 0x4 - core index']
  #allocation1 [shape = 'u32[144,128]{1,0:T(1,128)}', space=vmem, size = 0x12000, scoped, tag = 'internal scratch']
  %s0 = inlined_call_operand.vmem [shape: f32[2,16,256], index: 0, kind: input, shape index: {}]
  %s1 = inlined_call_operand.vmem [shape: bf16[4,16], index: 1, kind: input, shape index: {}]
  %s2 = inlined_call_operand.vmem [shape: f32[4,1], index: 2, kind: input, shape index: {}]
  %s3 = inlined_call_operand.vmem [shape: bf16[4,36], index: 3, kind: input, shape index: {}]
  %s4 = inlined_call_operand.vmem [shape: f32[4,1], index: 4, kind: input, shape index: {}]
  %s5 = inlined_call_operand.vmem [shape: bf16[16,4], index: 5, kind: input, shape index: {}]
  %s6 = inlined_call_operand.vmem [shape: f32[16,1], index: 6, kind: input, shape index: {}]
  %s7 = inlined_call_operand.vmem [shape: bf16[16,16], index: 7, kind: input, shape index: {}]
  %s8 = inlined_call_operand.vmem [shape: bf16[2,16,256], index: 8, kind: output, shape index: {}]
  %s9 = sld [smem:[#allocation0]]
  $region65: #{lvc_block_forward.3} parent=0
    _
  %s11 = ssub.s32 1, %s9
  %s12 = scalar_select 0, %s11, %s9
  loop: start=0, step=1, limit=4
  $region2: #{lvc_block_forward.3} parent=0 // loop_pre_header
    _
  $region3: #{lvc_block_forward.3} parent=0 // loop_header
    %s14 = sphi 0, %s18
    %p15 = scmp.ge.s32.totalorder %s14, 4
    %s24 = sphi 0, %s26
    %s27 = sphi 0, %s24
    %s28 = sphi 0, %s27
    %s44 = sphi 0, %s28
    %s48 = sphi 0, %s48
    %s50 = sphi 0, %s48
    %s51 = sphi 0, %s50
    %s65 = sphi 0, %s51
    %s69 = sphi 0, %s69
    %s71 = sphi 0, %s69
    %s72 = sphi 0, %s71
    %s86 = sphi 0, %s72
    %s90 = sphi 0, %s90
    %s92 = sphi 0, %s90
    %s93 = sphi 0, %s92
    %s107 = sphi 0, %s93
    %s111 = sphi 0, %s111
    %s113 = sphi 0, %s111
    %s114 = sphi 0, %s113
    %s128 = sphi 0, %s114
    %s132 = sphi 0, %s132
    %s134 = sphi 0, %s132
    %s135 = sphi 0, %s134
    %s149 = sphi 0, %s135
    %s153 = sphi 0, %s153
    %s155 = sphi 0, %s153
    %s156 = sphi 0, %s155
    %s170 = sphi 0, %s156
    %s174 = sphi 0, %s174
    %s176 = sphi 0, %s174
    %s177 = sphi 0, %s176
    %s191 = sphi 0, %s177
    %s197 = sphi 0, %s199
    %s200 = sphi 0, %s197
    %s201 = sphi 0, %s200
    %s217 = sphi 0, %s201
  $region4: #{lvc_block_forward.3} parent=0 // loop_header_branch
    %17 = sbr.rel (%p15) target = $region8
  $region5: #{lvc_block_forward.3} parent=0 // loop_body
    %s19 = ssub.s32 %s14, 1
    %s20 = ssub.s32 %s14, 2
    %s21 = sadd.s32 %s14, 1
    %s22 = ssub.s32 %s14, %s21
    %p23 = scmp.eq.s32.totalorder %s22, 0
    %s25 = sadd.s32 %s24, 1
    %s26 = scalar_select %p23, %s24, %s25
    %p29 = pneg %p23
    %p30 = scmp.eq.s32.totalorder %s14, 1
    %p31 = por %p29, %p30
    %p32 = scmp.ne.s32.totalorder %s24, %s27
    %p33 = scmp.eq.s32.totalorder %s14, 0
    %p34 = por %p32, %p33
    %p35 = scmp.ne.s32.totalorder %s24, %s27
    %p36 = scmp.eq.s32.totalorder %s19, 1
    %p37 = por %p35, %p36
    %p38 = scmp.ne.s32.totalorder %s27, %s28
    %p39 = scmp.eq.s32.totalorder %s19, 0
    %p40 = por %p38, %p39
    %p41 = scmp.ne.s32.totalorder %s27, %s28
    %p42 = scmp.eq.s32.totalorder %s20, 1
    %p43 = por %p41, %p42
    %p45 = scmp.ne.s32.totalorder %s28, %s44
    %p46 = scmp.eq.s32.totalorder %s20, 0
    %p47 = por %p45, %p46
    %s49 = sadd.s32 %s48, 1
    %p52 = scmp.eq.s32.totalorder %s14, 1
    %p53 = scmp.ne.s32.totalorder %s48, %s50
    %p54 = scmp.eq.s32.totalorder %s14, 0
    %p55 = por %p53, %p54
    %p56 = scmp.ne.s32.totalorder %s48, %s50
    %p57 = scmp.eq.s32.totalorder %s19, 1
    %p58 = por %p56, %p57
    %p59 = scmp.ne.s32.totalorder %s50, %s51
    %p60 = scmp.eq.s32.totalorder %s19, 0
    %p61 = por %p59, %p60
    %p62 = scmp.ne.s32.totalorder %s50, %s51
    %p63 = scmp.eq.s32.totalorder %s20, 1
    %p64 = por %p62, %p63
    %p66 = scmp.ne.s32.totalorder %s51, %s65
    %p67 = scmp.eq.s32.totalorder %s20, 0
    %p68 = por %p66, %p67
    %s70 = sadd.s32 %s69, 1
    %p73 = scmp.eq.s32.totalorder %s14, 1
    %p74 = scmp.ne.s32.totalorder %s69, %s71
    %p75 = scmp.eq.s32.totalorder %s14, 0
    %p76 = por %p74, %p75
    %p77 = scmp.ne.s32.totalorder %s69, %s71
    %p78 = scmp.eq.s32.totalorder %s19, 1
    %p79 = por %p77, %p78
    %p80 = scmp.ne.s32.totalorder %s71, %s72
    %p81 = scmp.eq.s32.totalorder %s19, 0
    %p82 = por %p80, %p81
    %p83 = scmp.ne.s32.totalorder %s71, %s72
    %p84 = scmp.eq.s32.totalorder %s20, 1
    %p85 = por %p83, %p84
    %p87 = scmp.ne.s32.totalorder %s72, %s86
    %p88 = scmp.eq.s32.totalorder %s20, 0
    %p89 = por %p87, %p88
    %s91 = sadd.s32 %s90, 1
    %p94 = scmp.eq.s32.totalorder %s14, 1
    %p95 = scmp.ne.s32.totalorder %s90, %s92
    %p96 = scmp.eq.s32.totalorder %s14, 0
    %p97 = por %p95, %p96
    %p98 = scmp.ne.s32.totalorder %s90, %s92
    %p99 = scmp.eq.s32.totalorder %s19, 1
    %p100 = por %p98, %p99
    %p101 = scmp.ne.s32.totalorder %s92, %s93
    %p102 = scmp.eq.s32.totalorder %s19, 0
    %p103 = por %p101, %p102
    %p104 = scmp.ne.s32.totalorder %s92, %s93
    %p105 = scmp.eq.s32.totalorder %s20, 1
    %p106 = por %p104, %p105
    %p108 = scmp.ne.s32.totalorder %s93, %s107
    %p109 = scmp.eq.s32.totalorder %s20, 0
    %p110 = por %p108, %p109
    %s112 = sadd.s32 %s111, 1
    %p115 = scmp.eq.s32.totalorder %s14, 1
    %p116 = scmp.ne.s32.totalorder %s111, %s113
    %p117 = scmp.eq.s32.totalorder %s14, 0
    %p118 = por %p116, %p117
    %p119 = scmp.ne.s32.totalorder %s111, %s113
    %p120 = scmp.eq.s32.totalorder %s19, 1
    %p121 = por %p119, %p120
    %p122 = scmp.ne.s32.totalorder %s113, %s114
    %p123 = scmp.eq.s32.totalorder %s19, 0
    %p124 = por %p122, %p123
    %p125 = scmp.ne.s32.totalorder %s113, %s114
    %p126 = scmp.eq.s32.totalorder %s20, 1
    %p127 = por %p125, %p126
    %p129 = scmp.ne.s32.totalorder %s114, %s128
    %p130 = scmp.eq.s32.totalorder %s20, 0
    %p131 = por %p129, %p130
    %s133 = sadd.s32 %s132, 1
    %p136 = scmp.eq.s32.totalorder %s14, 1
    %p137 = scmp.ne.s32.totalorder %s132, %s134
    %p138 = scmp.eq.s32.totalorder %s14, 0
    %p139 = por %p137, %p138
    %p140 = scmp.ne.s32.totalorder %s132, %s134
    %p141 = scmp.eq.s32.totalorder %s19, 1
    %p142 = por %p140, %p141
    %p143 = scmp.ne.s32.totalorder %s134, %s135
    %p144 = scmp.eq.s32.totalorder %s19, 0
    %p145 = por %p143, %p144
    %p146 = scmp.ne.s32.totalorder %s134, %s135
    %p147 = scmp.eq.s32.totalorder %s20, 1
    %p148 = por %p146, %p147
    %p150 = scmp.ne.s32.totalorder %s135, %s149
    %p151 = scmp.eq.s32.totalorder %s20, 0
    %p152 = por %p150, %p151
    %s154 = sadd.s32 %s153, 1
    %p157 = scmp.eq.s32.totalorder %s14, 1
    %p158 = scmp.ne.s32.totalorder %s153, %s155
    %p159 = scmp.eq.s32.totalorder %s14, 0
    %p160 = por %p158, %p159
    %p161 = scmp.ne.s32.totalorder %s153, %s155
    %p162 = scmp.eq.s32.totalorder %s19, 1
    %p163 = por %p161, %p162
    %p164 = scmp.ne.s32.totalorder %s155, %s156
    %p165 = scmp.eq.s32.totalorder %s19, 0
    %p166 = por %p164, %p165
    %p167 = scmp.ne.s32.totalorder %s155, %s156
    %p168 = scmp.eq.s32.totalorder %s20, 1
    %p169 = por %p167, %p168
    %p171 = scmp.ne.s32.totalorder %s156, %s170
    %p172 = scmp.eq.s32.totalorder %s20, 0
    %p173 = por %p171, %p172
    %s175 = sadd.s32 %s174, 1
    %p178 = scmp.eq.s32.totalorder %s14, 1
    %p179 = scmp.ne.s32.totalorder %s174, %s176
    %p180 = scmp.eq.s32.totalorder %s14, 0
    %p181 = por %p179, %p180
    %p182 = scmp.ne.s32.totalorder %s174, %s176
    %p183 = scmp.eq.s32.totalorder %s19, 1
    %p184 = por %p182, %p183
    %p185 = scmp.ne.s32.totalorder %s176, %s177
    %p186 = scmp.eq.s32.totalorder %s19, 0
    %p187 = por %p185, %p186
    %p188 = scmp.ne.s32.totalorder %s176, %s177
    %p189 = scmp.eq.s32.totalorder %s20, 1
    %p190 = por %p188, %p189
    %p192 = scmp.ne.s32.totalorder %s177, %s191
    %p193 = scmp.eq.s32.totalorder %s20, 0
    %p194 = por %p192, %p193
    %s195 = ssub.s32 %s14, %s21
    %p196 = scmp.eq.s32.totalorder %s195, 0
    %s198 = sadd.s32 %s197, 1
    %s199 = scalar_select %p196, %s197, %s198
    %p202 = pneg %p196
    %p203 = scmp.eq.s32.totalorder %s14, 1
    %p204 = por %p202, %p203
    %p205 = scmp.ne.s32.totalorder %s197, %s200
    %p206 = scmp.eq.s32.totalorder %s14, 0
    %p207 = por %p205, %p206
    %p208 = scmp.ne.s32.totalorder %s197, %s200
    %p209 = scmp.eq.s32.totalorder %s19, 1
    %p210 = por %p208, %p209
    %p211 = scmp.ne.s32.totalorder %s200, %s201
    %p212 = scmp.eq.s32.totalorder %s19, 0
    %p213 = por %p211, %p212
    %p214 = scmp.ne.s32.totalorder %s200, %s201
    %p215 = scmp.eq.s32.totalorder %s20, 1
    %p216 = por %p214, %p215
    %p218 = scmp.ne.s32.totalorder %s201, %s217
    %p219 = scmp.eq.s32.totalorder %s20, 0
    %p220 = por %p218, %p219
    %p221 = scmp.le.s32.totalorder 1, %s14
    %p222 = scmp.lt.s32.totalorder %s14, 3
    %p223 = pnand %p221, %p222
    %p224 = pneg %p223
    // Predicated region
    $region9: #{lvc_block_forward.3} parent=5 // pred_check
      _
    $region10: #{lvc_block_forward.3} parent=5 // pred_check_branch
      %226 = sbr.rel (%p223) target = $region12
    $region11: #{lvc_block_forward.3} parent=5 // pred_region
      %s227 = ssub.s32 %s14, 1
      // Predicated region
      $region13: #{lvc_block_forward.3} parent=11 // pred_check
        %p228 = pneg %p61
      $region14: #{lvc_block_forward.3} parent=11 // pred_check_branch
        %230 = sbr.rel (%p228) target = $region16
      $region15: #{lvc_block_forward.3} parent=11 // pred_region
        _
      $region16: #{lvc_block_forward.3} parent=11 // pred_fallthru
        _
      // Predicated region
      $region17: #{lvc_block_forward.3} parent=11 // pred_check
        %p231 = pneg %p82
      $region18: #{lvc_block_forward.3} parent=11 // pred_check_branch
        %233 = sbr.rel (%p231) target = $region20
      $region19: #{lvc_block_forward.3} parent=11 // pred_region
        _
      $region20: #{lvc_block_forward.3} parent=11 // pred_fallthru
        _
      // Predicated region
      $region21: #{lvc_block_forward.3} parent=11 // pred_check
        %p234 = pneg %p103
      $region22: #{lvc_block_forward.3} parent=11 // pred_check_branch
        %236 = sbr.rel (%p234) target = $region24
      $region23: #{lvc_block_forward.3} parent=11 // pred_region
        _
      $region24: #{lvc_block_forward.3} parent=11 // pred_fallthru
        _
      // Predicated region
      $region25: #{lvc_block_forward.3} parent=11 // pred_check
        %p237 = pneg %p124
      $region26: #{lvc_block_forward.3} parent=11 // pred_check_branch
        %239 = sbr.rel (%p237) target = $region28
      $region27: #{lvc_block_forward.3} parent=11 // pred_region
        _
      $region28: #{lvc_block_forward.3} parent=11 // pred_fallthru
        _
      // Predicated region
      $region29: #{lvc_block_forward.3} parent=11 // pred_check
        %p240 = pneg %p145
      $region30: #{lvc_block_forward.3} parent=11 // pred_check_branch
        %242 = sbr.rel (%p240) target = $region32
      $region31: #{lvc_block_forward.3} parent=11 // pred_region
        _
      $region32: #{lvc_block_forward.3} parent=11 // pred_fallthru
        _
      // Predicated region
      $region33: #{lvc_block_forward.3} parent=11 // pred_check
        %p243 = pneg %p166
      $region34: #{lvc_block_forward.3} parent=11 // pred_check_branch
        %245 = sbr.rel (%p243) target = $region36
      $region35: #{lvc_block_forward.3} parent=11 // pred_region
        _
      $region36: #{lvc_block_forward.3} parent=11 // pred_fallthru
        _
      // Predicated region
      $region37: #{lvc_block_forward.3} parent=11 // pred_check
        %p246 = pneg %p187
      $region38: #{lvc_block_forward.3} parent=11 // pred_check_branch
        %248 = sbr.rel (%p246) target = $region40
      $region39: #{lvc_block_forward.3} parent=11 // pred_region
        _
      $region40: #{lvc_block_forward.3} parent=11 // pred_fallthru
        _
    $region12: #{lvc_block_forward.3} parent=5 // pred_fallthru
      _
    %p249 = scmp.lt.s32.totalorder %s14, 2
    // Predicated region
    $region41: #{lvc_block_forward.3} parent=5 // pred_check
      %p250 = pneg %p249
    $region42: #{lvc_block_forward.3} parent=5 // pred_check_branch
      %252 = sbr.rel (%p250) target = $region44
    $region43: #{lvc_block_forward.3} parent=5 // pred_region
      // Predicated region
      $region45: #{lvc_block_forward.3} parent=43 // pred_check
        %p253 = pneg %p34
      $region46: #{lvc_block_forward.3} parent=43 // pred_check_branch
        %255 = sbr.rel (%p253) target = $region48
      $region47: #{lvc_block_forward.3} parent=43 // pred_region
        %p256 = scmp.lt.s32.totalorder %s14, 1
        %s257 = scalar_select %p256, %s14, 1
        %s258 = smul.addr %s257, 4
        %s259 = smul.addr %s258, 8
        %s260 = scalar_lea.vmem %s0, %s259
      $region48: #{lvc_block_forward.3} parent=43 // pred_fallthru
        _
    $region44: #{lvc_block_forward.3} parent=5 // pred_fallthru
      _
    %p261 = scmp.le.s32.totalorder 1, %s14
    %p262 = scmp.lt.s32.totalorder %s14, 3
    %p263 = pnand %p261, %p262
    %p264 = pneg %p263
    // Predicated region
    $region49: #{lvc_block_forward.3} parent=5 // pred_check
      _
    $region50: #{lvc_block_forward.3} parent=5 // pred_check_branch
      %266 = sbr.rel (%p263) target = $region52
    $region51: #{lvc_block_forward.3} parent=5 // pred_region
      %s267 = ssub.s32 %s14, 1
      %p268 = scmp.lt.s32.totalorder %s19, 1
      %s269 = scalar_select %p268, %s19, 1
      %s270 = smul.addr %s269, 4
      %s271 = smul.addr %s270, 8
      %s272 = scalar_lea.vmem %s0, %s271
      %p273 = pneg %p40
      %p274 = pneg %p37
      %p275 = pneg %p61
      %p276 = pneg %p58
      %p277 = pneg %p82
      %p278 = pneg %p79
      %p279 = pneg %p103
      %p280 = pneg %p100
      %p281 = pneg %p124
      %p282 = pneg %p121
      %p283 = pneg %p145
      %p284 = pneg %p142
      %p285 = pneg %p166
      %p286 = pneg %p163
      %p287 = pneg %p187
      %p288 = pneg %p184
      %p289 = pneg %p213
      %p290 = pneg %p210
      %p291 = scmp.lt.s32.totalorder %s19, 1
      %s292 = scalar_select %p291, %s19, 1
      %s293 = smul.addr %s292, 4
      %s294 = smul.addr %s293, 4
      %s295 = scalar_lea.vmem %s8, %s294
      %p296 = scmp.lt.s32.totalorder %s19, 1
      %s297 = scalar_select %p296, %s19, 1
      %s298 = smul.addr %s297, 4
      %s299 = smul.addr %s298, 8
      %s300 = scalar_lea.vmem %s0, %s299
      %p301 = scmp.lt.s32.totalorder %s19, 1
      %s302 = scalar_select %p301, %s19, 1
      %s303 = smul.addr %s302, 4
      %s304 = smul.addr %s303, 4
      %s305 = scalar_lea.vmem %s8, %s304
      %v309 = vld [vmem:[%s300] sm:$0xff]
      %v310 = vld [vmem:[%s300 + $0x8] sm:$0xff]
      %v311 = vld [vmem:[%s300 + $0x10] sm:$0xff]
      %v312 = vld [vmem:[%s300 + $0x18] sm:$0xff]
      %v313 = vpack.c.bf16 %v311, %v309
      %v314 = vpack.c.bf16 %v312, %v310
      %v315 = vld [vmem:[%s1] sm:$0x3]
      %v316 = vld [vmem:[%s2] sm:$0xf]
      %318 = vset.pattern.permute.xlu0 0
      %319 = vperm.xlu0 %318, %v316
      %v320 = vpop.permute.xlu0 %319
      %vm322 = vcmask 130048
      %v324 = vsel %vm322, %v315, 0
      %326 = vmatprep.subr.bf16.mxu0 0
      %327 = vmatpush1.bf16.msra.mxu0 0
      %328 = vmatprep.subr.bf16.mxu0 0
      %329 = vmatpush1.bf16.msra.mxu0 0
      %330 = vmatprep.subr.bf16.mxu0 0
      %331 = vmatpush1.bf16.msra.mxu0 0
      %332 = vmatprep.subr.bf16.mxu0 0
      %333 = vmatpush1.bf16.msra.mxu0 0
      %334 = vmatprep.subr.bf16.mxu0 0
      %335 = vmatpush1.bf16.msra.mxu0 0
      %336 = vmatprep.subr.bf16.mxu0 0
      %337 = vmatpush1.bf16.msra.mxu0 0
      %338 = vmatprep.subr.bf16.mxu0 0
      %339 = vmatpush1.bf16.msra.mxu0 0
      %340 = vmatprep.subr.bf16.mxu0 %v314
      %341 = vmatpush1.bf16.msra.mxu0 %v313
      %342 = vmatprep.subr.bf16.mxu0 0
      %343 = vmatpush2.bf16.msra.mxu0 0
      %344 = vmatprep.subr.bf16.mxu0 0
      %345 = vmatpush2.bf16.msra.mxu0 0
      %346 = vmatprep.subr.bf16.mxu0 0
      %347 = vmatpush2.bf16.msra.mxu0 0
      %348 = vmatprep.subr.bf16.mxu0 0
      %349 = vmatpush2.bf16.msra.mxu0 0
      %350 = vmatprep.subr.bf16.mxu0 0
      %351 = vmatpush2.bf16.msra.mxu0 0
      %352 = vmatprep.subr.bf16.mxu0 0
      %353 = vmatpush2.bf16.msra.mxu0 0
      %354 = vmatprep.subr.bf16.mxu0 0
      %355 = vmatpush2.bf16.msra.mxu0 0
      %356 = vmatprep.subr.bf16.mxu0 0
      %357 = vmatpush2.bf16.msra.mxu0 0
      %358 = vmatprep.mubr.bf16.mxu0 0
      %359 = vmatmul.mubr.bf16.gmra.mxu0 %v324
      %v360 = vpop.f32.mrf.mxu0
      %v361 = vadd.f32 %v320, %v360
      %v362 = vpop.f32.mrf.mxu0
      %v363 = vadd.f32 %v320, %v362
      %v364 = vpop.f32.mrf.mxu0
      %v365 = vpop.f32.mrf.mxu0
      %366 = vdwg.mxu0
      %v367 = vmax.f32 %v361, 0.0
      %v368 = vmax.f32 %v363, 0.0
      %v369 = vpack.c.bf16 %v367, %v367
      %v370 = vpack.c.bf16 %v368, %v368
      %373 = vrot.lane.b32.xlu0 %v369, 17
      %v374 = vpop.permute.xlu0 %373
      %375 = vrot.lane.b32.xlu0 %v370, 17
      %v376 = vpop.permute.xlu0 %375
      %vm377 = vcmask 138240
      %v378 = vsel %vm377, %v374, %v376
      %vm380 = vcmask 138240
      %v383 = vsel %vm380, 0, %v374
      %v386 = vsel %vm380, %v376, 0
      %v388 = vlaneseq
      %v389 = vand.u32 %v388, 127
      %v390 = vadd.s32 %v389, 128
      %vm391 = vcmp.lt.s32.totalorder %v389, 0
      %v392 = vsub.s32 0, %v389
      %v393 = vsel %vm391, %v392, %v389
      %v394 = vshrl.u32 %v393, 4
      %v395 = vand.u32 %v393, 15
      %v396 = vsub.s32 0, %v395
      %v397 = vsel %vm391, %v396, %v395
      %vm398 = vcmp.lt.s32.totalorder %v390, 0
      %v399 = vsub.s32 0, %v390
      %v400 = vsel %vm398, %v399, %v390
      %v401 = vshrl.u32 %v400, 4
      %v402 = vand.u32 %v400, 15
      %v403 = vsub.s32 0, %v402
      %v404 = vsel %vm398, %v403, %v402
      %vm405 = vcmp.ne.s32.totalorder %v397, 0
      %vm406 = vcmp.ne.s32.totalorder %v404, 0
      %vm407 = vcmp.lt.s32.totalorder %v397, 0
      %vm408 = vcmp.lt.s32.totalorder %v404, 0
      %vm409 = vmand %vm407, %vm405
      %vm410 = vmand %vm408, %vm406
      %v411 = vadd.s32 %v397, 16
      %v412 = vadd.s32 %v404, 16
      %v413 = vsel %vm409, %v411, %v397
      %v414 = vsel %vm410, %v412, %v404
      %vm415 = vcmp.gt.s32.totalorder %v413, 0
      %vm416 = vcmp.gt.s32.totalorder %v414, 0
      %vm417 = vcmp.lt.s32.totalorder %v413, 15
      %vm418 = vcmp.lt.s32.totalorder %v414, 15
      %v419 = vsel %vm415, 1, 0
      %v420 = vsel %vm416, 1, 0
      %vm421 = vcmp.eq.s32.totalorder %v419, 1
      %vm422 = vcmp.eq.s32.totalorder %v420, 1
      %vm423 = vmpackc.low %vm422, %vm421
      %v424 = vsel %vm423, 65537, 0
      %v425 = vlaneseq
      %v426 = vshrl.u32 %v425, 7
      %v427 = vsub.s32 0, %v426
      %v428 = vrot.slane %v424, %v427
      %v429 = vlaneseq
      %v430 = vshrl.u32 %v429, 7
      %v431 = vsub.s32 4, %v430
      %v432 = vrot.slane %v424, %v431
      %vm433 = vcmp.ne.s16.totalorder %v428, 0
      %vm434 = vcmp.ne.s16.totalorder %v432, 0
      %v435 = vsel %vm433, %v383, 0
      %v436 = vsel %vm434, %v378, 0
      %v437 = vsel %vm417, 1, 0
      %v438 = vsel %vm418, 1, 0
      %vm439 = vcmp.eq.s32.totalorder %v437, 1
      %vm440 = vcmp.eq.s32.totalorder %v438, 1
      %vm441 = vmpackc.low %vm440, %vm439
      %v442 = vsel %vm441, 65537, 0
      %v443 = vlaneseq
      %v444 = vshrl.u32 %v443, 7
      %v445 = vsub.s32 0, %v444
      %v446 = vrot.slane %v442, %v445
      %v447 = vlaneseq
      %v448 = vshrl.u32 %v447, 7
      %v449 = vsub.s32 4, %v448
      %v450 = vrot.slane %v442, %v449
      %451 = vrot.lane.b32.xlu0 %v446, 2
      %v452 = vpop.permute.xlu0 %451
      %453 = vrot.lane.b32.xlu0 %v450, 2
      %v454 = vpop.permute.xlu0 %453
      %vm455 = vcmask 15360
      %v456 = vsel %vm455, %v452, %v454
      %vm457 = vcmp.ne.s16.totalorder %v452, 0
      %vm458 = vcmp.ne.s16.totalorder %v456, 0
      %vm459 = vcmp.ne.s16.totalorder %v454, 0
      %v460 = vsel %vm457, %v383, 0
      %v461 = vsel %vm458, %v378, 0
      %v462 = vsel %vm459, %v386, 0
      %463 = vrot.lane.b32.xlu0 %v428, 16
      %v464 = vpop.permute.xlu0 %463
      %465 = vrot.lane.b32.xlu0 %v432, 16
      %v466 = vpop.permute.xlu0 %465
      %vm467 = vcmask 130048
      %v468 = vsel %vm467, %v464, %v466
      %vm469 = vcmp.ne.s16.totalorder %v464, 0
      %vm470 = vcmp.ne.s16.totalorder %v468, 0
      %vm471 = vcmp.ne.s16.totalorder %v466, 0
      %v472 = vsel %vm469, %v383, 0
      %v473 = vsel %vm470, %v378, 0
      %v474 = vsel %vm471, %v386, 0
      %475 = vrot.lane.b32.xlu0 %v446, 18
      %v476 = vpop.permute.xlu0 %475
      %477 = vrot.lane.b32.xlu0 %v450, 18
      %v478 = vpop.permute.xlu0 %477
      %vm479 = vcmask 146432
      %v480 = vsel %vm479, %v476, %v478
      %vm481 = vcmp.ne.s16.totalorder %v476, 0
      %vm482 = vcmp.ne.s16.totalorder %v480, 0
      %vm483 = vcmp.ne.s16.totalorder %v478, 0
      %v484 = vsel %vm481, %v383, 0
      %v485 = vsel %vm482, %v378, 0
      %v486 = vsel %vm483, %v386, 0
      %487 = vrot.lane.b32.xlu0 %v428, 32
      %v488 = vpop.permute.xlu0 %487
      %489 = vrot.lane.b32.xlu0 %v432, 32
      %v490 = vpop.permute.xlu0 %489
      %vm491 = vcmask 261120
      %v492 = vsel %vm491, %v488, %v490
      %vm493 = vcmp.ne.s16.totalorder %v488, 0
      %vm494 = vcmp.ne.s16.totalorder %v492, 0
      %vm495 = vcmp.ne.s16.totalorder %v490, 0
      %v496 = vsel %vm493, %v383, 0
      %v497 = vsel %vm494, %v378, 0
      %v498 = vsel %vm495, %v386, 0
      %499 = vrot.lane.b32.xlu0 %v446, 34
      %v500 = vpop.permute.xlu0 %499
      %501 = vrot.lane.b32.xlu0 %v450, 34
      %v502 = vpop.permute.xlu0 %501
      %vm503 = vcmask 277504
      %v504 = vsel %vm503, %v500, %v502
      %vm505 = vcmp.ne.s16.totalorder %v500, 0
      %vm506 = vcmp.ne.s16.totalorder %v504, 0
      %vm507 = vcmp.ne.s16.totalorder %v502, 0
      %v508 = vsel %vm505, %v383, 0
      %v509 = vsel %vm506, %v378, 0
      %v510 = vsel %vm507, %v386, 0
      %v513 = vrot.slane %v383, 6
      %v514 = vrot.slane %v378, 6
      %v515 = vrot.slane %v386, 6
      %516 = vrot.lane.b32.xlu0 %v513, 127
      %v517 = vpop.permute.xlu0 %516
      %518 = vrot.lane.b32.xlu0 %v514, 127
      %v519 = vpop.permute.xlu0 %518
      %520 = vrot.lane.b32.xlu0 %v515, 127
      %v521 = vpop.permute.xlu0 %520
      %vm522 = vcmask 1039360
      %v523 = vsel %vm522, %v517, %v519
      %v524 = vsel %vm522, %v519, %v521
      %v528 = vrot.slane %v460, 4
      %v529 = vrot.slane %v461, 4
      %v530 = vrot.slane %v462, 4
      %531 = vrot.lane.b32.xlu0 %v528, 126
      %v532 = vpop.permute.xlu0 %531
      %533 = vrot.lane.b32.xlu0 %v529, 126
      %v534 = vpop.permute.xlu0 %533
      %535 = vrot.lane.b32.xlu0 %v530, 126
      %v536 = vpop.permute.xlu0 %535
      %vm537 = vcmask 1031168
      %v538 = vsel %vm537, %v532, %v534
      %v539 = vsel %vm537, %v534, %v536
      %v543 = vrot.slane %v472, 2
      %v544 = vrot.slane %v473, 2
      %v545 = vrot.slane %v474, 2
      %546 = vrot.lane.b32.xlu0 %v543, 112
      %v547 = vpop.permute.xlu0 %546
      %548 = vrot.lane.b32.xlu0 %v544, 112
      %v549 = vpop.permute.xlu0 %548
      %550 = vrot.lane.b32.xlu0 %v545, 112
      %v551 = vpop.permute.xlu0 %550
      %vm552 = vcmask 916480
      %v553 = vsel %vm552, %v547, %v549
      %v554 = vsel %vm552, %v549, %v551
      %555 = vrot.lane.b32.xlu0 %v383, 111
      %v556 = vpop.permute.xlu0 %555
      %557 = vrot.lane.b32.xlu0 %v378, 111
      %v558 = vpop.permute.xlu0 %557
      %559 = vrot.lane.b32.xlu0 %v386, 111
      %v560 = vpop.permute.xlu0 %559
      %vm561 = vcmask 908288
      %v562 = vsel %vm561, %v556, %v558
      %v563 = vsel %vm561, %v558, %v560
      %v567 = vrot.slane %v484, 6
      %v568 = vrot.slane %v485, 6
      %v569 = vrot.slane %v486, 6
      %570 = vrot.lane.b32.xlu0 %v567, 110
      %v571 = vpop.permute.xlu0 %570
      %572 = vrot.lane.b32.xlu0 %v568, 110
      %v573 = vpop.permute.xlu0 %572
      %574 = vrot.lane.b32.xlu0 %v569, 110
      %v575 = vpop.permute.xlu0 %574
      %vm576 = vcmask 900096
      %v577 = vsel %vm576, %v571, %v573
      %v578 = vsel %vm576, %v573, %v575
      %v582 = vrot.slane %v496, 4
      %v583 = vrot.slane %v497, 4
      %v584 = vrot.slane %v498, 4
      %585 = vrot.lane.b32.xlu0 %v582, 96
      %v586 = vpop.permute.xlu0 %585
      %587 = vrot.lane.b32.xlu0 %v583, 96
      %v588 = vpop.permute.xlu0 %587
      %589 = vrot.lane.b32.xlu0 %v584, 96
      %v590 = vpop.permute.xlu0 %589
      %vm591 = vcmask 785408
      %v592 = vsel %vm591, %v586, %v588
      %v593 = vsel %vm591, %v588, %v590
      %v594 = vrot.slane %v383, 2
      %v595 = vrot.slane %v378, 2
      %v596 = vrot.slane %v386, 2
      %597 = vrot.lane.b32.xlu0 %v594, 95
      %v598 = vpop.permute.xlu0 %597
      %599 = vrot.lane.b32.xlu0 %v595, 95
      %v600 = vpop.permute.xlu0 %599
      %601 = vrot.lane.b32.xlu0 %v596, 95
      %v602 = vpop.permute.xlu0 %601
      %vm603 = vcmask 777216
      %v604 = vsel %vm603, %v598, %v600
      %v605 = vsel %vm603, %v600, %v602
      %609 = vrot.lane.b32.xlu0 %v508, 94
      %v610 = vpop.permute.xlu0 %609
      %611 = vrot.lane.b32.xlu0 %v509, 94
      %v612 = vpop.permute.xlu0 %611
      %613 = vrot.lane.b32.xlu0 %v510, 94
      %v614 = vpop.permute.xlu0 %613
      %vm615 = vcmask 769024
      %v616 = vsel %vm615, %v610, %v612
      %v617 = vsel %vm615, %v612, %v614
      %vm618 = vcmask 1041408
      %v621 = vsel %vm618, %v435, %v523
      %v624 = vsel %vm618, %v436, %v524
      %vm625 = vcmask 1043456
      %v627 = vsel %vm625, %v621, %v538
      %v629 = vsel %vm625, %v624, %v539
      %vm630 = vcmask 1045504
      %v632 = vsel %vm630, %v627, %v553
      %v635 = vsel %vm630, %v629, %v554
      %v639 = vsel %vm618, %v562, %v577
      %v642 = vsel %vm618, %v563, %v578
      %v644 = vsel %vm625, %v639, %v592
      %v646 = vsel %vm625, %v642, %v593
      %v648 = vsel %vm630, %v644, %v604
      %v651 = vsel %vm630, %v646, %v605
      %v653 = vld [vmem:[%s3] sm:$0x3]
      %v654 = vld [vmem:[%s4] sm:$0xf]
      %656 = vset.pattern.permute.xlu0 0
      %657 = vperm.xlu0 %656, %v654
      %v658 = vpop.permute.xlu0 %657
      %vm660 = vcmask 293888
      %v662 = vsel %vm660, %v653, 0
      %v665 = vsel %vm618, %v616, 0
      %v668 = vsel %vm618, %v617, 0
      %670 = vmatprep.subr.bf16.mxu0 0
      %671 = vmatpush1.bf16.msra.mxu0 0
      %672 = vmatprep.subr.bf16.mxu0 0
      %673 = vmatpush1.bf16.msra.mxu0 0
      %674 = vmatprep.subr.bf16.mxu0 0
      %675 = vmatpush1.bf16.msra.mxu0 0
      %676 = vmatprep.subr.bf16.mxu0 0
      %677 = vmatpush1.bf16.msra.mxu0 0
      %678 = vmatprep.subr.bf16.mxu0 0
      %679 = vmatpush1.bf16.msra.mxu0 0
      %680 = vmatprep.subr.bf16.mxu0 %v668
      %681 = vmatpush1.bf16.msra.mxu0 %v665
      %682 = vmatprep.subr.bf16.mxu0 %v651
      %683 = vmatpush1.bf16.msra.mxu0 %v648
      %684 = vmatprep.subr.bf16.mxu0 %v635
      %685 = vmatpush1.bf16.msra.mxu0 %v632
      %686 = vmatprep.subr.bf16.mxu0 0
      %687 = vmatpush2.bf16.msra.mxu0 0
      %688 = vmatprep.subr.bf16.mxu0 0
      %689 = vmatpush2.bf16.msra.mxu0 0
      %690 = vmatprep.subr.bf16.mxu0 0
      %691 = vmatpush2.bf16.msra.mxu0 0
      %692 = vmatprep.subr.bf16.mxu0 0
      %693 = vmatpush2.bf16.msra.mxu0 0
      %694 = vmatprep.subr.bf16.mxu0 0
      %695 = vmatpush2.bf16.msra.mxu0 0
      %696 = vmatprep.subr.bf16.mxu0 0
      %697 = vmatpush2.bf16.msra.mxu0 0
      %698 = vmatprep.subr.bf16.mxu0 0
      %699 = vmatpush2.bf16.msra.mxu0 0
      %700 = vmatprep.subr.bf16.mxu0 0
      %701 = vmatpush2.bf16.msra.mxu0 0
      %702 = vmatprep.mubr.bf16.mxu0 0
      %703 = vmatmul.mubr.bf16.gmra.mxu0 %v662
      %v704 = vpop.f32.mrf.mxu0
      %v705 = vadd.f32 %v658, %v704
      %v706 = vpop.f32.mrf.mxu0
      %v707 = vadd.f32 %v658, %v706
      %v708 = vpop.f32.mrf.mxu0
      %v709 = vpop.f32.mrf.mxu0
      %710 = vdwg.mxu0
      %v711 = vmax.f32 %v705, 0.0
      %v712 = vmax.f32 %v707, 0.0
      %v713 = vpack.c.bf16 %v711, %v711
      %v714 = vpack.c.bf16 %v712, %v712
      %v715 = vld [vmem:[%s5] sm:$0xf]
      %v716 = vld [vmem:[%s5 + $0x4] sm:$0xf]
      %v717 = vld [vmem:[%s7] sm:$0xf]
      %v718 = vld [vmem:[%s7 + $0x4] sm:$0xf]
      %v721 = vunpack.c.l.b16 %v717
      %v722 = vunpack.c.l.b16 %v718
      %v723 = vpack.c.b16 %v722, %v721
      %v725 = vsel %vm322, %v723, 0
      %727 = vmatprep.subr.bf16.mxu0 0
      %728 = vmatpush1.bf16.msra.mxu0 0
      %729 = vmatprep.subr.bf16.mxu0 0
      %730 = vmatpush1.bf16.msra.mxu0 0
      %731 = vmatprep.subr.bf16.mxu0 0
      %732 = vmatpush1.bf16.msra.mxu0 0
      %733 = vmatprep.subr.bf16.mxu0 0
      %734 = vmatpush1.bf16.msra.mxu0 0
      %735 = vmatprep.subr.bf16.mxu0 0
      %736 = vmatpush1.bf16.msra.mxu0 0
      %737 = vmatprep.subr.bf16.mxu0 0
      %738 = vmatpush1.bf16.msra.mxu0 0
      %739 = vmatprep.subr.bf16.mxu0 0
      %740 = vmatpush1.bf16.msra.mxu0 0
      %741 = vmatprep.subr.bf16.mxu0 %v314
      %742 = vmatpush1.bf16.msra.mxu0 %v313
      %743 = vmatprep.subr.bf16.mxu0 0
      %744 = vmatpush2.bf16.msra.mxu0 0
      %745 = vmatprep.subr.bf16.mxu0 0
      %746 = vmatpush2.bf16.msra.mxu0 0
      %747 = vmatprep.subr.bf16.mxu0 0
      %748 = vmatpush2.bf16.msra.mxu0 0
      %749 = vmatprep.subr.bf16.mxu0 0
      %750 = vmatpush2.bf16.msra.mxu0 0
      %751 = vmatprep.subr.bf16.mxu0 0
      %752 = vmatpush2.bf16.msra.mxu0 0
      %753 = vmatprep.subr.bf16.mxu0 0
      %754 = vmatpush2.bf16.msra.mxu0 0
      %755 = vmatprep.subr.bf16.mxu0 0
      %756 = vmatpush2.bf16.msra.mxu0 0
      %757 = vmatprep.subr.bf16.mxu0 0
      %758 = vmatpush2.bf16.msra.mxu0 0
      %759 = vmatprep.mubr.bf16.mxu0 0
      %760 = vmatmul.mubr.bf16.gmra.mxu0 %v725
      %v761 = vpop.f32.mrf.mxu0
      %v762 = vadd.f32 0.0, %v761
      %v763 = vpop.f32.mrf.mxu0
      %v764 = vadd.f32 0.0, %v763
      %v765 = vpop.f32.mrf.mxu0
      %v766 = vadd.f32 0.0, %v765
      %v767 = vpop.f32.mrf.mxu0
      %v768 = vadd.f32 0.0, %v767
      %769 = vdwg.mxu0
      %v772 = vunpack.c.l.b16 %v715
      %v773 = vunpack.c.l.b16 %v716
      %v774 = vpack.c.b16 %v773, %v772
      %vm775 = vcmask 31744
      %v777 = vsel %vm775, %v774, 0
      %v780 = vsel %vm618, %v713, 0
      %v783 = vsel %vm618, %v714, 0
      %785 = vmatprep.subr.bf16.mxu0 0
      %786 = vmatpush1.bf16.msra.mxu0 0
      %787 = vmatprep.subr.bf16.mxu0 0
      %788 = vmatpush1.bf16.msra.mxu0 0
      %789 = vmatprep.subr.bf16.mxu0 0
      %790 = vmatpush1.bf16.msra.mxu0 0
      %791 = vmatprep.subr.bf16.mxu0 0
      %792 = vmatpush1.bf16.msra.mxu0 0
      %793 = vmatprep.subr.bf16.mxu0 0
      %794 = vmatpush1.bf16.msra.mxu0 0
      %795 = vmatprep.subr.bf16.mxu0 0
      %796 = vmatpush1.bf16.msra.mxu0 0
      %797 = vmatprep.subr.bf16.mxu0 0
      %798 = vmatpush1.bf16.msra.mxu0 0
      %799 = vmatprep.subr.bf16.mxu0 %v783
      %800 = vmatpush1.bf16.msra.mxu0 %v780
      %801 = vmatprep.subr.bf16.mxu0 0
      %802 = vmatpush2.bf16.msra.mxu0 0
      %803 = vmatprep.subr.bf16.mxu0 0
      %804 = vmatpush2.bf16.msra.mxu0 0
      %805 = vmatprep.subr.bf16.mxu0 0
      %806 = vmatpush2.bf16.msra.mxu0 0
      %807 = vmatprep.subr.bf16.mxu0 0
      %808 = vmatpush2.bf16.msra.mxu0 0
      %809 = vmatprep.subr.bf16.mxu0 0
      %810 = vmatpush2.bf16.msra.mxu0 0
      %811 = vmatprep.subr.bf16.mxu0 0
      %812 = vmatpush2.bf16.msra.mxu0 0
      %813 = vmatprep.subr.bf16.mxu0 0
      %814 = vmatpush2.bf16.msra.mxu0 0
      %815 = vmatprep.subr.bf16.mxu0 0
      %816 = vmatpush2.bf16.msra.mxu0 0
      %817 = vmatprep.mubr.bf16.mxu0 0
      %818 = vmatmul.mubr.bf16.gmra.mxu0 %v777
      %v819 = vpop.f32.mrf.mxu0
      %v820 = vadd.f32 %v762, %v819
      %v821 = vpop.f32.mrf.mxu0
      %v822 = vadd.f32 %v764, %v821
      %v823 = vpop.f32.mrf.mxu0
      %v824 = vadd.f32 %v766, %v823
      %v825 = vpop.f32.mrf.mxu0
      %v826 = vadd.f32 %v768, %v825
      %827 = vdwg.mxu0
      %v828 = vld [vmem:[%s6] sm:$0xff]
      %v829 = vld [vmem:[%s6 + $0x8] sm:$0xff]
      %831 = vset.pattern.permute.xlu0 0
      %832 = vperm.xlu0 %831, %v828
      %v833 = vpop.permute.xlu0 %832
      %836 = vset.pattern.permute.xlu0 0
      %837 = vperm.xlu0 %836, %v829
      %v838 = vpop.permute.xlu0 %837
      %v840 = vadd.f32 %v820, %v833
      %v841 = vadd.f32 %v822, %v833
      %v842 = vadd.f32 %v824, %v838
      %v843 = vadd.f32 %v826, %v838
      %v844 = vmax.f32 %v840, 0.0
      %v845 = vmax.f32 %v841, 0.0
      %v846 = vmax.f32 %v842, 0.0
      %v847 = vmax.f32 %v843, 0.0
      %v848 = vpack.c.bf16 %v846, %v844
      %v849 = vpack.c.bf16 %v847, %v845
      %v852 = vunpack.c.l.b16 %v848
      %v853 = vunpack.c.l.b16 %v849
      %v854 = vunpack.c.h.b16 %v848
      %v855 = vunpack.c.h.b16 %v849
      %v856 = vpack.c.b16 %v853, %v852
      %v857 = vpack.c.b16 %v855, %v854
      %860 = vst [vmem:[%s305] sm:$0xff] %v856
      %861 = vst [vmem:[%s305 + $0x8] sm:$0xff] %v857
      %p862 = scmp.lt.s32.totalorder %s19, 1
      %s863 = scalar_select %p862, %s19, 1
      %s864 = smul.addr %s863, 4
      %s865 = smul.addr %s864, 4
      %s866 = scalar_lea.vmem %s8, %s865
      // Predicated region
      $region53: #{lvc_block_forward.3} parent=51 // pred_check
        %p867 = pneg %p210
      $region54: #{lvc_block_forward.3} parent=51 // pred_check_branch
        %869 = sbr.rel (%p867) target = $region56
      $region55: #{lvc_block_forward.3} parent=51 // pred_region
        _
      $region56: #{lvc_block_forward.3} parent=51 // pred_fallthru
        _
    $region52: #{lvc_block_forward.3} parent=5 // pred_fallthru
      _
    %p870 = scmp.le.s32.totalorder 2, %s14
    // Predicated region
    $region57: #{lvc_block_forward.3} parent=5 // pred_check
      %p871 = pneg %p870
    $region58: #{lvc_block_forward.3} parent=5 // pred_check_branch
      %873 = sbr.rel (%p871) target = $region60
    $region59: #{lvc_block_forward.3} parent=5 // pred_region
      %s874 = ssub.s32 %s14, 2
      // Predicated region
      $region61: #{lvc_block_forward.3} parent=59 // pred_check
        %p875 = pneg %p216
      $region62: #{lvc_block_forward.3} parent=59 // pred_check_branch
        %877 = sbr.rel (%p875) target = $region64
      $region63: #{lvc_block_forward.3} parent=59 // pred_region
        %p878 = scmp.lt.s32.totalorder %s20, 1
        %s879 = scalar_select %p878, %s20, 1
        %s880 = smul.addr %s879, 4
        %s881 = smul.addr %s880, 4
        %s882 = scalar_lea.vmem %s8, %s881
      $region64: #{lvc_block_forward.3} parent=59 // pred_fallthru
        _
    $region60: #{lvc_block_forward.3} parent=5 // pred_fallthru
      _
  $region6: #{lvc_block_forward.3} parent=0 // loop_footer
    %s18 = sadd.s32 1, %s14
  $region7: #{lvc_block_forward.3} parent=0 // loop_footer_branch
    %13 = sbr.rel target = $region3
  $region8: #{lvc_block_forward.3} parent=0 // loop_exit
    _

// kernel: lvc_block_forward.4
$region0: #{lvc_block_forward.4}
  #allocation0 [shape = 'u32[]', space=smem, size = 0x4, offset = 0x4, fixed_abs, tag = 'smem constant byte address 0x4 - core index']
  #allocation1 [shape = 'u32[144,128]{1,0:T(1,128)}', space=vmem, size = 0x12000, scoped, tag = 'internal scratch']
  #allocation2 [shape = 'f32[16,64]{1,0:T(8,128)}', space=vmem, size = 0x2000, scoped, tag = 'scratch operand']
  #allocation3 [shape = 'f32[1,64]{1,0:T(1,128)}', space=vmem, size = 0x200, scoped, tag = 'scratch operand']
  %s0 = inlined_call_operand.vmem [shape: bf16[2,16,256], index: 0, kind: input, shape index: {}]
  %s1 = inlined_call_operand.vmem [shape: bf16[16,16], index: 1, kind: input, shape index: {}]
  %s2 = inlined_call_operand.vmem [shape: f32[16,1], index: 2, kind: input, shape index: {}]
  %s3 = inlined_call_operand.vmem [shape: f32[64,16], index: 3, kind: input, shape index: {}]
  %s4 = inlined_call_operand.vmem [shape: f32[16,64], index: 4, kind: input, shape index: {}]
  %s5 = inlined_call_operand.vmem [shape: f32[64,1], index: 5, kind: input, shape index: {}]
  %s6 = inlined_call_operand.vmem [shape: f32[64,1], index: 6, kind: input, shape index: {}]
  %s7 = inlined_call_operand.vmem [shape: f32[1,64], index: 7, kind: input, shape index: {}]
  %s8 = inlined_call_operand.vmem [shape: f32[1,64], index: 8, kind: input, shape index: {}]
  %s9 = inlined_call_operand.vmem [shape: f32[16,16], index: 9, kind: input, shape index: {}]
  %s10 = inlined_call_operand.vmem [shape: f32[16,1], index: 10, kind: input, shape index: {}]
  %s11 = inlined_call_operand.vmem [shape: f32[2,16,1], index: 11, kind: output, shape index: {}]
  %s12 = sld [smem:[#allocation0]]
  $region85: #{lvc_block_forward.4} parent=0
    _
  %s14 = ssub.s32 1, %s12
  %s15 = scalar_select 0, %s14, %s12
  loop: start=0, step=1, limit=4
  $region2: #{lvc_block_forward.4} parent=0 // loop_pre_header
    _
  $region3: #{lvc_block_forward.4} parent=0 // loop_header
    %s17 = sphi 0, %s21
    %p18 = scmp.ge.s32.totalorder %s17, 4
    %s24 = sphi 0, %s36
    %s25 = sphi 0, %s32
    %s26 = sphi 0, %s24
    %s27 = sphi 0, %s25
    %s28 = sphi 0, %s26
    %s29 = sphi 0, %s27
    %s41 = sphi 0, %s43
    %s44 = sphi 0, %s41
    %s45 = sphi 0, %s44
    %s61 = sphi 0, %s45
    %s65 = sphi 0, %s65
    %s67 = sphi 0, %s65
    %s68 = sphi 0, %s67
    %s82 = sphi 0, %s68
    %s86 = sphi 0, %s86
    %s88 = sphi 0, %s86
    %s89 = sphi 0, %s88
    %s103 = sphi 0, %s89
    %s107 = sphi 0, %s107
    %s109 = sphi 0, %s107
    %s110 = sphi 0, %s109
    %s124 = sphi 0, %s110
    %s128 = sphi 0, %s128
    %s130 = sphi 0, %s128
    %s131 = sphi 0, %s130
    %s145 = sphi 0, %s131
    %s149 = sphi 0, %s149
    %s151 = sphi 0, %s149
    %s152 = sphi 0, %s151
    %s166 = sphi 0, %s152
    %s170 = sphi 0, %s170
    %s172 = sphi 0, %s170
    %s173 = sphi 0, %s172
    %s187 = sphi 0, %s173
    %s191 = sphi 0, %s191
    %s193 = sphi 0, %s191
    %s194 = sphi 0, %s193
    %s208 = sphi 0, %s194
    %s212 = sphi 0, %s212
    %s214 = sphi 0, %s212
    %s215 = sphi 0, %s214
    %s229 = sphi 0, %s215
    %s233 = sphi 0, %s233
    %s235 = sphi 0, %s233
    %s236 = sphi 0, %s235
    %s250 = sphi 0, %s236
    %s254 = sphi 0, %s254
    %s256 = sphi 0, %s254
    %s257 = sphi 0, %s256
    %s271 = sphi 0, %s257
    %s277 = sphi 0, %s279
    %s280 = sphi 0, %s277
    %s281 = sphi 0, %s280
    %s297 = sphi 0, %s281
  $region4: #{lvc_block_forward.4} parent=0 // loop_header_branch
    %20 = sbr.rel (%p18) target = $region8
  $region5: #{lvc_block_forward.4} parent=0 // loop_body
    %s22 = ssub.s32 %s17, 1
    %s23 = ssub.s32 %s17, 2
    %s30 = sadd.s32 1, %s25
    %p31 = scmp.ge.s32.totalorder %s30, 1
    %s32 = scalar_select %p31, 0, %s30
    %s33 = sadd.s32 1, %s24
    %s34 = scalar_select %p31, %s33, %s24
    %p35 = scmp.ge.s32.totalorder %s34, 2
    %s36 = scalar_select %p35, 0, %s34
    %s37 = ssub.s32 %s24, %s36
    %s38 = ssub.s32 %s25, %s32
    %s39 = sor.u32 %s37, %s38
    %p40 = scmp.eq.s32.totalorder %s39, 0
    %s42 = sadd.s32 %s41, 1
    %s43 = scalar_select %p40, %s41, %s42
    %p46 = pneg %p40
    %p47 = scmp.eq.s32.totalorder %s17, 1
    %p48 = por %p46, %p47
    %p49 = scmp.ne.s32.totalorder %s41, %s44
    %p50 = scmp.eq.s32.totalorder %s17, 0
    %p51 = por %p49, %p50
    %p52 = scmp.ne.s32.totalorder %s41, %s44
    %p53 = scmp.eq.s32.totalorder %s22, 1
    %p54 = por %p52, %p53
    %p55 = scmp.ne.s32.totalorder %s44, %s45
    %p56 = scmp.eq.s32.totalorder %s22, 0
    %p57 = por %p55, %p56
    %p58 = scmp.ne.s32.totalorder %s44, %s45
    %p59 = scmp.eq.s32.totalorder %s23, 1
    %p60 = por %p58, %p59
    %p62 = scmp.ne.s32.totalorder %s45, %s61
    %p63 = scmp.eq.s32.totalorder %s23, 0
    %p64 = por %p62, %p63
    %s66 = sadd.s32 %s65, 1
    %p69 = scmp.eq.s32.totalorder %s17, 1
    %p70 = scmp.ne.s32.totalorder %s65, %s67
    %p71 = scmp.eq.s32.totalorder %s17, 0
    %p72 = por %p70, %p71
    %p73 = scmp.ne.s32.totalorder %s65, %s67
    %p74 = scmp.eq.s32.totalorder %s22, 1
    %p75 = por %p73, %p74
    %p76 = scmp.ne.s32.totalorder %s67, %s68
    %p77 = scmp.eq.s32.totalorder %s22, 0
    %p78 = por %p76, %p77
    %p79 = scmp.ne.s32.totalorder %s67, %s68
    %p80 = scmp.eq.s32.totalorder %s23, 1
    %p81 = por %p79, %p80
    %p83 = scmp.ne.s32.totalorder %s68, %s82
    %p84 = scmp.eq.s32.totalorder %s23, 0
    %p85 = por %p83, %p84
    %s87 = sadd.s32 %s86, 1
    %p90 = scmp.eq.s32.totalorder %s17, 1
    %p91 = scmp.ne.s32.totalorder %s86, %s88
    %p92 = scmp.eq.s32.totalorder %s17, 0
    %p93 = por %p91, %p92
    %p94 = scmp.ne.s32.totalorder %s86, %s88
    %p95 = scmp.eq.s32.totalorder %s22, 1
    %p96 = por %p94, %p95
    %p97 = scmp.ne.s32.totalorder %s88, %s89
    %p98 = scmp.eq.s32.totalorder %s22, 0
    %p99 = por %p97, %p98
    %p100 = scmp.ne.s32.totalorder %s88, %s89
    %p101 = scmp.eq.s32.totalorder %s23, 1
    %p102 = por %p100, %p101
    %p104 = scmp.ne.s32.totalorder %s89, %s103
    %p105 = scmp.eq.s32.totalorder %s23, 0
    %p106 = por %p104, %p105
    %s108 = sadd.s32 %s107, 1
    %p111 = scmp.eq.s32.totalorder %s17, 1
    %p112 = scmp.ne.s32.totalorder %s107, %s109
    %p113 = scmp.eq.s32.totalorder %s17, 0
    %p114 = por %p112, %p113
    %p115 = scmp.ne.s32.totalorder %s107, %s109
    %p116 = scmp.eq.s32.totalorder %s22, 1
    %p117 = por %p115, %p116
    %p118 = scmp.ne.s32.totalorder %s109, %s110
    %p119 = scmp.eq.s32.totalorder %s22, 0
    %p120 = por %p118, %p119
    %p121 = scmp.ne.s32.totalorder %s109, %s110
    %p122 = scmp.eq.s32.totalorder %s23, 1
    %p123 = por %p121, %p122
    %p125 = scmp.ne.s32.totalorder %s110, %s124
    %p126 = scmp.eq.s32.totalorder %s23, 0
    %p127 = por %p125, %p126
    %s129 = sadd.s32 %s128, 1
    %p132 = scmp.eq.s32.totalorder %s17, 1
    %p133 = scmp.ne.s32.totalorder %s128, %s130
    %p134 = scmp.eq.s32.totalorder %s17, 0
    %p135 = por %p133, %p134
    %p136 = scmp.ne.s32.totalorder %s128, %s130
    %p137 = scmp.eq.s32.totalorder %s22, 1
    %p138 = por %p136, %p137
    %p139 = scmp.ne.s32.totalorder %s130, %s131
    %p140 = scmp.eq.s32.totalorder %s22, 0
    %p141 = por %p139, %p140
    %p142 = scmp.ne.s32.totalorder %s130, %s131
    %p143 = scmp.eq.s32.totalorder %s23, 1
    %p144 = por %p142, %p143
    %p146 = scmp.ne.s32.totalorder %s131, %s145
    %p147 = scmp.eq.s32.totalorder %s23, 0
    %p148 = por %p146, %p147
    %s150 = sadd.s32 %s149, 1
    %p153 = scmp.eq.s32.totalorder %s17, 1
    %p154 = scmp.ne.s32.totalorder %s149, %s151
    %p155 = scmp.eq.s32.totalorder %s17, 0
    %p156 = por %p154, %p155
    %p157 = scmp.ne.s32.totalorder %s149, %s151
    %p158 = scmp.eq.s32.totalorder %s22, 1
    %p159 = por %p157, %p158
    %p160 = scmp.ne.s32.totalorder %s151, %s152
    %p161 = scmp.eq.s32.totalorder %s22, 0
    %p162 = por %p160, %p161
    %p163 = scmp.ne.s32.totalorder %s151, %s152
    %p164 = scmp.eq.s32.totalorder %s23, 1
    %p165 = por %p163, %p164
    %p167 = scmp.ne.s32.totalorder %s152, %s166
    %p168 = scmp.eq.s32.totalorder %s23, 0
    %p169 = por %p167, %p168
    %s171 = sadd.s32 %s170, 1
    %p174 = scmp.eq.s32.totalorder %s17, 1
    %p175 = scmp.ne.s32.totalorder %s170, %s172
    %p176 = scmp.eq.s32.totalorder %s17, 0
    %p177 = por %p175, %p176
    %p178 = scmp.ne.s32.totalorder %s170, %s172
    %p179 = scmp.eq.s32.totalorder %s22, 1
    %p180 = por %p178, %p179
    %p181 = scmp.ne.s32.totalorder %s172, %s173
    %p182 = scmp.eq.s32.totalorder %s22, 0
    %p183 = por %p181, %p182
    %p184 = scmp.ne.s32.totalorder %s172, %s173
    %p185 = scmp.eq.s32.totalorder %s23, 1
    %p186 = por %p184, %p185
    %p188 = scmp.ne.s32.totalorder %s173, %s187
    %p189 = scmp.eq.s32.totalorder %s23, 0
    %p190 = por %p188, %p189
    %s192 = sadd.s32 %s191, 1
    %p195 = scmp.eq.s32.totalorder %s17, 1
    %p196 = scmp.ne.s32.totalorder %s191, %s193
    %p197 = scmp.eq.s32.totalorder %s17, 0
    %p198 = por %p196, %p197
    %p199 = scmp.ne.s32.totalorder %s191, %s193
    %p200 = scmp.eq.s32.totalorder %s22, 1
    %p201 = por %p199, %p200
    %p202 = scmp.ne.s32.totalorder %s193, %s194
    %p203 = scmp.eq.s32.totalorder %s22, 0
    %p204 = por %p202, %p203
    %p205 = scmp.ne.s32.totalorder %s193, %s194
    %p206 = scmp.eq.s32.totalorder %s23, 1
    %p207 = por %p205, %p206
    %p209 = scmp.ne.s32.totalorder %s194, %s208
    %p210 = scmp.eq.s32.totalorder %s23, 0
    %p211 = por %p209, %p210
    %s213 = sadd.s32 %s212, 1
    %p216 = scmp.eq.s32.totalorder %s17, 1
    %p217 = scmp.ne.s32.totalorder %s212, %s214
    %p218 = scmp.eq.s32.totalorder %s17, 0
    %p219 = por %p217, %p218
    %p220 = scmp.ne.s32.totalorder %s212, %s214
    %p221 = scmp.eq.s32.totalorder %s22, 1
    %p222 = por %p220, %p221
    %p223 = scmp.ne.s32.totalorder %s214, %s215
    %p224 = scmp.eq.s32.totalorder %s22, 0
    %p225 = por %p223, %p224
    %p226 = scmp.ne.s32.totalorder %s214, %s215
    %p227 = scmp.eq.s32.totalorder %s23, 1
    %p228 = por %p226, %p227
    %p230 = scmp.ne.s32.totalorder %s215, %s229
    %p231 = scmp.eq.s32.totalorder %s23, 0
    %p232 = por %p230, %p231
    %s234 = sadd.s32 %s233, 1
    %p237 = scmp.eq.s32.totalorder %s17, 1
    %p238 = scmp.ne.s32.totalorder %s233, %s235
    %p239 = scmp.eq.s32.totalorder %s17, 0
    %p240 = por %p238, %p239
    %p241 = scmp.ne.s32.totalorder %s233, %s235
    %p242 = scmp.eq.s32.totalorder %s22, 1
    %p243 = por %p241, %p242
    %p244 = scmp.ne.s32.totalorder %s235, %s236
    %p245 = scmp.eq.s32.totalorder %s22, 0
    %p246 = por %p244, %p245
    %p247 = scmp.ne.s32.totalorder %s235, %s236
    %p248 = scmp.eq.s32.totalorder %s23, 1
    %p249 = por %p247, %p248
    %p251 = scmp.ne.s32.totalorder %s236, %s250
    %p252 = scmp.eq.s32.totalorder %s23, 0
    %p253 = por %p251, %p252
    %s255 = sadd.s32 %s254, 1
    %p258 = scmp.eq.s32.totalorder %s17, 1
    %p259 = scmp.ne.s32.totalorder %s254, %s256
    %p260 = scmp.eq.s32.totalorder %s17, 0
    %p261 = por %p259, %p260
    %p262 = scmp.ne.s32.totalorder %s254, %s256
    %p263 = scmp.eq.s32.totalorder %s22, 1
    %p264 = por %p262, %p263
    %p265 = scmp.ne.s32.totalorder %s256, %s257
    %p266 = scmp.eq.s32.totalorder %s22, 0
    %p267 = por %p265, %p266
    %p268 = scmp.ne.s32.totalorder %s256, %s257
    %p269 = scmp.eq.s32.totalorder %s23, 1
    %p270 = por %p268, %p269
    %p272 = scmp.ne.s32.totalorder %s257, %s271
    %p273 = scmp.eq.s32.totalorder %s23, 0
    %p274 = por %p272, %p273
    %s275 = ssub.s32 %s24, %s36
    %p276 = scmp.eq.s32.totalorder %s275, 0
    %s278 = sadd.s32 %s277, 1
    %s279 = scalar_select %p276, %s277, %s278
    %p282 = pneg %p276
    %p283 = scmp.eq.s32.totalorder %s17, 1
    %p284 = por %p282, %p283
    %p285 = scmp.ne.s32.totalorder %s277, %s280
    %p286 = scmp.eq.s32.totalorder %s17, 0
    %p287 = por %p285, %p286
    %p288 = scmp.ne.s32.totalorder %s277, %s280
    %p289 = scmp.eq.s32.totalorder %s22, 1
    %p290 = por %p288, %p289
    %p291 = scmp.ne.s32.totalorder %s280, %s281
    %p292 = scmp.eq.s32.totalorder %s22, 0
    %p293 = por %p291, %p292
    %p294 = scmp.ne.s32.totalorder %s280, %s281
    %p295 = scmp.eq.s32.totalorder %s23, 1
    %p296 = por %p294, %p295
    %p298 = scmp.ne.s32.totalorder %s281, %s297
    %p299 = scmp.eq.s32.totalorder %s23, 0
    %p300 = por %p298, %p299
    %p301 = scmp.le.s32.totalorder 1, %s17
    %p302 = scmp.lt.s32.totalorder %s17, 3
    %p303 = pnand %p301, %p302
    %p304 = pneg %p303
    // Predicated region
    $region9: #{lvc_block_forward.4} parent=5 // pred_check
      _
    $region10: #{lvc_block_forward.4} parent=5 // pred_check_branch
      %306 = sbr.rel (%p303) target = $region12
    $region11: #{lvc_block_forward.4} parent=5 // pred_region
      %s307 = ssub.s32 %s17, 1
      // Predicated region
      $region13: #{lvc_block_forward.4} parent=11 // pred_check
        %p308 = pneg %p78
      $region14: #{lvc_block_forward.4} parent=11 // pred_check_branch
        %310 = sbr.rel (%p308) target = $region16
      $region15: #{lvc_block_forward.4} parent=11 // pred_region
        _
      $region16: #{lvc_block_forward.4} parent=11 // pred_fallthru
        _
      // Predicated region
      $region17: #{lvc_block_forward.4} parent=11 // pred_check
        %p311 = pneg %p99
      $region18: #{lvc_block_forward.4} parent=11 // pred_check_branch
        %313 = sbr.rel (%p311) target = $region20
      $region19: #{lvc_block_forward.4} parent=11 // pred_region
        _
      $region20: #{lvc_block_forward.4} parent=11 // pred_fallthru
        _
      // Predicated region
      $region21: #{lvc_block_forward.4} parent=11 // pred_check
        %p314 = pneg %p120
      $region22: #{lvc_block_forward.4} parent=11 // pred_check_branch
        %316 = sbr.rel (%p314) target = $region24
      $region23: #{lvc_block_forward.4} parent=11 // pred_region
        _
      $region24: #{lvc_block_forward.4} parent=11 // pred_fallthru
        _
      // Predicated region
      $region25: #{lvc_block_forward.4} parent=11 // pred_check
        %p317 = pneg %p141
      $region26: #{lvc_block_forward.4} parent=11 // pred_check_branch
        %319 = sbr.rel (%p317) target = $region28
      $region27: #{lvc_block_forward.4} parent=11 // pred_region
        _
      $region28: #{lvc_block_forward.4} parent=11 // pred_fallthru
        _
      // Predicated region
      $region29: #{lvc_block_forward.4} parent=11 // pred_check
        %p320 = pneg %p162
      $region30: #{lvc_block_forward.4} parent=11 // pred_check_branch
        %322 = sbr.rel (%p320) target = $region32
      $region31: #{lvc_block_forward.4} parent=11 // pred_region
        _
      $region32: #{lvc_block_forward.4} parent=11 // pred_fallthru
        _
      // Predicated region
      $region33: #{lvc_block_forward.4} parent=11 // pred_check
        %p323 = pneg %p183
      $region34: #{lvc_block_forward.4} parent=11 // pred_check_branch
        %325 = sbr.rel (%p323) target = $region36
      $region35: #{lvc_block_forward.4} parent=11 // pred_region
        _
      $region36: #{lvc_block_forward.4} parent=11 // pred_fallthru
        _
      // Predicated region
      $region37: #{lvc_block_forward.4} parent=11 // pred_check
        %p326 = pneg %p204
      $region38: #{lvc_block_forward.4} parent=11 // pred_check_branch
        %328 = sbr.rel (%p326) target = $region40
      $region39: #{lvc_block_forward.4} parent=11 // pred_region
        _
      $region40: #{lvc_block_forward.4} parent=11 // pred_fallthru
        _
      // Predicated region
      $region41: #{lvc_block_forward.4} parent=11 // pred_check
        %p329 = pneg %p225
      $region42: #{lvc_block_forward.4} parent=11 // pred_check_branch
        %331 = sbr.rel (%p329) target = $region44
      $region43: #{lvc_block_forward.4} parent=11 // pred_region
        _
      $region44: #{lvc_block_forward.4} parent=11 // pred_fallthru
        _
      // Predicated region
      $region45: #{lvc_block_forward.4} parent=11 // pred_check
        %p332 = pneg %p246
      $region46: #{lvc_block_forward.4} parent=11 // pred_check_branch
        %334 = sbr.rel (%p332) target = $region48
      $region47: #{lvc_block_forward.4} parent=11 // pred_region
        _
      $region48: #{lvc_block_forward.4} parent=11 // pred_fallthru
        _
      // Predicated region
      $region49: #{lvc_block_forward.4} parent=11 // pred_check
        %p335 = pneg %p267
      $region50: #{lvc_block_forward.4} parent=11 // pred_check_branch
        %337 = sbr.rel (%p335) target = $region52
      $region51: #{lvc_block_forward.4} parent=11 // pred_region
        _
      $region52: #{lvc_block_forward.4} parent=11 // pred_fallthru
        _
    $region12: #{lvc_block_forward.4} parent=5 // pred_fallthru
      _
    %p338 = scmp.lt.s32.totalorder %s17, 2
    // Predicated region
    $region53: #{lvc_block_forward.4} parent=5 // pred_check
      %p339 = pneg %p338
    $region54: #{lvc_block_forward.4} parent=5 // pred_check_branch
      %341 = sbr.rel (%p339) target = $region56
    $region55: #{lvc_block_forward.4} parent=5 // pred_region
      // Predicated region
      $region57: #{lvc_block_forward.4} parent=55 // pred_check
        %p342 = pneg %p51
      $region58: #{lvc_block_forward.4} parent=55 // pred_check_branch
        %344 = sbr.rel (%p342) target = $region60
      $region59: #{lvc_block_forward.4} parent=55 // pred_region
        %s345 = smul.u32 2, %s25
        %p346 = scmp.lt.s32.totalorder %s24, 1
        %s347 = scalar_select %p346, %s24, 1
        %p348 = scmp.lt.s32.totalorder %s345, 1
        %s349 = scalar_select %p348, %s345, 1
        %s350 = smul.addr %s347, 4
        %s351 = sadd.s32 %s349, %s350
        %s352 = smul.addr %s351, 4
        %s353 = scalar_lea.vmem %s0, %s352
        %s354 = smul.u32 2, %s25
      $region60: #{lvc_block_forward.4} parent=55 // pred_fallthru
        _
    $region56: #{lvc_block_forward.4} parent=5 // pred_fallthru
      _
    %p355 = scmp.le.s32.totalorder 1, %s17
    %p356 = scmp.lt.s32.totalorder %s17, 3
    %p357 = pnand %p355, %p356
    %p358 = pneg %p357
    // Predicated region
    $region61: #{lvc_block_forward.4} parent=5 // pred_check
      _
    $region62: #{lvc_block_forward.4} parent=5 // pred_check_branch
      %360 = sbr.rel (%p357) target = $region64
    $region63: #{lvc_block_forward.4} parent=5 // pred_region
      %s361 = ssub.s32 %s17, 1
      %s362 = smul.u32 2, %s27
      %p363 = scmp.lt.s32.totalorder %s26, 1
      %s364 = scalar_select %p363, %s26, 1
      %p365 = scmp.lt.s32.totalorder %s362, 1
      %s366 = scalar_select %p365, %s362, 1
      %s367 = smul.addr %s364, 4
      %s368 = sadd.s32 %s366, %s367
      %s369 = smul.addr %s368, 4
      %s370 = scalar_lea.vmem %s0, %s369
      %p371 = pneg %p57
      %p372 = pneg %p54
      %p373 = pneg %p78
      %p374 = pneg %p75
      %p375 = pneg %p99
      %p376 = pneg %p96
      %p377 = pneg %p120
      %p378 = pneg %p117
      %p379 = pneg %p141
      %p380 = pneg %p138
      %p381 = pneg %p162
      %p382 = pneg %p159
      %p383 = pneg %p183
      %p384 = pneg %p180
      %p385 = pneg %p204
      %p386 = pneg %p201
      %p387 = pneg %p225
      %p388 = pneg %p222
      %p389 = pneg %p246
      %p390 = pneg %p243
      %p391 = pneg %p267
      %p392 = pneg %p264
      %p393 = pneg %p293
      %p394 = pneg %p290
      %p395 = scmp.lt.s32.totalorder %s26, 1
      %s396 = scalar_select %p395, %s26, 1
      %s397 = smul.addr %s396, 2
      %s398 = smul.addr %s397, 8
      %s399 = scalar_lea.vmem %s11, %s398
      %s400 = smul.u32 2, %s27
      %p401 = scmp.lt.s32.totalorder %s26, 1
      %s402 = scalar_select %p401, %s26, 1
      %p403 = scmp.lt.s32.totalorder %s400, 1
      %s404 = scalar_select %p403, %s400, 1
      %s405 = smul.addr %s402, 4
      %s406 = sadd.s32 %s404, %s405
      %s407 = smul.addr %s406, 4
      %s408 = scalar_lea.vmem %s0, %s407
      %s409 = smul.u32 2, %s27
      %p410 = scmp.lt.s32.totalorder %s26, 1
      %s411 = scalar_select %p410, %s26, 1
      %s412 = smul.addr %s411, 2
      %s413 = smul.addr %s412, 8
      %s414 = scalar_lea.vmem %s11, %s413
      %p416 = scmp.eq.s32.totalorder %s27, 0
      // Predicated region
      $region65: #{lvc_block_forward.4} parent=63 // pred_check
        %p417 = pneg %p416
      $region66: #{lvc_block_forward.4} parent=63 // pred_check_branch
        %419 = sbr.rel (%p417) target = $region68
      $region67: #{lvc_block_forward.4} parent=63 // pred_region
        %vm420 = vcmask 523264
        %421 = vst.msk [vmem:[#allocation2] sm:$0xff] %vm420, 0.0
        %422 = vst.msk [vmem:[#allocation2 + $0x8] sm:$0xff] %vm420, 0.0
        %vm423 = vcmask 516096
        %424 = vst.msk [vmem:[#allocation3] sm:$0x1] %vm423, 0.0
      $region68: #{lvc_block_forward.4} parent=63 // pred_fallthru
        _
      %v425 = vld [vmem:[%s408] sm:$0xff]
      %v426 = vld [vmem:[%s408 + $0x8] sm:$0xff]
      %v427 = vld [vmem:[%s1] sm:$0xf]
      %v428 = vld [vmem:[%s1 + $0x4] sm:$0xf]
      %v429 = vld [vmem:[%s2] sm:$0xff]
      %v430 = vld [vmem:[%s2 + $0x8] sm:$0xff]
      %432 = vset.pattern.permute.xlu0 0
      %433 = vperm.xlu0 %432, %v429
      %v434 = vpop.permute.xlu0 %433
      %437 = vset.pattern.permute.xlu0 0
      %438 = vperm.xlu0 %437, %v430
      %v439 = vpop.permute.xlu0 %438
      %v443 = vunpack.c.l.b16 %v427
      %v444 = vunpack.c.l.b16 %v428
      %v445 = vpack.c.b16 %v444, %v443
      %v448 = vunpack.c.l.b16 %v425
      %v449 = vunpack.c.h.b16 %v425
      %v450 = vunpack.c.l.b16 %v426
      %v451 = vunpack.c.h.b16 %v426
      %v452 = vpack.c.b16 %v450, %v448
      %v453 = vpack.c.b16 %v451, %v449
      %vm456 = vcmask 130048
      %v458 = vsel %vm456, %v445, 0
      %460 = vmatprep.subr.bf16.mxu0 0
      %461 = vmatpush1.bf16.msra.mxu0 0
      %462 = vmatprep.subr.bf16.mxu0 0
      %463 = vmatpush1.bf16.msra.mxu0 0
      %464 = vmatprep.subr.bf16.mxu0 0
      %465 = vmatpush1.bf16.msra.mxu0 0
      %466 = vmatprep.subr.bf16.mxu0 0
      %467 = vmatpush1.bf16.msra.mxu0 0
      %468 = vmatprep.subr.bf16.mxu0 0
      %469 = vmatpush1.bf16.msra.mxu0 0
      %470 = vmatprep.subr.bf16.mxu0 0
      %471 = vmatpush1.bf16.msra.mxu0 0
      %472 = vmatprep.subr.bf16.mxu0 0
      %473 = vmatpush1.bf16.msra.mxu0 0
      %474 = vmatprep.subr.bf16.mxu0 %v453
      %475 = vmatpush1.bf16.msra.mxu0 %v452
      %476 = vmatprep.subr.bf16.mxu0 0
      %477 = vmatpush2.bf16.msra.mxu0 0
      %478 = vmatprep.subr.bf16.mxu0 0
      %479 = vmatpush2.bf16.msra.mxu0 0
      %480 = vmatprep.subr.bf16.mxu0 0
      %481 = vmatpush2.bf16.msra.mxu0 0
      %482 = vmatprep.subr.bf16.mxu0 0
      %483 = vmatpush2.bf16.msra.mxu0 0
      %484 = vmatprep.subr.bf16.mxu0 0
      %485 = vmatpush2.bf16.msra.mxu0 0
      %486 = vmatprep.subr.bf16.mxu0 0
      %487 = vmatpush2.bf16.msra.mxu0 0
      %488 = vmatprep.subr.bf16.mxu0 0
      %489 = vmatpush2.bf16.msra.mxu0 0
      %490 = vmatprep.subr.bf16.mxu0 0
      %491 = vmatpush2.bf16.msra.mxu0 0
      %492 = vmatprep.mubr.bf16.mxu0 0
      %493 = vmatmul.mubr.bf16.gmra.mxu0 %v458
      %v494 = vpop.f32.mrf.mxu0
      %v495 = vadd.f32 %v434, %v494
      %v496 = vpop.f32.mrf.mxu0
      %v497 = vadd.f32 %v434, %v496
      %v498 = vpop.f32.mrf.mxu0
      %v499 = vadd.f32 %v439, %v498
      %v500 = vpop.f32.mrf.mxu0
      %v501 = vadd.f32 %v439, %v500
      %502 = vdwg.mxu0
      %v503 = vmax.f32 %v495, 0.0
      %v504 = vmax.f32 %v497, 0.0
      %v505 = vmax.f32 %v499, 0.0
      %v506 = vmax.f32 %v501, 0.0
      %v507 = vld [vmem:[%s3] sm:$0xff]
      %v508 = vld [vmem:[%s3 + $0x8] sm:$0xff]
      %v509 = vld [vmem:[%s3 + $0x10] sm:$0xff]
      %v510 = vld [vmem:[%s3 + $0x18] sm:$0xff]
      %v511 = vld [vmem:[%s3 + $0x20] sm:$0xff]
      %v512 = vld [vmem:[%s3 + $0x28] sm:$0xff]
      %v513 = vld [vmem:[%s3 + $0x30] sm:$0xff]
      %v514 = vld [vmem:[%s3 + $0x38] sm:$0xff]
      %v516 = vsel %vm456, %v507, 0
      %v519 = vsel %vm456, %v508, 0
      %v522 = vsel %vm456, %v509, 0
      %v525 = vsel %vm456, %v510, 0
      %v528 = vsel %vm456, %v511, 0
      %v531 = vsel %vm456, %v512, 0
      %v534 = vsel %vm456, %v513, 0
      %v537 = vsel %vm456, %v514, 0
      %539 = vmatprep.subr.mxu0 0.0
      %540 = vmatpush1.msra.mxu0 0.0
      %541 = vmatprep.subr.mxu0 0.0
      %542 = vmatpush1.msra.mxu0 0.0
      %543 = vmatprep.subr.mxu0 0.0
      %544 = vmatpush1.msra.mxu0 0.0
      %545 = vmatprep.subr.mxu0 0.0
      %546 = vmatpush1.msra.mxu0 0.0
      %547 = vmatprep.subr.mxu0 0.0
      %548 = vmatpush1.msra.mxu0 0.0
      %549 = vmatprep.subr.mxu0 0.0
      %550 = vmatpush1.msra.mxu0 0.0
      %551 = vmatprep.subr.mxu0 0.0
      %552 = vmatpush1.msra.mxu0 0.0
      %553 = vmatprep.subr.mxu0 0.0
      %554 = vmatpush1.msra.mxu0 0.0
      %555 = vmatprep.subr.mxu0 0.0
      %556 = vmatpush1.msra.mxu0 0.0
      %557 = vmatprep.subr.mxu0 0.0
      %558 = vmatpush1.msra.mxu0 0.0
      %559 = vmatprep.subr.mxu0 0.0
      %560 = vmatpush1.msra.mxu0 0.0
      %561 = vmatprep.subr.mxu0 0.0
      %562 = vmatpush1.msra.mxu0 0.0
      %563 = vmatprep.subr.mxu0 0.0
      %564 = vmatpush1.msra.mxu0 0.0
      %565 = vmatprep.subr.mxu0 0.0
      %566 = vmatpush1.msra.mxu0 0.0
      %567 = vmatprep.subr.mxu0 %v506
      %568 = vmatpush1.msra.mxu0 %v505
      %569 = vmatprep.subr.mxu0 %v504
      %570 = vmatpush1.msra.mxu0 %v503
      %571 = vmatprep.subr.mxu0 0.0
      %572 = vmatpush2.msra.mxu0 0.0
      %573 = vmatprep.subr.mxu0 0.0
      %574 = vmatpush2.msra.mxu0 0.0
      %575 = vmatprep.subr.mxu0 0.0
      %576 = vmatpush2.msra.mxu0 0.0
      %577 = vmatprep.subr.mxu0 0.0
      %578 = vmatpush2.msra.mxu0 0.0
      %579 = vmatprep.subr.mxu0 0.0
      %580 = vmatpush2.msra.mxu0 0.0
      %581 = vmatprep.subr.mxu0 0.0
      %582 = vmatpush2.msra.mxu0 0.0
      %583 = vmatprep.subr.mxu0 0.0
      %584 = vmatpush2.msra.mxu0 0.0
      %585 = vmatprep.subr.mxu0 0.0
      %586 = vmatpush2.msra.mxu0 0.0
      %587 = vmatprep.subr.mxu0 0.0
      %588 = vmatpush2.msra.mxu0 0.0
      %589 = vmatprep.subr.mxu0 0.0
      %590 = vmatpush2.msra.mxu0 0.0
      %591 = vmatprep.subr.mxu0 0.0
      %592 = vmatpush2.msra.mxu0 0.0
      %593 = vmatprep.subr.mxu0 0.0
      %594 = vmatpush2.msra.mxu0 0.0
      %595 = vmatprep.subr.mxu0 0.0
      %596 = vmatpush2.msra.mxu0 0.0
      %597 = vmatprep.subr.mxu0 0.0
      %598 = vmatpush2.msra.mxu0 0.0
      %599 = vmatprep.subr.mxu0 0.0
      %600 = vmatpush2.msra.mxu0 0.0
      %601 = vmatprep.subr.mxu0 0.0
      %602 = vmatpush2.msra.mxu0 0.0
      %603 = vmatprep.mubr.f32.mxu0 0.0
      %604 = vmatmul.mubr.f32.gmra.mxu0 %v516
      %v605 = vpop.f32.mrf.mxu0
      %v606 = vadd.f32 0.0, %v605
      %v607 = vpop.f32.mrf.mxu0
      %v608 = vadd.f32 0.0, %v607
      %609 = vmatprep.mubr.f32.mxu0 0.0
      %610 = vmatmul.mubr.f32.gmra.mxu0 %v519
      %v611 = vpop.f32.mrf.mxu0
      %v612 = vadd.f32 0.0, %v611
      %v613 = vpop.f32.mrf.mxu0
      %v614 = vadd.f32 0.0, %v613
      %615 = vmatprep.mubr.f32.mxu0 0.0
      %616 = vmatmul.mubr.f32.gmra.mxu0 %v522
      %v617 = vpop.f32.mrf.mxu0
      %v618 = vadd.f32 0.0, %v617
      %v619 = vpop.f32.mrf.mxu0
      %v620 = vadd.f32 0.0, %v619
      %621 = vmatprep.mubr.f32.mxu0 0.0
      %622 = vmatmul.mubr.f32.gmra.mxu0 %v525
      %v623 = vpop.f32.mrf.mxu0
      %v624 = vadd.f32 0.0, %v623
      %v625 = vpop.f32.mrf.mxu0
      %v626 = vadd.f32 0.0, %v625
      %627 = vmatprep.mubr.f32.mxu0 0.0
      %628 = vmatmul.mubr.f32.gmra.mxu0 %v528
      %v629 = vpop.f32.mrf.mxu0
      %v630 = vadd.f32 0.0, %v629
      %v631 = vpop.f32.mrf.mxu0
      %v632 = vadd.f32 0.0, %v631
      %633 = vmatprep.mubr.f32.mxu0 0.0
      %634 = vmatmul.mubr.f32.gmra.mxu0 %v531
      %v635 = vpop.f32.mrf.mxu0
      %v636 = vadd.f32 0.0, %v635
      %v637 = vpop.f32.mrf.mxu0
      %v638 = vadd.f32 0.0, %v637
      %639 = vmatprep.mubr.f32.mxu0 0.0
      %640 = vmatmul.mubr.f32.gmra.mxu0 %v534
      %v641 = vpop.f32.mrf.mxu0
      %v642 = vadd.f32 0.0, %v641
      %v643 = vpop.f32.mrf.mxu0
      %v644 = vadd.f32 0.0, %v643
      %645 = vmatprep.mubr.f32.mxu0 0.0
      %646 = vmatmul.mubr.f32.gmra.mxu0 %v537
      %v647 = vpop.f32.mrf.mxu0
      %v648 = vadd.f32 0.0, %v647
      %v649 = vpop.f32.mrf.mxu0
      %v650 = vadd.f32 0.0, %v649
      %651 = vdwg.mxu0
      %v652 = vmul.f32 %v503, %v503
      %v653 = vmul.f32 %v504, %v504
      %v654 = vmul.f32 %v505, %v505
      %v655 = vmul.f32 %v506, %v506
      %v656 = vadd.f32 %v652, %v654
      %v657 = vrot.slane %v656, 4
      %v658 = vadd.f32 %v656, %v657
      %v659 = vrot.slane %v658, 2
      %v660 = vadd.f32 %v658, %v659
      %v661 = vrot.slane %v660, 1
      %v662 = vadd.f32 %v660, %v661
      %v663 = vadd.f32 %v653, %v655
      %v664 = vrot.slane %v663, 4
      %v665 = vadd.f32 %v663, %v664
      %v666 = vrot.slane %v665, 2
      %v667 = vadd.f32 %v665, %v666
      %v668 = vrot.slane %v667, 1
      %v669 = vadd.f32 %v667, %v668
      %v670 = vld [vmem:[%s6] sm:$0xff]
      %v671 = vld [vmem:[%s6 + $0x8] sm:$0xff]
      %v672 = vld [vmem:[%s6 + $0x10] sm:$0xff]
      %v673 = vld [vmem:[%s6 + $0x18] sm:$0xff]
      %v674 = vld [vmem:[%s6 + $0x20] sm:$0xff]
      %v675 = vld [vmem:[%s6 + $0x28] sm:$0xff]
      %v676 = vld [vmem:[%s6 + $0x30] sm:$0xff]
      %v677 = vld [vmem:[%s6 + $0x38] sm:$0xff]
      %v678 = vmul.f32 %v606, 2.0
      %v679 = vmul.f32 %v608, 2.0
      %v680 = vmul.f32 %v612, 2.0
      %v681 = vmul.f32 %v614, 2.0
      %v682 = vmul.f32 %v618, 2.0
      %v683 = vmul.f32 %v620, 2.0
      %v684 = vmul.f32 %v624, 2.0
      %v685 = vmul.f32 %v626, 2.0
      %v686 = vmul.f32 %v630, 2.0
      %v687 = vmul.f32 %v632, 2.0
      %v688 = vmul.f32 %v636, 2.0
      %v689 = vmul.f32 %v638, 2.0
      %v690 = vmul.f32 %v642, 2.0
      %v691 = vmul.f32 %v644, 2.0
      %v692 = vmul.f32 %v648, 2.0
      %v693 = vmul.f32 %v650, 2.0
      %v694 = vsub.f32 %v662, %v678
      %v695 = vsub.f32 %v669, %v679
      %v696 = vsub.f32 %v662, %v680
      %v697 = vsub.f32 %v669, %v681
      %v698 = vsub.f32 %v662, %v682
      %v699 = vsub.f32 %v669, %v683
      %v700 = vsub.f32 %v662, %v684
      %v701 = vsub.f32 %v669, %v685
      %v702 = vsub.f32 %v662, %v686
      %v703 = vsub.f32 %v669, %v687
      %v704 = vsub.f32 %v662, %v688
      %v705 = vsub.f32 %v669, %v689
      %v706 = vsub.f32 %v662, %v690
      %v707 = vsub.f32 %v669, %v691
      %v708 = vsub.f32 %v662, %v692
      %v709 = vsub.f32 %v669, %v693
      %v710 = vld [vmem:[%s5] sm:$0xff]
      %v711 = vld [vmem:[%s5 + $0x8] sm:$0xff]
      %v712 = vld [vmem:[%s5 + $0x10] sm:$0xff]
      %v713 = vld [vmem:[%s5 + $0x18] sm:$0xff]
      %v714 = vld [vmem:[%s5 + $0x20] sm:$0xff]
      %v715 = vld [vmem:[%s5 + $0x28] sm:$0xff]
      %v716 = vld [vmem:[%s5 + $0x30] sm:$0xff]
      %v717 = vld [vmem:[%s5 + $0x38] sm:$0xff]
      %719 = vset.pattern.permute.xlu0 0
      %720 = vperm.xlu0 %719, %v710
      %v721 = vpop.permute.xlu0 %720
      %724 = vset.pattern.permute.xlu0 0
      %725 = vperm.xlu0 %724, %v711
      %v726 = vpop.permute.xlu0 %725
      %729 = vset.pattern.permute.xlu0 0
      %730 = vperm.xlu0 %729, %v712
      %v731 = vpop.permute.xlu0 %730
      %734 = vset.pattern.permute.xlu0 0
      %735 = vperm.xlu0 %734, %v713
      %v736 = vpop.permute.xlu0 %735
      %739 = vset.pattern.permute.xlu0 0
      %740 = vperm.xlu0 %739, %v714
      %v741 = vpop.permute.xlu0 %740
      %744 = vset.pattern.permute.xlu0 0
      %745 = vperm.xlu0 %744, %v715
      %v746 = vpop.permute.xlu0 %745
      %749 = vset.pattern.permute.xlu0 0
      %750 = vperm.xlu0 %749, %v716
      %v751 = vpop.permute.xlu0 %750
      %754 = vset.pattern.permute.xlu0 0
      %755 = vperm.xlu0 %754, %v717
      %v756 = vpop.permute.xlu0 %755
      %v758 = vadd.f32 %v694, %v721
      %v759 = vadd.f32 %v695, %v721
      %v760 = vadd.f32 %v696, %v726
      %v761 = vadd.f32 %v697, %v726
      %v762 = vadd.f32 %v698, %v731
      %v763 = vadd.f32 %v699, %v731
      %v764 = vadd.f32 %v700, %v736
      %v765 = vadd.f32 %v701, %v736
      %v766 = vadd.f32 %v702, %v741
      %v767 = vadd.f32 %v703, %v741
      %v768 = vadd.f32 %v704, %v746
      %v769 = vadd.f32 %v705, %v746
      %v770 = vadd.f32 %v706, %v751
      %v771 = vadd.f32 %v707, %v751
      %v772 = vadd.f32 %v708, %v756
      %v773 = vadd.f32 %v709, %v756
      %775 = vset.pattern.permute.xlu0 0
      %776 = vperm.xlu0 %775, %v670
      %v777 = vpop.permute.xlu0 %776
      %780 = vset.pattern.permute.xlu0 0
      %781 = vperm.xlu0 %780, %v671
      %v782 = vpop.permute.xlu0 %781
      %785 = vset.pattern.permute.xlu0 0
      %786 = vperm.xlu0 %785, %v672
      %v787 = vpop.permute.xlu0 %786
      %790 = vset.pattern.permute.xlu0 0
      %791 = vperm.xlu0 %790, %v673
      %v792 = vpop.permute.xlu0 %791
      %795 = vset.pattern.permute.xlu0 0
      %796 = vperm.xlu0 %795, %v674
      %v797 = vpop.permute.xlu0 %796
      %800 = vset.pattern.permute.xlu0 0
      %801 = vperm.xlu0 %800, %v675
      %v802 = vpop.permute.xlu0 %801
      %805 = vset.pattern.permute.xlu0 0
      %806 = vperm.xlu0 %805, %v676
      %v807 = vpop.permute.xlu0 %806
      %810 = vset.pattern.permute.xlu0 0
      %811 = vperm.xlu0 %810, %v677
      %v812 = vpop.permute.xlu0 %811
      %v814 = vmul.f32 %v777, %v758
      %v815 = vmul.f32 %v777, %v759
      %v816 = vmul.f32 %v782, %v760
      %v817 = vmul.f32 %v782, %v761
      %v818 = vmul.f32 %v787, %v762
      %v819 = vmul.f32 %v787, %v763
      %v820 = vmul.f32 %v792, %v764
      %v821 = vmul.f32 %v792, %v765
      %v822 = vmul.f32 %v797, %v766
      %v823 = vmul.f32 %v797, %v767
      %v824 = vmul.f32 %v802, %v768
      %v825 = vmul.f32 %v802, %v769
      %v826 = vmul.f32 %v807, %v770
      %v827 = vmul.f32 %v807, %v771
      %v828 = vmul.f32 %v812, %v772
      %v829 = vmul.f32 %v812, %v773
      %v830 = vmax.f32 %v814, %v818
      %v831 = vmax.f32 %v816, %v820
      %v832 = vmax.f32 %v830, %v822
      %v833 = vmax.f32 %v831, %v824
      %v834 = vmax.f32 %v832, %v826
      %v835 = vmax.f32 %v833, %v828
      %v836 = vmax.f32 %v834, %v835
      %v837 = vrot.slane %v836, 4
      %v838 = vmax.f32 %v836, %v837
      %v839 = vrot.slane %v838, 2
      %v840 = vmax.f32 %v838, %v839
      %v841 = vrot.slane %v840, 1
      %v842 = vmax.f32 %v840, %v841
      %v843 = vmax.f32 %v815, %v819
      %v844 = vmax.f32 %v817, %v821
      %v845 = vmax.f32 %v843, %v823
      %v846 = vmax.f32 %v844, %v825
      %v847 = vmax.f32 %v845, %v827
      %v848 = vmax.f32 %v846, %v829
      %v849 = vmax.f32 %v847, %v848
      %v850 = vrot.slane %v849, 4
      %v851 = vmax.f32 %v849, %v850
      %v852 = vrot.slane %v851, 2
      %v853 = vmax.f32 %v851, %v852
      %v854 = vrot.slane %v853, 1
      %v855 = vmax.f32 %v853, %v854
      %v856 = vsub.f32 %v814, %v842
      %v857 = vsub.f32 %v815, %v855
      %v858 = vsub.f32 %v816, %v842
      %v859 = vsub.f32 %v817, %v855
      %v860 = vsub.f32 %v818, %v842
      %v861 = vsub.f32 %v819, %v855
      %v862 = vsub.f32 %v820, %v842
      %v863 = vsub.f32 %v821, %v855
      %v864 = vsub.f32 %v822, %v842
      %v865 = vsub.f32 %v823, %v855
      %v866 = vsub.f32 %v824, %v842
      %v867 = vsub.f32 %v825, %v855
      %v868 = vsub.f32 %v826, %v842
      %v869 = vsub.f32 %v827, %v855
      %v870 = vsub.f32 %v828, %v842
      %v871 = vsub.f32 %v829, %v855
      %v872 = vmul.f32 %v856, 1.442695
      %v873 = vpow.pop %v872
      %v874 = vmul.f32 %v857, 1.442695
      %v875 = vpow.pop %v874
      %v876 = vmul.f32 %v858, 1.442695
      %v877 = vpow.pop %v876
      %v878 = vmul.f32 %v859, 1.442695
      %v879 = vpow.pop %v878
      %v880 = vmul.f32 %v860, 1.442695
      %v881 = vpow.pop %v880
      %v882 = vmul.f32 %v861, 1.442695
      %v883 = vpow.pop %v882
      %v884 = vmul.f32 %v862, 1.442695
      %v885 = vpow.pop %v884
      %v886 = vmul.f32 %v863, 1.442695
      %v887 = vpow.pop %v886
      %v888 = vmul.f32 %v864, 1.442695
      %v889 = vpow.pop %v888
      %v890 = vmul.f32 %v865, 1.442695
      %v891 = vpow.pop %v890
      %v892 = vmul.f32 %v866, 1.442695
      %v893 = vpow.pop %v892
      %v894 = vmul.f32 %v867, 1.442695
      %v895 = vpow.pop %v894
      %v896 = vmul.f32 %v868, 1.442695
      %v897 = vpow.pop %v896
      %v898 = vmul.f32 %v869, 1.442695
      %v899 = vpow.pop %v898
      %v900 = vmul.f32 %v870, 1.442695
      %v901 = vpow.pop %v900
      %v902 = vmul.f32 %v871, 1.442695
      %v903 = vpow.pop %v902
      %v904 = vadd.f32 %v873, %v877
      %v905 = vadd.f32 %v904, %v881
      %v906 = vadd.f32 %v905, %v885
      %v907 = vadd.f32 %v906, %v889
      %v908 = vadd.f32 %v907, %v893
      %v909 = vadd.f32 %v908, %v897
      %v910 = vadd.f32 %v909, %v901
      %v911 = vrot.slane %v910, 4
      %v912 = vadd.f32 %v910, %v911
      %v913 = vrot.slane %v912, 2
      %v914 = vadd.f32 %v912, %v913
      %v915 = vrot.slane %v914, 1
      %v916 = vadd.f32 %v914, %v915
      %v917 = vadd.f32 %v875, %v879
      %v918 = vadd.f32 %v917, %v883
      %v919 = vadd.f32 %v918, %v887
      %v920 = vadd.f32 %v919, %v891
      %v921 = vadd.f32 %v920, %v895
      %v922 = vadd.f32 %v921, %v899
      %v923 = vadd.f32 %v922, %v903
      %v924 = vrot.slane %v923, 4
      %v925 = vadd.f32 %v923, %v924
      %v926 = vrot.slane %v925, 2
      %v927 = vadd.f32 %v925, %v926
      %v928 = vrot.slane %v927, 1
      %v929 = vadd.f32 %v927, %v928
      %v930 = vrcp.pop %v916
      %v931 = vrcp.pop %v929
      %v932 = vmul.f32 %v873, %v930
      %v933 = vmul.f32 %v875, %v931
      %v934 = vmul.f32 %v877, %v930
      %v935 = vmul.f32 %v879, %v931
      %v936 = vmul.f32 %v881, %v930
      %v937 = vmul.f32 %v883, %v931
      %v938 = vmul.f32 %v885, %v930
      %v939 = vmul.f32 %v887, %v931
      %v940 = vmul.f32 %v889, %v930
      %v941 = vmul.f32 %v891, %v931
      %v942 = vmul.f32 %v893, %v930
      %v943 = vmul.f32 %v895, %v931
      %v944 = vmul.f32 %v897, %v930
      %v945 = vmul.f32 %v899, %v931
      %v946 = vmul.f32 %v901, %v930
      %v947 = vmul.f32 %v903, %v931
      %v948 = vld [vmem:[#allocation2] sm:$0xff]
      %v949 = vld [vmem:[#allocation2 + $0x8] sm:$0xff]
      %950 = vmatprep.subr.mxu0 0.0
      %951 = vmatpush1.xpose.msra.mxu0 0.0
      %952 = vmatprep.subr.mxu0 0.0
      %953 = vmatpush1.xpose.msra.mxu0 0.0
      %954 = vmatprep.subr.mxu0 0.0
      %955 = vmatpush1.xpose.msra.mxu0 0.0
      %956 = vmatprep.subr.mxu0 0.0
      %957 = vmatpush1.xpose.msra.mxu0 0.0
      %958 = vmatprep.subr.mxu0 0.0
      %959 = vmatpush1.xpose.msra.mxu0 0.0
      %960 = vmatprep.subr.mxu0 0.0
      %961 = vmatpush1.xpose.msra.mxu0 0.0
      %962 = vmatprep.subr.mxu0 0.0
      %963 = vmatpush1.xpose.msra.mxu0 0.0
      %964 = vmatprep.subr.mxu0 0.0
      %965 = vmatpush1.xpose.msra.mxu0 0.0
      %966 = vmatprep.subr.mxu0 %v947
      %967 = vmatpush1.xpose.msra.mxu0 %v946
      %968 = vmatprep.subr.mxu0 %v945
      %969 = vmatpush1.xpose.msra.mxu0 %v944
      %970 = vmatprep.subr.mxu0 %v943
      %971 = vmatpush1.xpose.msra.mxu0 %v942
      %972 = vmatprep.subr.mxu0 %v941
      %973 = vmatpush1.xpose.msra.mxu0 %v940
      %974 = vmatprep.subr.mxu0 %v939
      %975 = vmatpush1.xpose.msra.mxu0 %v938
      %976 = vmatprep.subr.mxu0 %v937
      %977 = vmatpush1.xpose.msra.mxu0 %v936
      %978 = vmatprep.subr.mxu0 %v935
      %979 = vmatpush1.xpose.msra.mxu0 %v934
      %980 = vmatprep.subr.mxu0 %v933
      %981 = vmatpush1.xpose.msra.mxu0 %v932
      %982 = vmatprep.subr.mxu0 0.0
      %983 = vmatpush2.xpose.msra.mxu0 0.0
      %984 = vmatprep.subr.mxu0 0.0
      %985 = vmatpush2.xpose.msra.mxu0 0.0
      %986 = vmatprep.subr.mxu0 0.0
      %987 = vmatpush2.xpose.msra.mxu0 0.0
      %988 = vmatprep.subr.mxu0 0.0
      %989 = vmatpush2.xpose.msra.mxu0 0.0
      %990 = vmatprep.subr.mxu0 0.0
      %991 = vmatpush2.xpose.msra.mxu0 0.0
      %992 = vmatprep.subr.mxu0 0.0
      %993 = vmatpush2.xpose.msra.mxu0 0.0
      %994 = vmatprep.subr.mxu0 0.0
      %995 = vmatpush2.xpose.msra.mxu0 0.0
      %996 = vmatprep.subr.mxu0 0.0
      %997 = vmatpush2.xpose.msra.mxu0 0.0
      %998 = vmatprep.subr.mxu0 0.0
      %999 = vmatpush2.xpose.msra.mxu0 0.0
      %1000 = vmatprep.subr.mxu0 0.0
      %1001 = vmatpush2.xpose.msra.mxu0 0.0
      %1002 = vmatprep.subr.mxu0 0.0
      %1003 = vmatpush2.xpose.msra.mxu0 0.0
      %1004 = vmatprep.subr.mxu0 0.0
      %1005 = vmatpush2.xpose.msra.mxu0 0.0
      %1006 = vmatprep.subr.mxu0 0.0
      %1007 = vmatpush2.xpose.msra.mxu0 0.0
      %1008 = vmatprep.subr.mxu0 0.0
      %1009 = vmatpush2.xpose.msra.mxu0 0.0
      %1010 = vmatprep.subr.mxu0 0.0
      %1011 = vmatpush2.xpose.msra.mxu0 0.0
      %1012 = vmatprep.subr.mxu0 0.0
      %1013 = vmatpush2.xpose.msra.mxu0 0.0
      %1014 = vmatprep.mubr.f32.mxu0 %v504
      %1015 = vmatmul.mubr.f32.gmra.mxu0 %v503
      %v1016 = vpop.f32.mrf.mxu0
      %v1017 = vadd.f32 0.0, %v1016
      %v1018 = vpop.f32.mrf.mxu0
      %1019 = vmatprep.mubr.f32.mxu0 %v506
      %1020 = vmatmul.mubr.f32.gmra.mxu0 %v505
      %v1021 = vpop.f32.mrf.mxu0
      %v1022 = vadd.f32 0.0, %v1021
      %v1023 = vpop.f32.mrf.mxu0
      %1024 = vdwg.mxu0
      %v1025 = vadd.f32 %v948, %v1017
      %v1026 = vadd.f32 %v949, %v1022
      %vm1027 = vcmask 523264
      %1028 = vst.msk [vmem:[#allocation2] sm:$0xff] %vm1027, %v1025
      %1029 = vst.msk [vmem:[#allocation2 + $0x8] sm:$0xff] %vm1027, %v1026
      %v1030 = vld [vmem:[#allocation3] sm:$0x1]
      %1031 = vmatprep.subr.mxu0 0.0
      %1032 = vmatpush1.xpose.msra.mxu0 0.0
      %1033 = vmatprep.subr.mxu0 0.0
      %1034 = vmatpush1.xpose.msra.mxu0 0.0
      %1035 = vmatprep.subr.mxu0 0.0
      %1036 = vmatpush1.xpose.msra.mxu0 0.0
      %1037 = vmatprep.subr.mxu0 0.0
      %1038 = vmatpush1.xpose.msra.mxu0 0.0
      %1039 = vmatprep.subr.mxu0 0.0
      %1040 = vmatpush1.xpose.msra.mxu0 0.0
      %1041 = vmatprep.subr.mxu0 0.0
      %1042 = vmatpush1.xpose.msra.mxu0 0.0
      %1043 = vmatprep.subr.mxu0 0.0
      %1044 = vmatpush1.xpose.msra.mxu0 0.0
      %1045 = vmatprep.subr.mxu0 0.0
      %1046 = vmatpush1.xpose.msra.mxu0 0.0
      %1047 = vmatprep.subr.mxu0 %v947
      %1048 = vmatpush1.xpose.msra.mxu0 %v946
      %1049 = vmatprep.subr.mxu0 %v945
      %1050 = vmatpush1.xpose.msra.mxu0 %v944
      %1051 = vmatprep.subr.mxu0 %v943
      %1052 = vmatpush1.xpose.msra.mxu0 %v942
      %1053 = vmatprep.subr.mxu0 %v941
      %1054 = vmatpush1.xpose.msra.mxu0 %v940
      %1055 = vmatprep.subr.mxu0 %v939
      %1056 = vmatpush1.xpose.msra.mxu0 %v938
      %1057 = vmatprep.subr.mxu0 %v937
      %1058 = vmatpush1.xpose.msra.mxu0 %v936
      %1059 = vmatprep.subr.mxu0 %v935
      %1060 = vmatpush1.xpose.msra.mxu0 %v934
      %1061 = vmatprep.subr.mxu0 %v933
      %1062 = vmatpush1.xpose.msra.mxu0 %v932
      %1063 = vmatprep.subr.mxu0 0.0
      %1064 = vmatpush2.xpose.msra.mxu0 0.0
      %1065 = vmatprep.subr.mxu0 0.0
      %1066 = vmatpush2.xpose.msra.mxu0 0.0
      %1067 = vmatprep.subr.mxu0 0.0
      %1068 = vmatpush2.xpose.msra.mxu0 0.0
      %1069 = vmatprep.subr.mxu0 0.0
      %1070 = vmatpush2.xpose.msra.mxu0 0.0
      %1071 = vmatprep.subr.mxu0 0.0
      %1072 = vmatpush2.xpose.msra.mxu0 0.0
      %1073 = vmatprep.subr.mxu0 0.0
      %1074 = vmatpush2.xpose.msra.mxu0 0.0
      %1075 = vmatprep.subr.mxu0 0.0
      %1076 = vmatpush2.xpose.msra.mxu0 0.0
      %1077 = vmatprep.subr.mxu0 0.0
      %1078 = vmatpush2.xpose.msra.mxu0 0.0
      %1079 = vmatprep.subr.mxu0 0.0
      %1080 = vmatpush2.xpose.msra.mxu0 0.0
      %1081 = vmatprep.subr.mxu0 0.0
      %1082 = vmatpush2.xpose.msra.mxu0 0.0
      %1083 = vmatprep.subr.mxu0 0.0
      %1084 = vmatpush2.xpose.msra.mxu0 0.0
      %1085 = vmatprep.subr.mxu0 0.0
      %1086 = vmatpush2.xpose.msra.mxu0 0.0
      %1087 = vmatprep.subr.mxu0 0.0
      %1088 = vmatpush2.xpose.msra.mxu0 0.0
      %1089 = vmatprep.subr.mxu0 0.0
      %1090 = vmatpush2.xpose.msra.mxu0 0.0
      %1091 = vmatprep.subr.mxu0 0.0
      %1092 = vmatpush2.xpose.msra.mxu0 0.0
      %1093 = vmatprep.subr.mxu0 0.0
      %1094 = vmatpush2.xpose.msra.mxu0 0.0
      %1095 = vmatprep.mubr.f32.mxu0 1.0
      %1096 = vmatmul.mubr.f32.gmra.mxu0 1.0
      %v1097 = vpop.f32.mrf.mxu0
      %v1098 = vadd.f32 0.0, %v1097
      %v1099 = vpop.f32.mrf.mxu0
      %1100 = vdwg.mxu0
      %v1101 = vadd.f32 %v1030, %v1098
      %vm1102 = vcmask 516096
      %1103 = vst.msk [vmem:[#allocation3] sm:$0x1] %vm1102, %v1101
      // Predicated region
      $region69: #{lvc_block_forward.4} parent=63 // pred_check
        %p1104 = pneg %p416
      $region70: #{lvc_block_forward.4} parent=63 // pred_check_branch
        %1106 = sbr.rel (%p1104) target = $region72
      $region71: #{lvc_block_forward.4} parent=63 // pred_region
        %v1107 = vld [vmem:[#allocation2] sm:$0xff]
        %v1108 = vld [vmem:[#allocation2 + $0x8] sm:$0xff]
        %v1109 = vld [vmem:[%s4] sm:$0xff]
        %v1110 = vld [vmem:[%s4 + $0x8] sm:$0xff]
        %v1111 = vld [vmem:[#allocation3] sm:$0x1]
        %v1113 = vlaneseq
        %v1114 = vshrl.u32 %v1113, 7
        %v1115 = vsub.s32 0, %v1114
        %v1116 = vrot.slane %v1111, %v1115
        %v1118 = vmul.f32 %v1109, %v1116
        %v1119 = vmul.f32 %v1110, %v1116
        %v1120 = vsub.f32 %v1107, %v1118
        %v1121 = vsub.f32 %v1108, %v1119
        %v1122 = vld [vmem:[%s7] sm:$0x1]
        %v1124 = vlaneseq
        %v1125 = vshrl.u32 %v1124, 7
        %v1126 = vsub.s32 0, %v1125
        %v1127 = vrot.slane %v1122, %v1126
        %v1129 = vmul.f32 %v1120, %v1127
        %v1130 = vmul.f32 %v1121, %v1127
        %v1131 = vld [vmem:[%s8] sm:$0x1]
        %v1133 = vlaneseq
        %v1134 = vshrl.u32 %v1133, 7
        %v1135 = vsub.s32 0, %v1134
        %v1136 = vrot.slane %v1131, %v1135
        %v1138 = vadd.f32 %v1129, %v1136
        %v1139 = vadd.f32 %v1130, %v1136
        %v1140 = vmax.f32 %v1138, 0.0
        %v1141 = vmax.f32 %v1139, 0.0
        %v1142 = vsel %vm1027, %v1140, 0.0
        %1143 = vadd.xlane.f32.xlu0 %v1142
        %v1144 = vpop.xlane.xlu0 %1143
        %v1145 = vsel %vm1027, %v1141, 0.0
        %1146 = vadd.xlane.f32.xlu0 %v1145
        %v1147 = vpop.xlane.xlu0 %1146
        %v1148 = vmul.f32 %v1144, 0.015625
        %v1149 = vmul.f32 %v1147, 0.015625
        %v1150 = vld [vmem:[%s9] sm:$0xff]
        %v1151 = vld [vmem:[%s9 + $0x8] sm:$0xff]
        %v1152 = vld [vmem:[%s10] sm:$0xff]
        %v1153 = vld [vmem:[%s10 + $0x8] sm:$0xff]
        %v1155 = vsel %vm456, %v1150, 0
        %v1158 = vsel %vm456, %v1151, 0
        %1160 = vmatprep.subr.mxu0 0.0
        %1161 = vmatpush1.msra.mxu0 0.0
        %1162 = vmatprep.subr.mxu0 0.0
        %1163 = vmatpush1.msra.mxu0 0.0
        %1164 = vmatprep.subr.mxu0 0.0
        %1165 = vmatpush1.msra.mxu0 0.0
        %1166 = vmatprep.subr.mxu0 0.0
        %1167 = vmatpush1.msra.mxu0 0.0
        %1168 = vmatprep.subr.mxu0 0.0
        %1169 = vmatpush1.msra.mxu0 0.0
        %1170 = vmatprep.subr.mxu0 0.0
        %1171 = vmatpush1.msra.mxu0 0.0
        %1172 = vmatprep.subr.mxu0 0.0
        %1173 = vmatpush1.msra.mxu0 0.0
        %1174 = vmatprep.subr.mxu0 0.0
        %1175 = vmatpush1.msra.mxu0 0.0
        %1176 = vmatprep.subr.mxu0 0.0
        %1177 = vmatpush1.msra.mxu0 0.0
        %1178 = vmatprep.subr.mxu0 0.0
        %1179 = vmatpush1.msra.mxu0 0.0
        %1180 = vmatprep.subr.mxu0 0.0
        %1181 = vmatpush1.msra.mxu0 0.0
        %1182 = vmatprep.subr.mxu0 0.0
        %1183 = vmatpush1.msra.mxu0 0.0
        %1184 = vmatprep.subr.mxu0 0.0
        %1185 = vmatpush1.msra.mxu0 0.0
        %1186 = vmatprep.subr.mxu0 0.0
        %1187 = vmatpush1.msra.mxu0 0.0
        %1188 = vmatprep.subr.mxu0 0.0
        %1189 = vmatpush1.msra.mxu0 %v1149
        %1190 = vmatprep.subr.mxu0 0.0
        %1191 = vmatpush1.msra.mxu0 %v1148
        %1192 = vmatprep.subr.mxu0 0.0
        %1193 = vmatpush2.msra.mxu0 0.0
        %1194 = vmatprep.subr.mxu0 0.0
        %1195 = vmatpush2.msra.mxu0 0.0
        %1196 = vmatprep.subr.mxu0 0.0
        %1197 = vmatpush2.msra.mxu0 0.0
        %1198 = vmatprep.subr.mxu0 0.0
        %1199 = vmatpush2.msra.mxu0 0.0
        %1200 = vmatprep.subr.mxu0 0.0
        %1201 = vmatpush2.msra.mxu0 0.0
        %1202 = vmatprep.subr.mxu0 0.0
        %1203 = vmatpush2.msra.mxu0 0.0
        %1204 = vmatprep.subr.mxu0 0.0
        %1205 = vmatpush2.msra.mxu0 0.0
        %1206 = vmatprep.subr.mxu0 0.0
        %1207 = vmatpush2.msra.mxu0 0.0
        %1208 = vmatprep.subr.mxu0 0.0
        %1209 = vmatpush2.msra.mxu0 0.0
        %1210 = vmatprep.subr.mxu0 0.0
        %1211 = vmatpush2.msra.mxu0 0.0
        %1212 = vmatprep.subr.mxu0 0.0
        %1213 = vmatpush2.msra.mxu0 0.0
        %1214 = vmatprep.subr.mxu0 0.0
        %1215 = vmatpush2.msra.mxu0 0.0
        %1216 = vmatprep.subr.mxu0 0.0
        %1217 = vmatpush2.msra.mxu0 0.0
        %1218 = vmatprep.subr.mxu0 0.0
        %1219 = vmatpush2.msra.mxu0 0.0
        %1220 = vmatprep.subr.mxu0 0.0
        %1221 = vmatpush2.msra.mxu0 0.0
        %1222 = vmatprep.subr.mxu0 0.0
        %1223 = vmatpush2.msra.mxu0 0.0
        %1224 = vmatprep.mubr.f32.mxu0 0.0
        %1225 = vmatmul.mubr.f32.gmra.mxu0 %v1155
        %v1226 = vpop.f32.mrf.mxu0
        %v1227 = vadd.f32 %v1152, %v1226
        %v1228 = vpop.f32.mrf.mxu0
        %1229 = vmatprep.mubr.f32.mxu0 0.0
        %1230 = vmatmul.mubr.f32.gmra.mxu0 %v1158
        %v1231 = vpop.f32.mrf.mxu0
        %v1232 = vadd.f32 %v1153, %v1231
        %v1233 = vpop.f32.mrf.mxu0
        %1234 = vdwg.mxu0
        %v1235 = vxor.u32 %v1227, 2147483648
        %v1236 = vxor.u32 %v1232, 2147483648
        %v1237 = vmul.f32 %v1235, 1.442695
        %v1238 = vpow.pop %v1237
        %v1239 = vmul.f32 %v1236, 1.442695
        %v1240 = vpow.pop %v1239
        %v1241 = vadd.f32 %v1238, 1.0
        %v1242 = vadd.f32 %v1240, 1.0
        %v1243 = vrcp.pop %v1241
        %v1244 = vmul.f32 1.0, %v1243
        %v1245 = vrcp.pop %v1242
        %v1246 = vmul.f32 1.0, %v1245
        %vm1247 = vcmask 7168
        %1248 = vst.msk [vmem:[%s414] sm:$0xff] %vm1247, %v1244
        %1249 = vst.msk [vmem:[%s414 + $0x8] sm:$0xff] %vm1247, %v1246
      $region72: #{lvc_block_forward.4} parent=63 // pred_fallthru
        _
      %p1250 = scmp.lt.s32.totalorder %s26, 1
      %s1251 = scalar_select %p1250, %s26, 1
      %s1252 = smul.addr %s1251, 2
      %s1253 = smul.addr %s1252, 8
      %s1254 = scalar_lea.vmem %s11, %s1253
      // Predicated region
      $region73: #{lvc_block_forward.4} parent=63 // pred_check
        %p1255 = pneg %p290
      $region74: #{lvc_block_forward.4} parent=63 // pred_check_branch
        %1257 = sbr.rel (%p1255) target = $region76
      $region75: #{lvc_block_forward.4} parent=63 // pred_region
        _
      $region76: #{lvc_block_forward.4} parent=63 // pred_fallthru
        _
    $region64: #{lvc_block_forward.4} parent=5 // pred_fallthru
      _
    %p1258 = scmp.le.s32.totalorder 2, %s17
    // Predicated region
    $region77: #{lvc_block_forward.4} parent=5 // pred_check
      %p1259 = pneg %p1258
    $region78: #{lvc_block_forward.4} parent=5 // pred_check_branch
      %1261 = sbr.rel (%p1259) target = $region80
    $region79: #{lvc_block_forward.4} parent=5 // pred_region
      %s1262 = ssub.s32 %s17, 2
      // Predicated region
      $region81: #{lvc_block_forward.4} parent=79 // pred_check
        %p1263 = pneg %p296
      $region82: #{lvc_block_forward.4} parent=79 // pred_check_branch
        %1265 = sbr.rel (%p1263) target = $region84
      $region83: #{lvc_block_forward.4} parent=79 // pred_region
        %p1266 = scmp.lt.s32.totalorder %s28, 1
        %s1267 = scalar_select %p1266, %s28, 1
        %s1268 = smul.addr %s1267, 2
        %s1269 = smul.addr %s1268, 8
        %s1270 = scalar_lea.vmem %s11, %s1269
      $region84: #{lvc_block_forward.4} parent=79 // pred_fallthru
        _
    $region80: #{lvc_block_forward.4} parent=5 // pred_fallthru
      _
  $region6: #{lvc_block_forward.4} parent=0 // loop_footer
    %s21 = sadd.s32 1, %s17
  $region7: #{lvc_block_forward.4} parent=0 // loop_footer_branch
    %16 = sbr.rel target = $region3
  $region8: #{lvc_block_forward.4} parent=0 // loop_exit
    _

</llo_original>
